<compile_context>
chip_gen: v6e
topology: v6e:2x2x1
jax: 0.10.0
libtpu: 0.0.40
codegen_flags: <defaults>
</compile_context>

<pallas_src>
import jax
import jax.numpy as jnp
from jax.experimental import pallas as pl
from jax.experimental.pallas import tpu as pltpu

EPS = 1e-5  # nn.BatchNorm2d default eps


def _vmem_limit_bytes():
    """Scoped-VMEM cap ≈ half of physical VMEM (64 MiB on v5e/v6e, 32 MiB on v7x)."""
    default = 32 * 1024 * 1024
    try:
        cap = pltpu.get_tpu_info().vmem_capacity_bytes
    except Exception:  # interpret mode / older API: fall back to the v7x-safe cap
        return default
    return int(max(default, min(cap // 2, 96 * 1024 * 1024)))


def _conv3x3_same(xt, w, H, W, C):
    """3x3 'same' conv of one (H, W, C) bf16 tile as 3 dy-split MXU matmuls (K = 3C).

    The 1-pixel zero halo is built in VMEM with two concatenates (no HBM pad); the dy
    split keeps the peak im2col patch at (H*W, 3C) instead of (H*W, 9C).
    w : (9*C, C) bf16, tap-major (row (3*dy+dx)*C + ci -> col co).
    returns (H*W, C) float32
    """
    zrow = jnp.zeros((1, W + 2, C), xt.dtype)
    zcol = jnp.zeros((H, 1, C), xt.dtype)
    xp = jnp.concatenate(
        [zrow, jnp.concatenate([zcol, xt, zcol], axis=1), zrow], axis=0)   # (H+2, W+2, C)
    # 3 sublane (W-axis) shifts, reused across all dy; dy slices are cheap leading-dim slices.
    shifted = [xp[:, dx:dx + W, :] for dx in range(3)]
    acc = jnp.zeros((H * W, C), jnp.float32)
    for dy in range(3):
        patch = jnp.concatenate([shifted[dx][dy:dy + H] for dx in range(3)],
                                axis=-1).reshape(H * W, 3 * C)             # (M, 3C) bf16
        acc = acc + jnp.dot(patch, w[dy * 3 * C:(dy + 1) * 3 * C, :],
                            preferred_element_type=jnp.float32)            # (M, C) f32
    return acc


def conv_stats_kernel(x_ref, w_ref, a_ref, sum_ref, ssq_ref):
    """conv3x3 on one (unpadded) image + per-channel sum / sum-of-squares (one pass)."""
    _, H, W, C = a_ref.shape
    acc = _conv3x3_same(x_ref[0].astype(jnp.bfloat16), w_ref[...], H, W, C)
    a_ref[0] = acc.reshape(H, W, C).astype(a_ref.dtype)            # bf16 inter-pass store
    sum_ref[0] = jnp.sum(acc, axis=0, keepdims=True)
    ssq_ref[0] = jnp.sum(acc * acc, axis=0, keepdims=True)


def bn_relu_conv_stats_kernel(a1_ref, scale_ref, shift_ref, w_ref,
                              a_ref, sum_ref, ssq_ref):
    """(BN1 as scale/shift + ReLU) fused into conv2, + per-channel sum / sum-of-squares."""
    _, H, W, C = a_ref.shape
    # BN1 + ReLU on the interior only; the halo is rebuilt as zeros inside _conv3x3_same,
    # so no border mask is needed.
    y1 = jnp.maximum(a1_ref[0].astype(jnp.float32) * scale_ref[...] + shift_ref[...], 0.0)
    acc = _conv3x3_same(y1.astype(jnp.bfloat16), w_ref[...], H, W, C)
    a_ref[0] = acc.reshape(H, W, C).astype(a_ref.dtype)
    sum_ref[0] = jnp.sum(acc, axis=0, keepdims=True)
    ssq_ref[0] = jnp.sum(acc * acc, axis=0, keepdims=True)


def bn_relu_add_kernel(a2_ref, x_ref, scale_ref, shift_ref, out_ref):
    """out = relu(a2 * scale + shift) + x on a lane-dense (tile_rows, W*C) slab."""
    y2 = jnp.maximum(a2_ref[...].astype(jnp.float32) * scale_ref[...] + shift_ref[...], 0.0)
    out_ref[...] = y2 + x_ref[...]


def _finalize_stats(s_sum, s_ssq, gamma, beta, count):
    """Reduce per-image (sum, sumsq) to BN scale/shift.

    Note: variance via E[x^2] - mu^2 with a clamp (single-pass); fine at f32 for
    activation-scale data, slightly less accurate than two-pass for huge magnitudes.
    """
    mu = jnp.sum(s_sum[:, 0, :], axis=0) / count
    var = jnp.maximum(jnp.sum(s_ssq[:, 0, :], axis=0) / count - mu * mu, 0.0)
    inv = jax.lax.rsqrt(var + EPS)
    scale = gamma * inv
    shift = beta - mu * scale
    return scale, shift


def _pick_tile_rows(rows, row_bytes, target_bytes=2 << 20):
    """Largest multiple-of-8 divisor of `rows` with ~<= target_bytes per f32 operand."""
    if rows % 8 != 0:
        # TODO(synk): pad rows to a multiple of 8 instead of one big un-pipelined block.
        return rows
    tile = max(8, min(rows, (target_bytes // max(row_bytes, 1)) // 8 * 8))
    while tile > 8 and rows % tile != 0:
        tile -= 8
    return tile


def resconv_forward(x_nchw, params):
    """params = (w1, g1, b1, w2, g2, b2); conv weights are torch-style (C_out, C_in, 3, 3)."""
    w1, g1, b1, w2, g2, b2 = params
    x = jnp.transpose(x_nchw, (0, 2, 3, 1)).astype(jnp.float32)       # NCHW -> NHWC
    N, H, W, C = x.shape
    M = N * H * W

    def tap_major(w):
        # (C_out, C_in, 3, 3) -> (kh, kw, C_in, C_out) -> (9*C_in, C_out); bf16 for the MXU.
        return jnp.transpose(w, (2, 3, 1, 0)).reshape(9 * C, C).astype(jnp.bfloat16)

    w1m, w2m = tap_major(w1), tap_major(w2)

    cparams = pltpu.CompilerParams(dimension_semantics=("parallel",),
                                   vmem_limit_bytes=_vmem_limit_bytes())

    # Weights / per-channel params use a constant index_map -> DMA'd once, resident across
    # the whole grid.  Activations go in/out UNPADDED; padding happens in VMEM in-kernel.
    weight_spec = pl.BlockSpec((9 * C, C), lambda i: (0, 0))
    act_spec = pl.BlockSpec((1, H, W, C), lambda i: (i, 0, 0, 0))
    stat_out_spec = pl.BlockSpec((1, 1, C), lambda i: (i, 0, 0))
    chan_spec = pl.BlockSpec((1, C), lambda i: (0, 0))
    conv_out_shape = (jax.ShapeDtypeStruct((N, H, W, C), jnp.bfloat16),   # bf16 inter-pass act
                      jax.ShapeDtypeStruct((N, 1, C), jnp.float32),
                      jax.ShapeDtypeStruct((N, 1, C), jnp.float32))
    conv_flops = 2 * M * 9 * C * C

    # ---- pass 1: conv1 + per-image BN statistics --------------------------------------
    cost1 = pl.CostEstimate(
        flops=conv_flops, transcendentals=0,
        bytes_accessed=M * C * 4 + 9 * C * C * 2 + M * C * 2 + 2 * N * C * 4)
    a1, s1, q1 = pl.pallas_call(
        conv_stats_kernel,
        out_shape=conv_out_shape,
        grid=(N,),
        in_specs=[act_spec, weight_spec],
        out_specs=(act_spec, stat_out_spec, stat_out_spec),
        compiler_params=cparams,
        cost_estimate=cost1,
    )(x, w1m)
    scale1, shift1 = _finalize_stats(s1, q1, g1, b1, M)

    # ---- pass 2: BN1+ReLU fused into conv2 + per-image BN statistics ------------------
    cost2 = pl.CostEstimate(
        flops=conv_flops + 4 * M * C, transcendentals=0,
        bytes_accessed=M * C * 2 + 9 * C * C * 2 + 2 * C * 4 + M * C * 2 + 2 * N * C * 4)
    a2, s2, q2 = pl.pallas_call(
        bn_relu_conv_stats_kernel,
        out_shape=conv_out_shape,
        grid=(N,),
        in_specs=[act_spec, chan_spec, chan_spec, weight_spec],
        out_specs=(act_spec, stat_out_spec, stat_out_spec),
        compiler_params=cparams,
        cost_estimate=cost2,
    )(a1, scale1.reshape(1, C), shift1.reshape(1, C), w2m)
    scale2, shift2 = _finalize_stats(s2, q2, g2, b2, M)

    # ---- pass 3: BN2 + ReLU + residual on a lane-dense (N*H, W*C) slab -----------------
    rows = N * H
    rowdim = W * C
    tile_rows = _pick_tile_rows(rows, rowdim * 4)       # ~2 MiB per f32 operand, 8-aligned
    row_spec = pl.BlockSpec((tile_rows, rowdim), lambda i: (i, 0))
    vec_spec = pl.BlockSpec((1, rowdim), lambda i: (0, 0))
    cost3 = pl.CostEstimate(
        flops=4 * rows * rowdim, transcendentals=0,
        bytes_accessed=rows * rowdim * (2 + 4 + 4) + 2 * rowdim * 4)
    out_flat = pl.pallas_call(
        bn_relu_add_kernel,
        out_shape=jax.ShapeDtypeStruct((rows, rowdim), jnp.float32),
        grid=(rows // tile_rows,),
        in_specs=[row_spec, row_spec, vec_spec, vec_spec],
        out_specs=row_spec,
        compiler_params=cparams,
        cost_estimate=cost3,
    )(a2.reshape(rows, rowdim), x.reshape(rows, rowdim),
      jnp.tile(scale2, W).reshape(1, rowdim), jnp.tile(shift2, W).reshape(1, rowdim))

    out = out_flat.reshape(N, H, W, C)
    return jnp.transpose(out, (0, 3, 1, 2))             # NHWC -> NCHW


def resconv_reference(x_nchw, params):
    """Pure-JAX reference mirroring the kernel's precision: bf16 conv inputs/weights with f32
    accumulation, batch statistics from the f32 conv output, and bf16 storage of the
    inter-pass activations (the kernel's a1 / a2)."""
    w1, g1, b1, w2, g2, b2 = params
    x = jnp.transpose(x_nchw, (0, 2, 3, 1)).astype(jnp.float32)

    def block(y, w, g, b):
        wh = jnp.transpose(w, (2, 3, 1, 0)).astype(jnp.bfloat16)     # HWIO
        a = jax.lax.conv_general_dilated(
            y.astype(jnp.bfloat16), wh, (1, 1), 'SAME',
            dimension_numbers=('NHWC', 'HWIO', 'NHWC'),
            preferred_element_type=jnp.float32)
        mu = jnp.mean(a, axis=(0, 1, 2))
        var = jnp.mean((a - mu) ** 2, axis=(0, 1, 2))
        a = a.astype(jnp.bfloat16).astype(jnp.float32)   # kernel stores conv outputs in bf16
        return jnp.maximum((a - mu) * jax.lax.rsqrt(var + EPS) * g + b, 0.0)

    y = block(block(x, w1, g1, b1), w2, g2, b2) + x
    return jnp.transpose(y, (0, 3, 1, 2))


def init_params(key, C):
    # Conv2d(C, C, 3, padding=1, bias=False) with kaiming_uniform_:
    # bound = sqrt(2) * sqrt(3 / fan_in), fan_in = C * 9
    k1, k2 = jax.random.split(key)
    fan_in = C * 9
    bound = (6.0 / fan_in) ** 0.5
    w1 = jax.random.uniform(k1, (C, C, 3, 3), jnp.float32, -bound, bound)
    w2 = jax.random.uniform(k2, (C, C, 3, 3), jnp.float32, -bound, bound)
    # BatchNorm2d default affine init: gamma = 1, beta = 0
    g1 = jnp.ones((C,), jnp.float32)
    b1 = jnp.zeros((C,), jnp.float32)
    g2 = jnp.ones((C,), jnp.float32)
    b2 = jnp.zeros((C,), jnp.float32)
    return (w1, g1, b1, w2, g2, b2)


if __name__ == "__main__":
    key = jax.random.PRNGKey(0)
    kx, kp = jax.random.split(key)

    N, C, H, W = 4, 16, 16, 16
    x = jax.random.normal(kx, (N, C, H, W), jnp.float32)
    params = init_params(kp, C)

    fwd = jax.jit(resconv_forward)
    out = jax.block_until_ready(fwd(x, params))
    ref = jax.block_until_ready(resconv_reference(x, params))

    assert out.shape == (N, C, H, W), out.shape
    max_err = float(jnp.max(jnp.abs(out - ref)))
    assert jnp.allclose(out, ref, atol=1e-2, rtol=1e-2), max_err
    print("KERNEL_OK")
</pallas_src>

<mosaic_0001>
module attributes {stable_mosaic.version = 11 : i64} {
  func.func @conv_stats_kernel(%arg0: i32, %arg1: memref<1x16x16x16xf32, #tpu.memory_space<vmem>>, %arg2: memref<144x16xbf16, #tpu.memory_space<vmem>>, %arg3: memref<1x16x16x16xbf16, #tpu.memory_space<vmem>>, %arg4: memref<1x1x16xf32, #tpu.memory_space<vmem>>, %arg5: memref<1x1x16xf32, #tpu.memory_space<vmem>>) attributes {dimension_semantics = [#tpu.dimension_semantics<parallel>], iteration_bounds = array<i64: 4>, scalar_prefetch = 0 : i64, scratch_operands = 0 : i64, tpu.core_type = #tpu.core_type<tc>, window_params = [{transform_indices = @transform_0, window_bounds = array<i64: 1, 16, 16, 16>}, {pipeline_mode = #tpu.pipeline_mode<synchronous>, transform_indices = @transform_1, window_bounds = array<i64: 144, 16>}, {transform_indices = @transform_2, window_bounds = array<i64: 1, 16, 16, 16>}, {transform_indices = @transform_3, window_bounds = array<i64: 1, 1, 16>}, {transform_indices = @transform_4, window_bounds = array<i64: 1, 1, 16>}]} {
    %c0 = arith.constant 0 : index
    %c0_0 = arith.constant 0 : index
    %c0_1 = arith.constant 0 : index
    %c0_2 = arith.constant 0 : index
    %0 = vector.load %arg1[%c0, %c0_0, %c0_1, %c0_2] : memref<1x16x16x16xf32, #tpu.memory_space<vmem>>, vector<1x16x16x16xf32>
    %1 = vector.shape_cast %0 : vector<1x16x16x16xf32> to vector<16x16x16xf32>
    %2 = arith.truncf %1 : vector<16x16x16xf32> to vector<16x16x16xbf16>
    %c0_3 = arith.constant 0 : index
    %c0_4 = arith.constant 0 : index
    %3 = vector.load %arg2[%c0_3, %c0_4] : memref<144x16xbf16, #tpu.memory_space<vmem>>, vector<144x16xbf16>
    %cst = arith.constant 0.000000e+00 : bf16
    %4 = vector.broadcast %cst : bf16 to vector<1x18x16xbf16>
    %cst_5 = arith.constant 0.000000e+00 : bf16
    %5 = vector.broadcast %cst_5 : bf16 to vector<16x1x16xbf16>
    %6 = tpu.concatenate %5, %2, %5 in 1 : vector<16x1x16xbf16>, vector<16x16x16xbf16>, vector<16x1x16xbf16> -> vector<16x18x16xbf16>
    %7 = tpu.concatenate %4, %6, %4 in 0 : vector<1x18x16xbf16>, vector<16x18x16xbf16>, vector<1x18x16xbf16> -> vector<18x18x16xbf16>
    %8 = vector.extract_strided_slice %7 {offsets = [0, 0, 0], sizes = [18, 16, 16], strides = [1, 1, 1]} : vector<18x18x16xbf16> to vector<18x16x16xbf16>
    %9 = vector.extract_strided_slice %7 {offsets = [0, 1, 0], sizes = [18, 16, 16], strides = [1, 1, 1]} : vector<18x18x16xbf16> to vector<18x16x16xbf16>
    %10 = vector.extract_strided_slice %7 {offsets = [0, 2, 0], sizes = [18, 16, 16], strides = [1, 1, 1]} : vector<18x18x16xbf16> to vector<18x16x16xbf16>
    %cst_6 = arith.constant 0.000000e+00 : f32
    %11 = vector.broadcast %cst_6 : f32 to vector<256x16xf32>
    %12 = vector.extract_strided_slice %8 {offsets = [0, 0, 0], sizes = [16, 16, 16], strides = [1, 1, 1]} : vector<18x16x16xbf16> to vector<16x16x16xbf16>
    %13 = vector.extract_strided_slice %9 {offsets = [0, 0, 0], sizes = [16, 16, 16], strides = [1, 1, 1]} : vector<18x16x16xbf16> to vector<16x16x16xbf16>
    %14 = vector.extract_strided_slice %10 {offsets = [0, 0, 0], sizes = [16, 16, 16], strides = [1, 1, 1]} : vector<18x16x16xbf16> to vector<16x16x16xbf16>
    %15 = tpu.concatenate %12, %13, %14 in 2 : vector<16x16x16xbf16>, vector<16x16x16xbf16>, vector<16x16x16xbf16> -> vector<16x16x48xbf16>
    %16 = vector.shape_cast %15 : vector<16x16x48xbf16> to vector<256x48xbf16>
    %17 = vector.extract_strided_slice %3 {offsets = [0, 0], sizes = [48, 16], strides = [1, 1]} : vector<144x16xbf16> to vector<48x16xbf16>
    %cst_7 = arith.constant dense<0.000000e+00> : vector<256x16xf32>
    %18 = tpu.matmul %16, %17, %cst_7 {dimension_numbers = #tpu.dot_dimension_numbers<[1], [0], [0], [1], [0, 0, 1, 1], [], []>} : vector<256x48xbf16>, vector<48x16xbf16>, vector<256x16xf32> -> vector<256x16xf32>
    %19 = arith.addf %11, %18 : vector<256x16xf32>
    %20 = vector.extract_strided_slice %8 {offsets = [1, 0, 0], sizes = [16, 16, 16], strides = [1, 1, 1]} : vector<18x16x16xbf16> to vector<16x16x16xbf16>
    %21 = vector.extract_strided_slice %9 {offsets = [1, 0, 0], sizes = [16, 16, 16], strides = [1, 1, 1]} : vector<18x16x16xbf16> to vector<16x16x16xbf16>
    %22 = vector.extract_strided_slice %10 {offsets = [1, 0, 0], sizes = [16, 16, 16], strides = [1, 1, 1]} : vector<18x16x16xbf16> to vector<16x16x16xbf16>
    %23 = tpu.concatenate %20, %21, %22 in 2 : vector<16x16x16xbf16>, vector<16x16x16xbf16>, vector<16x16x16xbf16> -> vector<16x16x48xbf16>
    %24 = vector.shape_cast %23 : vector<16x16x48xbf16> to vector<256x48xbf16>
    %25 = vector.extract_strided_slice %3 {offsets = [48, 0], sizes = [48, 16], strides = [1, 1]} : vector<144x16xbf16> to vector<48x16xbf16>
    %cst_8 = arith.constant dense<0.000000e+00> : vector<256x16xf32>
    %26 = tpu.matmul %24, %25, %cst_8 {dimension_numbers = #tpu.dot_dimension_numbers<[1], [0], [0], [1], [0, 0, 1, 1], [], []>} : vector<256x48xbf16>, vector<48x16xbf16>, vector<256x16xf32> -> vector<256x16xf32>
    %27 = arith.addf %19, %26 : vector<256x16xf32>
    %28 = vector.extract_strided_slice %8 {offsets = [2, 0, 0], sizes = [16, 16, 16], strides = [1, 1, 1]} : vector<18x16x16xbf16> to vector<16x16x16xbf16>
    %29 = vector.extract_strided_slice %9 {offsets = [2, 0, 0], sizes = [16, 16, 16], strides = [1, 1, 1]} : vector<18x16x16xbf16> to vector<16x16x16xbf16>
    %30 = vector.extract_strided_slice %10 {offsets = [2, 0, 0], sizes = [16, 16, 16], strides = [1, 1, 1]} : vector<18x16x16xbf16> to vector<16x16x16xbf16>
    %31 = tpu.concatenate %28, %29, %30 in 2 : vector<16x16x16xbf16>, vector<16x16x16xbf16>, vector<16x16x16xbf16> -> vector<16x16x48xbf16>
    %32 = vector.shape_cast %31 : vector<16x16x48xbf16> to vector<256x48xbf16>
    %33 = vector.extract_strided_slice %3 {offsets = [96, 0], sizes = [48, 16], strides = [1, 1]} : vector<144x16xbf16> to vector<48x16xbf16>
    %cst_9 = arith.constant dense<0.000000e+00> : vector<256x16xf32>
    %34 = tpu.matmul %32, %33, %cst_9 {dimension_numbers = #tpu.dot_dimension_numbers<[1], [0], [0], [1], [0, 0, 1, 1], [], []>} : vector<256x48xbf16>, vector<48x16xbf16>, vector<256x16xf32> -> vector<256x16xf32>
    %35 = arith.addf %27, %34 : vector<256x16xf32>
    %36 = vector.shape_cast %35 : vector<256x16xf32> to vector<16x16x16xf32>
    %37 = arith.truncf %36 : vector<16x16x16xf32> to vector<16x16x16xbf16>
    %c0_10 = arith.constant 0 : index
    %c0_11 = arith.constant 0 : index
    %c0_12 = arith.constant 0 : index
    %c0_13 = arith.constant 0 : index
    %38 = vector.load %arg3[%c0_10, %c0_11, %c0_12, %c0_13] : memref<1x16x16x16xbf16, #tpu.memory_space<vmem>>, vector<1x16x16x16xbf16>
    %39 = vector.shape_cast %38 : vector<1x16x16x16xbf16> to vector<16x16x16xbf16>
    %40 = vector.shape_cast %37 : vector<16x16x16xbf16> to vector<1x16x16x16xbf16>
    tpu.vector_store %arg3[%c0_10, %c0_11, %c0_12, %c0_13], %40 {strides = array<i32>} : memref<1x16x16x16xbf16, #tpu.memory_space<vmem>>, vector<1x16x16x16xbf16>,
    %cst_14 = arith.constant dense<0.000000e+00> : vector<16xf32>
    %41 = vector.multi_reduction <add>, %35, %cst_14 [0] : vector<256x16xf32> to vector<16xf32>
    %42 = vector.shape_cast %41 : vector<16xf32> to vector<1x16xf32>
    %c0_15 = arith.constant 0 : index
    %c0_16 = arith.constant 0 : index
    %c0_17 = arith.constant 0 : index
    %43 = vector.load %arg4[%c0_15, %c0_16, %c0_17] : memref<1x1x16xf32, #tpu.memory_space<vmem>>, vector<1x1x16xf32>
    %44 = vector.shape_cast %43 : vector<1x1x16xf32> to vector<1x16xf32>
    %45 = vector.shape_cast %42 : vector<1x16xf32> to vector<1x1x16xf32>
    tpu.vector_store %arg4[%c0_15, %c0_16, %c0_17], %45 {strides = array<i32>} : memref<1x1x16xf32, #tpu.memory_space<vmem>>, vector<1x1x16xf32>,
    %46 = arith.mulf %35, %35 : vector<256x16xf32>
    %cst_18 = arith.constant dense<0.000000e+00> : vector<16xf32>
    %47 = vector.multi_reduction <add>, %46, %cst_18 [0] : vector<256x16xf32> to vector<16xf32>
    %48 = vector.shape_cast %47 : vector<16xf32> to vector<1x16xf32>
    %c0_19 = arith.constant 0 : index
    %c0_20 = arith.constant 0 : index
    %c0_21 = arith.constant 0 : index
    %49 = vector.load %arg5[%c0_19, %c0_20, %c0_21] : memref<1x1x16xf32, #tpu.memory_space<vmem>>, vector<1x1x16xf32>
    %50 = vector.shape_cast %49 : vector<1x1x16xf32> to vector<1x16xf32>
    %51 = vector.shape_cast %48 : vector<1x16xf32> to vector<1x1x16xf32>
    tpu.vector_store %arg5[%c0_19, %c0_20, %c0_21], %51 {strides = array<i32>} : memref<1x1x16xf32, #tpu.memory_space<vmem>>, vector<1x1x16xf32>,
    return
  }
  func.func @transform_0(%arg0: i32) -> (i32, i32, i32, i32) {
    %c0_i32 = arith.constant 0 : i32
    %c0_i32_0 = arith.constant 0 : i32
    %c0_i32_1 = arith.constant 0 : i32
    %c0_i32_2 = arith.constant 0 : i32
    return %arg0, %c0_i32, %c0_i32_0, %c0_i32_1 : i32, i32, i32, i32
  }
  func.func @transform_1(%arg0: i32) -> (i32, i32) {
    %c0_i32 = arith.constant 0 : i32
    %c0_i32_0 = arith.constant 0 : i32
    %c0_i32_1 = arith.constant 0 : i32
    return %c0_i32, %c0_i32_0 : i32, i32
  }
  func.func @transform_2(%arg0: i32) -> (i32, i32, i32, i32) {
    %c0_i32 = arith.constant 0 : i32
    %c0_i32_0 = arith.constant 0 : i32
    %c0_i32_1 = arith.constant 0 : i32
    %c0_i32_2 = arith.constant 0 : i32
    return %arg0, %c0_i32, %c0_i32_0, %c0_i32_1 : i32, i32, i32, i32
  }
  func.func @transform_3(%arg0: i32) -> (i32, i32, i32) {
    %c0_i32 = arith.constant 0 : i32
    %c0_i32_0 = arith.constant 0 : i32
    %c0_i32_1 = arith.constant 0 : i32
    return %arg0, %c0_i32, %c0_i32_0 : i32, i32, i32
  }
  func.func @transform_4(%arg0: i32) -> (i32, i32, i32) {
    %c0_i32 = arith.constant 0 : i32
    %c0_i32_0 = arith.constant 0 : i32
    %c0_i32_1 = arith.constant 0 : i32
    return %arg0, %c0_i32, %c0_i32_0 : i32, i32, i32
  }
}

module attributes {stable_mosaic.version = 11 : i64} {
  func.func @bn_relu_conv_stats_kernel(%arg0: i32, %arg1: memref<1x16x16x16xbf16, #tpu.memory_space<vmem>>, %arg2: memref<1x16xf32, #tpu.memory_space<vmem>>, %arg3: memref<1x16xf32, #tpu.memory_space<vmem>>, %arg4: memref<144x16xbf16, #tpu.memory_space<vmem>>, %arg5: memref<1x16x16x16xbf16, #tpu.memory_space<vmem>>, %arg6: memref<1x1x16xf32, #tpu.memory_space<vmem>>, %arg7: memref<1x1x16xf32, #tpu.memory_space<vmem>>) attributes {dimension_semantics = [#tpu.dimension_semantics<parallel>], iteration_bounds = array<i64: 4>, scalar_prefetch = 0 : i64, scratch_operands = 0 : i64, tpu.core_type = #tpu.core_type<tc>, window_params = [{transform_indices = @transform_0, window_bounds = array<i64: 1, 16, 16, 16>}, {pipeline_mode = #tpu.pipeline_mode<synchronous>, transform_indices = @transform_1, window_bounds = array<i64: 1, 16>}, {pipeline_mode = #tpu.pipeline_mode<synchronous>, transform_indices = @transform_2, window_bounds = array<i64: 1, 16>}, {pipeline_mode = #tpu.pipeline_mode<synchronous>, transform_indices = @transform_3, window_bounds = array<i64: 144, 16>}, {transform_indices = @transform_4, window_bounds = array<i64: 1, 16, 16, 16>}, {transform_indices = @transform_5, window_bounds = array<i64: 1, 1, 16>}, {transform_indices = @transform_6, window_bounds = array<i64: 1, 1, 16>}]} {
    %c0 = arith.constant 0 : index
    %c0_0 = arith.constant 0 : index
    %c0_1 = arith.constant 0 : index
    %c0_2 = arith.constant 0 : index
    %0 = vector.load %arg1[%c0, %c0_0, %c0_1, %c0_2] : memref<1x16x16x16xbf16, #tpu.memory_space<vmem>>, vector<1x16x16x16xbf16>
    %1 = vector.shape_cast %0 : vector<1x16x16x16xbf16> to vector<16x16x16xbf16>
    %2 = arith.extf %1 : vector<16x16x16xbf16> to vector<16x16x16xf32>
    %c0_3 = arith.constant 0 : index
    %c0_4 = arith.constant 0 : index
    %3 = vector.load %arg2[%c0_3, %c0_4] : memref<1x16xf32, #tpu.memory_space<vmem>>, vector<1x16xf32>
    %4 = vector.shape_cast %3 : vector<1x16xf32> to vector<1x1x16xf32>
    %5 = vector.broadcast %4 : vector<1x1x16xf32> to vector<16x16x16xf32>
    %6 = arith.mulf %2, %5 : vector<16x16x16xf32>
    %c0_5 = arith.constant 0 : index
    %c0_6 = arith.constant 0 : index
    %7 = vector.load %arg3[%c0_5, %c0_6] : memref<1x16xf32, #tpu.memory_space<vmem>>, vector<1x16xf32>
    %8 = vector.shape_cast %7 : vector<1x16xf32> to vector<1x1x16xf32>
    %9 = vector.broadcast %8 : vector<1x1x16xf32> to vector<16x16x16xf32>
    %10 = arith.addf %6, %9 : vector<16x16x16xf32>
    %cst = arith.constant 0.000000e+00 : f32
    %11 = vector.broadcast %cst : f32 to vector<16x16x16xf32>
    %12 = arith.maximumf %10, %11 : vector<16x16x16xf32>
    %13 = arith.truncf %12 : vector<16x16x16xf32> to vector<16x16x16xbf16>
    %c0_7 = arith.constant 0 : index
    %c0_8 = arith.constant 0 : index
    %14 = vector.load %arg4[%c0_7, %c0_8] : memref<144x16xbf16, #tpu.memory_space<vmem>>, vector<144x16xbf16>
    %cst_9 = arith.constant 0.000000e+00 : bf16
    %15 = vector.broadcast %cst_9 : bf16 to vector<1x18x16xbf16>
    %cst_10 = arith.constant 0.000000e+00 : bf16
    %16 = vector.broadcast %cst_10 : bf16 to vector<16x1x16xbf16>
    %17 = tpu.concatenate %16, %13, %16 in 1 : vector<16x1x16xbf16>, vector<16x16x16xbf16>, vector<16x1x16xbf16> -> vector<16x18x16xbf16>
    %18 = tpu.concatenate %15, %17, %15 in 0 : vector<1x18x16xbf16>, vector<16x18x16xbf16>, vector<1x18x16xbf16> -> vector<18x18x16xbf16>
    %19 = vector.extract_strided_slice %18 {offsets = [0, 0, 0], sizes = [18, 16, 16], strides = [1, 1, 1]} : vector<18x18x16xbf16> to vector<18x16x16xbf16>
    %20 = vector.extract_strided_slice %18 {offsets = [0, 1, 0], sizes = [18, 16, 16], strides = [1, 1, 1]} : vector<18x18x16xbf16> to vector<18x16x16xbf16>
    %21 = vector.extract_strided_slice %18 {offsets = [0, 2, 0], sizes = [18, 16, 16], strides = [1, 1, 1]} : vector<18x18x16xbf16> to vector<18x16x16xbf16>
    %cst_11 = arith.constant 0.000000e+00 : f32
    %22 = vector.broadcast %cst_11 : f32 to vector<256x16xf32>
    %23 = vector.extract_strided_slice %19 {offsets = [0, 0, 0], sizes = [16, 16, 16], strides = [1, 1, 1]} : vector<18x16x16xbf16> to vector<16x16x16xbf16>
    %24 = vector.extract_strided_slice %20 {offsets = [0, 0, 0], sizes = [16, 16, 16], strides = [1, 1, 1]} : vector<18x16x16xbf16> to vector<16x16x16xbf16>
    %25 = vector.extract_strided_slice %21 {offsets = [0, 0, 0], sizes = [16, 16, 16], strides = [1, 1, 1]} : vector<18x16x16xbf16> to vector<16x16x16xbf16>
    %26 = tpu.concatenate %23, %24, %25 in 2 : vector<16x16x16xbf16>, vector<16x16x16xbf16>, vector<16x16x16xbf16> -> vector<16x16x48xbf16>
    %27 = vector.shape_cast %26 : vector<16x16x48xbf16> to vector<256x48xbf16>
    %28 = vector.extract_strided_slice %14 {offsets = [0, 0], sizes = [48, 16], strides = [1, 1]} : vector<144x16xbf16> to vector<48x16xbf16>
    %cst_12 = arith.constant dense<0.000000e+00> : vector<256x16xf32>
    %29 = tpu.matmul %27, %28, %cst_12 {dimension_numbers = #tpu.dot_dimension_numbers<[1], [0], [0], [1], [0, 0, 1, 1], [], []>} : vector<256x48xbf16>, vector<48x16xbf16>, vector<256x16xf32> -> vector<256x16xf32>
    %30 = arith.addf %22, %29 : vector<256x16xf32>
    %31 = vector.extract_strided_slice %19 {offsets = [1, 0, 0], sizes = [16, 16, 16], strides = [1, 1, 1]} : vector<18x16x16xbf16> to vector<16x16x16xbf16>
    %32 = vector.extract_strided_slice %20 {offsets = [1, 0, 0], sizes = [16, 16, 16], strides = [1, 1, 1]} : vector<18x16x16xbf16> to vector<16x16x16xbf16>
    %33 = vector.extract_strided_slice %21 {offsets = [1, 0, 0], sizes = [16, 16, 16], strides = [1, 1, 1]} : vector<18x16x16xbf16> to vector<16x16x16xbf16>
    %34 = tpu.concatenate %31, %32, %33 in 2 : vector<16x16x16xbf16>, vector<16x16x16xbf16>, vector<16x16x16xbf16> -> vector<16x16x48xbf16>
    %35 = vector.shape_cast %34 : vector<16x16x48xbf16> to vector<256x48xbf16>
    %36 = vector.extract_strided_slice %14 {offsets = [48, 0], sizes = [48, 16], strides = [1, 1]} : vector<144x16xbf16> to vector<48x16xbf16>
    %cst_13 = arith.constant dense<0.000000e+00> : vector<256x16xf32>
    %37 = tpu.matmul %35, %36, %cst_13 {dimension_numbers = #tpu.dot_dimension_numbers<[1], [0], [0], [1], [0, 0, 1, 1], [], []>} : vector<256x48xbf16>, vector<48x16xbf16>, vector<256x16xf32> -> vector<256x16xf32>
    %38 = arith.addf %30, %37 : vector<256x16xf32>
    %39 = vector.extract_strided_slice %19 {offsets = [2, 0, 0], sizes = [16, 16, 16], strides = [1, 1, 1]} : vector<18x16x16xbf16> to vector<16x16x16xbf16>
    %40 = vector.extract_strided_slice %20 {offsets = [2, 0, 0], sizes = [16, 16, 16], strides = [1, 1, 1]} : vector<18x16x16xbf16> to vector<16x16x16xbf16>
    %41 = vector.extract_strided_slice %21 {offsets = [2, 0, 0], sizes = [16, 16, 16], strides = [1, 1, 1]} : vector<18x16x16xbf16> to vector<16x16x16xbf16>
    %42 = tpu.concatenate %39, %40, %41 in 2 : vector<16x16x16xbf16>, vector<16x16x16xbf16>, vector<16x16x16xbf16> -> vector<16x16x48xbf16>
    %43 = vector.shape_cast %42 : vector<16x16x48xbf16> to vector<256x48xbf16>
    %44 = vector.extract_strided_slice %14 {offsets = [96, 0], sizes = [48, 16], strides = [1, 1]} : vector<144x16xbf16> to vector<48x16xbf16>
    %cst_14 = arith.constant dense<0.000000e+00> : vector<256x16xf32>
    %45 = tpu.matmul %43, %44, %cst_14 {dimension_numbers = #tpu.dot_dimension_numbers<[1], [0], [0], [1], [0, 0, 1, 1], [], []>} : vector<256x48xbf16>, vector<48x16xbf16>, vector<256x16xf32> -> vector<256x16xf32>
    %46 = arith.addf %38, %45 : vector<256x16xf32>
    %47 = vector.shape_cast %46 : vector<256x16xf32> to vector<16x16x16xf32>
    %48 = arith.truncf %47 : vector<16x16x16xf32> to vector<16x16x16xbf16>
    %c0_15 = arith.constant 0 : index
    %c0_16 = arith.constant 0 : index
    %c0_17 = arith.constant 0 : index
    %c0_18 = arith.constant 0 : index
    %49 = vector.load %arg5[%c0_15, %c0_16, %c0_17, %c0_18] : memref<1x16x16x16xbf16, #tpu.memory_space<vmem>>, vector<1x16x16x16xbf16>
    %50 = vector.shape_cast %49 : vector<1x16x16x16xbf16> to vector<16x16x16xbf16>
    %51 = vector.shape_cast %48 : vector<16x16x16xbf16> to vector<1x16x16x16xbf16>
    tpu.vector_store %arg5[%c0_15, %c0_16, %c0_17, %c0_18], %51 {strides = array<i32>} : memref<1x16x16x16xbf16, #tpu.memory_space<vmem>>, vector<1x16x16x16xbf16>,
    %cst_19 = arith.constant dense<0.000000e+00> : vector<16xf32>
    %52 = vector.multi_reduction <add>, %46, %cst_19 [0] : vector<256x16xf32> to vector<16xf32>
    %53 = vector.shape_cast %52 : vector<16xf32> to vector<1x16xf32>
    %c0_20 = arith.constant 0 : index
    %c0_21 = arith.constant 0 : index
    %c0_22 = arith.constant 0 : index
    %54 = vector.load %arg6[%c0_20, %c0_21, %c0_22] : memref<1x1x16xf32, #tpu.memory_space<vmem>>, vector<1x1x16xf32>
    %55 = vector.shape_cast %54 : vector<1x1x16xf32> to vector<1x16xf32>
    %56 = vector.shape_cast %53 : vector<1x16xf32> to vector<1x1x16xf32>
    tpu.vector_store %arg6[%c0_20, %c0_21, %c0_22], %56 {strides = array<i32>} : memref<1x1x16xf32, #tpu.memory_space<vmem>>, vector<1x1x16xf32>,
    %57 = arith.mulf %46, %46 : vector<256x16xf32>
    %cst_23 = arith.constant dense<0.000000e+00> : vector<16xf32>
    %58 = vector.multi_reduction <add>, %57, %cst_23 [0] : vector<256x16xf32> to vector<16xf32>
    %59 = vector.shape_cast %58 : vector<16xf32> to vector<1x16xf32>
    %c0_24 = arith.constant 0 : index
    %c0_25 = arith.constant 0 : index
    %c0_26 = arith.constant 0 : index
    %60 = vector.load %arg7[%c0_24, %c0_25, %c0_26] : memref<1x1x16xf32, #tpu.memory_space<vmem>>, vector<1x1x16xf32>
    %61 = vector.shape_cast %60 : vector<1x1x16xf32> to vector<1x16xf32>
    %62 = vector.shape_cast %59 : vector<1x16xf32> to vector<1x1x16xf32>
    tpu.vector_store %arg7[%c0_24, %c0_25, %c0_26], %62 {strides = array<i32>} : memref<1x1x16xf32, #tpu.memory_space<vmem>>, vector<1x1x16xf32>,
    return
  }
  func.func @transform_0(%arg0: i32) -> (i32, i32, i32, i32) {
    %c0_i32 = arith.constant 0 : i32
    %c0_i32_0 = arith.constant 0 : i32
    %c0_i32_1 = arith.constant 0 : i32
    %c0_i32_2 = arith.constant 0 : i32
    return %arg0, %c0_i32, %c0_i32_0, %c0_i32_1 : i32, i32, i32, i32
  }
  func.func @transform_1(%arg0: i32) -> (i32, i32) {
    %c0_i32 = arith.constant 0 : i32
    %c0_i32_0 = arith.constant 0 : i32
    %c0_i32_1 = arith.constant 0 : i32
    return %c0_i32, %c0_i32_0 : i32, i32
  }
  func.func @transform_2(%arg0: i32) -> (i32, i32) {
    %c0_i32 = arith.constant 0 : i32
    %c0_i32_0 = arith.constant 0 : i32
    %c0_i32_1 = arith.constant 0 : i32
    return %c0_i32, %c0_i32_0 : i32, i32
  }
  func.func @transform_3(%arg0: i32) -> (i32, i32) {
    %c0_i32 = arith.constant 0 : i32
    %c0_i32_0 = arith.constant 0 : i32
    %c0_i32_1 = arith.constant 0 : i32
    return %c0_i32, %c0_i32_0 : i32, i32
  }
  func.func @transform_4(%arg0: i32) -> (i32, i32, i32, i32) {
    %c0_i32 = arith.constant 0 : i32
    %c0_i32_0 = arith.constant 0 : i32
    %c0_i32_1 = arith.constant 0 : i32
    %c0_i32_2 = arith.constant 0 : i32
    return %arg0, %c0_i32, %c0_i32_0, %c0_i32_1 : i32, i32, i32, i32
  }
  func.func @transform_5(%arg0: i32) -> (i32, i32, i32) {
    %c0_i32 = arith.constant 0 : i32
    %c0_i32_0 = arith.constant 0 : i32
    %c0_i32_1 = arith.constant 0 : i32
    return %arg0, %c0_i32, %c0_i32_0 : i32, i32, i32
  }
  func.func @transform_6(%arg0: i32) -> (i32, i32, i32) {
    %c0_i32 = arith.constant 0 : i32
    %c0_i32_0 = arith.constant 0 : i32
    %c0_i32_1 = arith.constant 0 : i32
    return %arg0, %c0_i32, %c0_i32_0 : i32, i32, i32
  }
}

module attributes {stable_mosaic.version = 11 : i64} {
  func.func @bn_relu_add_kernel(%arg0: i32, %arg1: memref<64x256xbf16, #tpu.memory_space<vmem>>, %arg2: memref<64x256xf32, #tpu.memory_space<vmem>>, %arg3: memref<1x256xf32, #tpu.memory_space<vmem>>, %arg4: memref<1x256xf32, #tpu.memory_space<vmem>>, %arg5: memref<64x256xf32, #tpu.memory_space<vmem>>) attributes {dimension_semantics = [#tpu.dimension_semantics<parallel>], iteration_bounds = array<i64: 1>, scalar_prefetch = 0 : i64, scratch_operands = 0 : i64, tpu.core_type = #tpu.core_type<tc>, window_params = [{transform_indices = @transform_0, window_bounds = array<i64: 64, 256>}, {transform_indices = @transform_1, window_bounds = array<i64: 64, 256>}, {pipeline_mode = #tpu.pipeline_mode<synchronous>, transform_indices = @transform_2, window_bounds = array<i64: 1, 256>}, {pipeline_mode = #tpu.pipeline_mode<synchronous>, transform_indices = @transform_3, window_bounds = array<i64: 1, 256>}, {transform_indices = @transform_4, window_bounds = array<i64: 64, 256>}]} {
    %c0 = arith.constant 0 : index
    %c0_0 = arith.constant 0 : index
    %0 = vector.load %arg1[%c0, %c0_0] : memref<64x256xbf16, #tpu.memory_space<vmem>>, vector<64x256xbf16>
    %1 = arith.extf %0 : vector<64x256xbf16> to vector<64x256xf32>
    %c0_1 = arith.constant 0 : index
    %c0_2 = arith.constant 0 : index
    %2 = vector.load %arg3[%c0_1, %c0_2] : memref<1x256xf32, #tpu.memory_space<vmem>>, vector<1x256xf32>
    %3 = vector.broadcast %2 : vector<1x256xf32> to vector<64x256xf32>
    %4 = arith.mulf %1, %3 : vector<64x256xf32>
    %c0_3 = arith.constant 0 : index
    %c0_4 = arith.constant 0 : index
    %5 = vector.load %arg4[%c0_3, %c0_4] : memref<1x256xf32, #tpu.memory_space<vmem>>, vector<1x256xf32>
    %6 = vector.broadcast %5 : vector<1x256xf32> to vector<64x256xf32>
    %7 = arith.addf %4, %6 : vector<64x256xf32>
    %cst = arith.constant 0.000000e+00 : f32
    %8 = vector.broadcast %cst : f32 to vector<64x256xf32>
    %9 = arith.maximumf %7, %8 : vector<64x256xf32>
    %c0_5 = arith.constant 0 : index
    %c0_6 = arith.constant 0 : index
    %10 = vector.load %arg2[%c0_5, %c0_6] : memref<64x256xf32, #tpu.memory_space<vmem>>, vector<64x256xf32>
    %11 = arith.addf %9, %10 : vector<64x256xf32>
    %c0_7 = arith.constant 0 : index
    %c0_8 = arith.constant 0 : index
    %12 = vector.load %arg5[%c0_7, %c0_8] : memref<64x256xf32, #tpu.memory_space<vmem>>, vector<64x256xf32>
    tpu.vector_store %arg5[%c0_7, %c0_8], %11 {strides = array<i32>} : memref<64x256xf32, #tpu.memory_space<vmem>>, vector<64x256xf32>,
    return
  }
  func.func @transform_0(%arg0: i32) -> (i32, i32) {
    %c0_i32 = arith.constant 0 : i32
    %c0_i32_0 = arith.constant 0 : i32
    return %arg0, %c0_i32 : i32, i32
  }
  func.func @transform_1(%arg0: i32) -> (i32, i32) {
    %c0_i32 = arith.constant 0 : i32
    %c0_i32_0 = arith.constant 0 : i32
    return %arg0, %c0_i32 : i32, i32
  }
  func.func @transform_2(%arg0: i32) -> (i32, i32) {
    %c0_i32 = arith.constant 0 : i32
    %c0_i32_0 = arith.constant 0 : i32
    %c0_i32_1 = arith.constant 0 : i32
    return %c0_i32, %c0_i32_0 : i32, i32
  }
  func.func @transform_3(%arg0: i32) -> (i32, i32) {
    %c0_i32 = arith.constant 0 : i32
    %c0_i32_0 = arith.constant 0 : i32
    %c0_i32_1 = arith.constant 0 : i32
    return %c0_i32, %c0_i32_0 : i32, i32
  }
  func.func @transform_4(%arg0: i32) -> (i32, i32) {
    %c0_i32 = arith.constant 0 : i32
    %c0_i32_0 = arith.constant 0 : i32
    return %arg0, %c0_i32 : i32, i32
  }
}

</mosaic_0001>

<llo_original>
// kernel: tile.18
$region0: #{tile.18}
  #allocation0 [shape = 's32[1]{0}', space=sflag, size = 0x4, scoped, tag = 'scoped memory for tile.18']
  %s0 = inlined_call_operand.vmem [shape: f32[16], index: 0, kind: input, shape index: {}]
  %s1 = inlined_call_operand.vmem [shape: f32[16,16], index: 1, kind: output, shape index: {}]
  // Predicated region
  $region2: #{tile.18} parent=0 // pred_check
    _
  $region3: #{tile.18} parent=0 // pred_check_branch
    %3 = sbr.rel (0) target = $region5
  $region4: #{tile.18} parent=0 // pred_region
    _
  $region5: #{tile.18} parent=0 // pred_fallthru
    _
  %v4 = vld [vmem:[%s0] ss:$0 sm:$0xff]
  %5 = vst [vmem:[%s1] sm:$0xff] %v4
  %s6 = scalar_lea.vmem %s1, 8
  %7 = vst [vmem:[%s6] sm:$0xff] %v4

// kernel: tile.19
$region0: #{tile.19}
  %s0 = inlined_call_operand.vmem [shape: f32[16,16], index: 0, kind: input, shape index: {}]
  %s1 = inlined_call_operand.vmem [shape: f32[1,256], index: 1, kind: output, shape index: {}]
  $region1: #{tile.19} parent=0
    #allocation0 [shape = 'u8[8192]{0}', space=vmem, size = 0x2000, scoped, tag = 'scoped mem for output reshape']
    %s2 = smov 3
    %v3 = vld [vmem:[%s0] ss:$8 sm:%s2]
    %vm4 = vcmask 130048
    %5 = vst.msk [vmem:[#allocation0] ss:$8 sm:$0x3] %vm4, %v3
    %s6 = scalar_lea.vmem %s0, 7
    %s7 = smov 3
    %v8 = vld [vmem:[%s6] ss:$8 sm:%s7]
    %9 = vrot.lane.b32.xlu0 %v8, 112
    %v10 = vpop.permute.xlu0 %9
    %vm11 = vcmask 1048448
    %12 = vst.msk [vmem:[#allocation0] ss:$8 sm:$0x3] %vm11, %v10
    %s13 = scalar_lea.vmem %s0, 6
    %s14 = smov 3
    %v15 = vld [vmem:[%s13] ss:$8 sm:%s14]
    %16 = vrot.lane.b32.xlu0 %v15, 96
    %v17 = vpop.permute.xlu0 %16
    %vm18 = vcmask 917248
    %19 = vst.msk [vmem:[#allocation0] ss:$8 sm:$0x3] %vm18, %v17
    %s20 = scalar_lea.vmem %s0, 5
    %s21 = smov 3
    %v22 = vld [vmem:[%s20] ss:$8 sm:%s21]
    %23 = vrot.lane.b32.xlu0 %v22, 80
    %v24 = vpop.permute.xlu0 %23
    %vm25 = vcmask 786048
    %26 = vst.msk [vmem:[#allocation0] ss:$8 sm:$0x3] %vm25, %v24
    %s27 = scalar_lea.vmem %s0, 4
    %s28 = smov 3
    %v29 = vld [vmem:[%s27] ss:$8 sm:%s28]
    %30 = vrot.lane.b32.xlu0 %v29, 64
    %v31 = vpop.permute.xlu0 %30
    %vm32 = vcmask 654848
    %33 = vst.msk [vmem:[#allocation0] ss:$8 sm:$0x3] %vm32, %v31
    %s34 = scalar_lea.vmem %s0, 3
    %s35 = smov 3
    %v36 = vld [vmem:[%s34] ss:$8 sm:%s35]
    %37 = vrot.lane.b32.xlu0 %v36, 48
    %v38 = vpop.permute.xlu0 %37
    %vm39 = vcmask 523648
    %40 = vst.msk [vmem:[#allocation0] ss:$8 sm:$0x3] %vm39, %v38
    %s41 = scalar_lea.vmem %s0, 2
    %s42 = smov 3
    %v43 = vld [vmem:[%s41] ss:$8 sm:%s42]
    %44 = vrot.lane.b32.xlu0 %v43, 32
    %v45 = vpop.permute.xlu0 %44
    %vm46 = vcmask 392448
    %47 = vst.msk [vmem:[#allocation0] ss:$8 sm:$0x3] %vm46, %v45
    %s48 = scalar_lea.vmem %s0, 1
    %s49 = smov 3
    %v50 = vld [vmem:[%s48] ss:$8 sm:%s49]
    %51 = vrot.lane.b32.xlu0 %v50, 16
    %v52 = vpop.permute.xlu0 %51
    %vm53 = vcmask 261248
    %54 = vst.msk [vmem:[#allocation0] ss:$8 sm:$0x3] %vm53, %v52
    %s56 = sshll.u32 1, 1
    %s57 = ssub.s32 %s56, 1
    %v59 = vld [vmem:[#allocation0] sm:%s57]
    %s60 = sshll.u32 1, 1
    %s61 = ssub.s32 %s60, 1
    %62 = vst [vmem:[%s1] sm:%s61] %v59
    %s63 = scalar_lea.vmem [#allocation0], 8
    %v64 = vld [vmem:[%s63] sm:%s57]
    %s65 = sshll.u32 1, 1
    %s66 = ssub.s32 %s65, 1
    %s67 = scalar_lea.vmem %s1, 1
    %68 = vst [vmem:[%s67] sm:%s66] %v64

// kernel: resconv_forward.5
$region0: #{resconv_forward.5}
  #allocation0 [shape = 'u32[]', space=smem, size = 0x4, offset = 0x4, fixed_abs, tag = 'smem constant byte address 0x4 - core index']
  #allocation1 [shape = 'u32[144,128]{1,0:T(1,128)}', space=vmem, size = 0x12000, scoped, tag = 'internal scratch']
  %s0 = inlined_call_operand.vmem [shape: bf16[64,256], index: 0, kind: input, shape index: {}]
  %s1 = inlined_call_operand.vmem [shape: f32[64,256], index: 1, kind: input, shape index: {}]
  %s2 = inlined_call_operand.vmem [shape: f32[1,256], index: 2, kind: input, shape index: {}]
  %s3 = inlined_call_operand.vmem [shape: f32[1,256], index: 3, kind: input, shape index: {}]
  %s4 = inlined_call_operand.vmem [shape: f32[64,256], index: 4, kind: output, shape index: {}]
  %s5 = sld [smem:[#allocation0]]
  $region26: #{resconv_forward.5} parent=0
    _
  %s7 = ssub.s32 1, %s5
  %s8 = scalar_select 0, %s7, %s5
  // Predicated region
  $region2: #{resconv_forward.5} parent=0 // pred_check
    _
  $region3: #{resconv_forward.5} parent=0 // pred_check_branch
    %10 = sbr.rel (0) target = $region5
  $region4: #{resconv_forward.5} parent=0 // pred_region
    _
  $region5: #{resconv_forward.5} parent=0 // pred_fallthru
    _
  // Predicated region
  $region6: #{resconv_forward.5} parent=0 // pred_check
    _
  $region7: #{resconv_forward.5} parent=0 // pred_check_branch
    %12 = sbr.rel (0) target = $region9
  $region8: #{resconv_forward.5} parent=0 // pred_region
    _
  $region9: #{resconv_forward.5} parent=0 // pred_fallthru
    _
  // Predicated region
  $region10: #{resconv_forward.5} parent=0 // pred_check
    _
  $region11: #{resconv_forward.5} parent=0 // pred_check_branch
    %14 = sbr.rel (0) target = $region13
  $region12: #{resconv_forward.5} parent=0 // pred_region
    _
  $region13: #{resconv_forward.5} parent=0 // pred_fallthru
    _
  // Predicated region
  $region14: #{resconv_forward.5} parent=0 // pred_check
    _
  $region15: #{resconv_forward.5} parent=0 // pred_check_branch
    %16 = sbr.rel (0) target = $region17
  $region16: #{resconv_forward.5} parent=0 // pred_region
    _
  $region17: #{resconv_forward.5} parent=0 // pred_fallthru
    _
  %v17 = vld [vmem:[%s0] sm:$0xff]
  %v18 = vld [vmem:[%s0 + $0x8] sm:$0xff]
  %v19 = vld [vmem:[%s0 + $0x10] sm:$0xff]
  %v20 = vld [vmem:[%s0 + $0x18] sm:$0xff]
  %v21 = vld [vmem:[%s0 + $0x20] sm:$0xff]
  %v22 = vld [vmem:[%s0 + $0x28] sm:$0xff]
  %v23 = vld [vmem:[%s0 + $0x30] sm:$0xff]
  %v24 = vld [vmem:[%s0 + $0x38] sm:$0xff]
  %v25 = vunpack.c.l.bf16 %v17
  %v26 = vunpack.c.h.bf16 %v17
  %v27 = vunpack.c.l.bf16 %v18
  %v28 = vunpack.c.h.bf16 %v18
  %v29 = vunpack.c.l.bf16 %v19
  %v30 = vunpack.c.h.bf16 %v19
  %v31 = vunpack.c.l.bf16 %v20
  %v32 = vunpack.c.h.bf16 %v20
  %v33 = vunpack.c.l.bf16 %v21
  %v34 = vunpack.c.h.bf16 %v21
  %v35 = vunpack.c.l.bf16 %v22
  %v36 = vunpack.c.h.bf16 %v22
  %v37 = vunpack.c.l.bf16 %v23
  %v38 = vunpack.c.h.bf16 %v23
  %v39 = vunpack.c.l.bf16 %v24
  %v40 = vunpack.c.h.bf16 %v24
  %v41 = vld [vmem:[%s2] sm:$0x3]
  %v43 = vlaneseq
  %v44 = vshrl.u32 %v43, 7
  %v45 = vsub.s32 0, %v44
  %v46 = vrot.slane %v41, %v45
  %v47 = vlaneseq
  %v48 = vshrl.u32 %v47, 7
  %v49 = vsub.s32 1, %v48
  %v50 = vrot.slane %v41, %v49
  %v53 = vmul.f32 %v25, %v46
  %v54 = vmul.f32 %v26, %v50
  %v55 = vmul.f32 %v27, %v46
  %v56 = vmul.f32 %v28, %v50
  %v57 = vmul.f32 %v29, %v46
  %v58 = vmul.f32 %v30, %v50
  %v59 = vmul.f32 %v31, %v46
  %v60 = vmul.f32 %v32, %v50
  %v61 = vmul.f32 %v33, %v46
  %v62 = vmul.f32 %v34, %v50
  %v63 = vmul.f32 %v35, %v46
  %v64 = vmul.f32 %v36, %v50
  %v65 = vmul.f32 %v37, %v46
  %v66 = vmul.f32 %v38, %v50
  %v67 = vmul.f32 %v39, %v46
  %v68 = vmul.f32 %v40, %v50
  %v69 = vld [vmem:[%s3] sm:$0x3]
  %v71 = vlaneseq
  %v72 = vshrl.u32 %v71, 7
  %v73 = vsub.s32 0, %v72
  %v74 = vrot.slane %v69, %v73
  %v75 = vlaneseq
  %v76 = vshrl.u32 %v75, 7
  %v77 = vsub.s32 1, %v76
  %v78 = vrot.slane %v69, %v77
  %v81 = vadd.f32 %v53, %v74
  %v82 = vadd.f32 %v54, %v78
  %v83 = vadd.f32 %v55, %v74
  %v84 = vadd.f32 %v56, %v78
  %v85 = vadd.f32 %v57, %v74
  %v86 = vadd.f32 %v58, %v78
  %v87 = vadd.f32 %v59, %v74
  %v88 = vadd.f32 %v60, %v78
  %v89 = vadd.f32 %v61, %v74
  %v90 = vadd.f32 %v62, %v78
  %v91 = vadd.f32 %v63, %v74
  %v92 = vadd.f32 %v64, %v78
  %v93 = vadd.f32 %v65, %v74
  %v94 = vadd.f32 %v66, %v78
  %v95 = vadd.f32 %v67, %v74
  %v96 = vadd.f32 %v68, %v78
  %v97 = vmax.f32 %v81, 0.0
  %v98 = vmax.f32 %v82, 0.0
  %v99 = vmax.f32 %v83, 0.0
  %v100 = vmax.f32 %v84, 0.0
  %v101 = vmax.f32 %v85, 0.0
  %v102 = vmax.f32 %v86, 0.0
  %v103 = vmax.f32 %v87, 0.0
  %v104 = vmax.f32 %v88, 0.0
  %v105 = vmax.f32 %v89, 0.0
  %v106 = vmax.f32 %v90, 0.0
  %v107 = vmax.f32 %v91, 0.0
  %v108 = vmax.f32 %v92, 0.0
  %v109 = vmax.f32 %v93, 0.0
  %v110 = vmax.f32 %v94, 0.0
  %v111 = vmax.f32 %v95, 0.0
  %v112 = vmax.f32 %v96, 0.0
  %v113 = vld [vmem:[%s1] sm:$0xff]
  %v114 = vld [vmem:[%s1 + $0x8] sm:$0xff]
  %v115 = vld [vmem:[%s1 + $0x10] sm:$0xff]
  %v116 = vld [vmem:[%s1 + $0x18] sm:$0xff]
  %v117 = vld [vmem:[%s1 + $0x20] sm:$0xff]
  %v118 = vld [vmem:[%s1 + $0x28] sm:$0xff]
  %v119 = vld [vmem:[%s1 + $0x30] sm:$0xff]
  %v120 = vld [vmem:[%s1 + $0x38] sm:$0xff]
  %v121 = vld [vmem:[%s1 + $0x40] sm:$0xff]
  %v122 = vld [vmem:[%s1 + $0x48] sm:$0xff]
  %v123 = vld [vmem:[%s1 + $0x50] sm:$0xff]
  %v124 = vld [vmem:[%s1 + $0x58] sm:$0xff]
  %v125 = vld [vmem:[%s1 + $0x60] sm:$0xff]
  %v126 = vld [vmem:[%s1 + $0x68] sm:$0xff]
  %v127 = vld [vmem:[%s1 + $0x70] sm:$0xff]
  %v128 = vld [vmem:[%s1 + $0x78] sm:$0xff]
  %v129 = vadd.f32 %v97, %v113
  %v130 = vadd.f32 %v98, %v114
  %v131 = vadd.f32 %v99, %v115
  %v132 = vadd.f32 %v100, %v116
  %v133 = vadd.f32 %v101, %v117
  %v134 = vadd.f32 %v102, %v118
  %v135 = vadd.f32 %v103, %v119
  %v136 = vadd.f32 %v104, %v120
  %v137 = vadd.f32 %v105, %v121
  %v138 = vadd.f32 %v106, %v122
  %v139 = vadd.f32 %v107, %v123
  %v140 = vadd.f32 %v108, %v124
  %v141 = vadd.f32 %v109, %v125
  %v142 = vadd.f32 %v110, %v126
  %v143 = vadd.f32 %v111, %v127
  %v144 = vadd.f32 %v112, %v128
  %145 = vst [vmem:[%s4] sm:$0xff] %v129
  %146 = vst [vmem:[%s4 + $0x8] sm:$0xff] %v130
  %147 = vst [vmem:[%s4 + $0x10] sm:$0xff] %v131
  %148 = vst [vmem:[%s4 + $0x18] sm:$0xff] %v132
  %149 = vst [vmem:[%s4 + $0x20] sm:$0xff] %v133
  %150 = vst [vmem:[%s4 + $0x28] sm:$0xff] %v134
  %151 = vst [vmem:[%s4 + $0x30] sm:$0xff] %v135
  %152 = vst [vmem:[%s4 + $0x38] sm:$0xff] %v136
  %153 = vst [vmem:[%s4 + $0x40] sm:$0xff] %v137
  %154 = vst [vmem:[%s4 + $0x48] sm:$0xff] %v138
  %155 = vst [vmem:[%s4 + $0x50] sm:$0xff] %v139
  %156 = vst [vmem:[%s4 + $0x58] sm:$0xff] %v140
  %157 = vst [vmem:[%s4 + $0x60] sm:$0xff] %v141
  %158 = vst [vmem:[%s4 + $0x68] sm:$0xff] %v142
  %159 = vst [vmem:[%s4 + $0x70] sm:$0xff] %v143
  %160 = vst [vmem:[%s4 + $0x78] sm:$0xff] %v144
  // Predicated region
  $region18: #{resconv_forward.5} parent=0 // pred_check
    _
  $region19: #{resconv_forward.5} parent=0 // pred_check_branch
    %162 = sbr.rel (0) target = $region21
  $region20: #{resconv_forward.5} parent=0 // pred_region
    _
  $region21: #{resconv_forward.5} parent=0 // pred_fallthru
    _
  // Predicated region
  $region22: #{resconv_forward.5} parent=0 // pred_check
    _
  $region23: #{resconv_forward.5} parent=0 // pred_check_branch
    %164 = sbr.rel (0) target = $region25
  $region24: #{resconv_forward.5} parent=0 // pred_region
    _
  $region25: #{resconv_forward.5} parent=0 // pred_fallthru
    _

// kernel: resconv_forward.3
$region0: #{resconv_forward.3}
  #allocation0 [shape = 'u32[]', space=smem, size = 0x4, offset = 0x4, fixed_abs, tag = 'smem constant byte address 0x4 - core index']
  #allocation1 [shape = 'u32[144,128]{1,0:T(1,128)}', space=vmem, size = 0x12000, scoped, tag = 'internal scratch']
  %s0 = inlined_call_operand.vmem [shape: f32[4,16,16,16], index: 0, kind: input, shape index: {}]
  %s1 = inlined_call_operand.vmem [shape: bf16[144,16], index: 1, kind: input, shape index: {}]
  %s2 = inlined_call_operand.vmem [shape: bf16[4,16,16,16], index: 2, kind: output, shape index: {0}]
  %s3 = inlined_call_operand.vmem [shape: f32[4,1,16], index: 3, kind: output, shape index: {1}]
  %s4 = inlined_call_operand.vmem [shape: f32[4,1,16], index: 4, kind: output, shape index: {2}]
  %5 = xla_tuple %s2, %s3, %s4
  %s6 = sld [smem:[#allocation0]]
  $region57: #{resconv_forward.3} parent=0
    _
  %s8 = ssub.s32 1, %s6
  %s9 = scalar_select 0, %s8, %s6
  loop: start=0, step=1, limit=6
  $region2: #{resconv_forward.3} parent=0 // loop_pre_header
    _
  $region3: #{resconv_forward.3} parent=0 // loop_header
    %s11 = sphi 0, %s15
    %p12 = scmp.ge.s32.totalorder %s11, 6
    %s21 = sphi 0, %s23
    %s24 = sphi 0, %s21
    %s25 = sphi 0, %s24
    %s41 = sphi 0, %s25
    %s45 = sphi 0, %s45
    %s47 = sphi 0, %s45
    %s48 = sphi 0, %s47
    %s62 = sphi 0, %s48
    %s68 = sphi 0, %s70
    %s71 = sphi 0, %s68
    %s72 = sphi 0, %s71
    %s88 = sphi 0, %s72
    %s94 = sphi 0, %s96
    %s97 = sphi 0, %s94
    %s98 = sphi 0, %s97
    %s114 = sphi 0, %s98
    %s120 = sphi 0, %s122
    %s123 = sphi 0, %s120
    %s124 = sphi 0, %s123
    %s140 = sphi 0, %s124
  $region4: #{resconv_forward.3} parent=0 // loop_header_branch
    %14 = sbr.rel (%p12) target = $region8
  $region5: #{resconv_forward.3} parent=0 // loop_body
    %s16 = ssub.s32 %s11, 1
    %s17 = ssub.s32 %s11, 2
    %s18 = sadd.s32 %s11, 1
    %s19 = ssub.s32 %s11, %s18
    %p20 = scmp.eq.s32.totalorder %s19, 0
    %s22 = sadd.s32 %s21, 1
    %s23 = scalar_select %p20, %s21, %s22
    %p26 = pneg %p20
    %p27 = scmp.eq.s32.totalorder %s11, 3
    %p28 = por %p26, %p27
    %p29 = scmp.ne.s32.totalorder %s21, %s24
    %p30 = scmp.eq.s32.totalorder %s11, 0
    %p31 = por %p29, %p30
    %p32 = scmp.ne.s32.totalorder %s21, %s24
    %p33 = scmp.eq.s32.totalorder %s16, 3
    %p34 = por %p32, %p33
    %p35 = scmp.ne.s32.totalorder %s24, %s25
    %p36 = scmp.eq.s32.totalorder %s16, 0
    %p37 = por %p35, %p36
    %p38 = scmp.ne.s32.totalorder %s24, %s25
    %p39 = scmp.eq.s32.totalorder %s17, 3
    %p40 = por %p38, %p39
    %p42 = scmp.ne.s32.totalorder %s25, %s41
    %p43 = scmp.eq.s32.totalorder %s17, 0
    %p44 = por %p42, %p43
    %s46 = sadd.s32 %s45, 1
    %p49 = scmp.eq.s32.totalorder %s11, 3
    %p50 = scmp.ne.s32.totalorder %s45, %s47
    %p51 = scmp.eq.s32.totalorder %s11, 0
    %p52 = por %p50, %p51
    %p53 = scmp.ne.s32.totalorder %s45, %s47
    %p54 = scmp.eq.s32.totalorder %s16, 3
    %p55 = por %p53, %p54
    %p56 = scmp.ne.s32.totalorder %s47, %s48
    %p57 = scmp.eq.s32.totalorder %s16, 0
    %p58 = por %p56, %p57
    %p59 = scmp.ne.s32.totalorder %s47, %s48
    %p60 = scmp.eq.s32.totalorder %s17, 3
    %p61 = por %p59, %p60
    %p63 = scmp.ne.s32.totalorder %s48, %s62
    %p64 = scmp.eq.s32.totalorder %s17, 0
    %p65 = por %p63, %p64
    %s66 = ssub.s32 %s11, %s18
    %p67 = scmp.eq.s32.totalorder %s66, 0
    %s69 = sadd.s32 %s68, 1
    %s70 = scalar_select %p67, %s68, %s69
    %p73 = pneg %p67
    %p74 = scmp.eq.s32.totalorder %s11, 3
    %p75 = por %p73, %p74
    %p76 = scmp.ne.s32.totalorder %s68, %s71
    %p77 = scmp.eq.s32.totalorder %s11, 0
    %p78 = por %p76, %p77
    %p79 = scmp.ne.s32.totalorder %s68, %s71
    %p80 = scmp.eq.s32.totalorder %s16, 3
    %p81 = por %p79, %p80
    %p82 = scmp.ne.s32.totalorder %s71, %s72
    %p83 = scmp.eq.s32.totalorder %s16, 0
    %p84 = por %p82, %p83
    %p85 = scmp.ne.s32.totalorder %s71, %s72
    %p86 = scmp.eq.s32.totalorder %s17, 3
    %p87 = por %p85, %p86
    %p89 = scmp.ne.s32.totalorder %s72, %s88
    %p90 = scmp.eq.s32.totalorder %s17, 0
    %p91 = por %p89, %p90
    %s92 = ssub.s32 %s11, %s18
    %p93 = scmp.eq.s32.totalorder %s92, 0
    %s95 = sadd.s32 %s94, 1
    %s96 = scalar_select %p93, %s94, %s95
    %p99 = pneg %p93
    %p100 = scmp.eq.s32.totalorder %s11, 3
    %p101 = por %p99, %p100
    %p102 = scmp.ne.s32.totalorder %s94, %s97
    %p103 = scmp.eq.s32.totalorder %s11, 0
    %p104 = por %p102, %p103
    %p105 = scmp.ne.s32.totalorder %s94, %s97
    %p106 = scmp.eq.s32.totalorder %s16, 3
    %p107 = por %p105, %p106
    %p108 = scmp.ne.s32.totalorder %s97, %s98
    %p109 = scmp.eq.s32.totalorder %s16, 0
    %p110 = por %p108, %p109
    %p111 = scmp.ne.s32.totalorder %s97, %s98
    %p112 = scmp.eq.s32.totalorder %s17, 3
    %p113 = por %p111, %p112
    %p115 = scmp.ne.s32.totalorder %s98, %s114
    %p116 = scmp.eq.s32.totalorder %s17, 0
    %p117 = por %p115, %p116
    %s118 = ssub.s32 %s11, %s18
    %p119 = scmp.eq.s32.totalorder %s118, 0
    %s121 = sadd.s32 %s120, 1
    %s122 = scalar_select %p119, %s120, %s121
    %p125 = pneg %p119
    %p126 = scmp.eq.s32.totalorder %s11, 3
    %p127 = por %p125, %p126
    %p128 = scmp.ne.s32.totalorder %s120, %s123
    %p129 = scmp.eq.s32.totalorder %s11, 0
    %p130 = por %p128, %p129
    %p131 = scmp.ne.s32.totalorder %s120, %s123
    %p132 = scmp.eq.s32.totalorder %s16, 3
    %p133 = por %p131, %p132
    %p134 = scmp.ne.s32.totalorder %s123, %s124
    %p135 = scmp.eq.s32.totalorder %s16, 0
    %p136 = por %p134, %p135
    %p137 = scmp.ne.s32.totalorder %s123, %s124
    %p138 = scmp.eq.s32.totalorder %s17, 3
    %p139 = por %p137, %p138
    %p141 = scmp.ne.s32.totalorder %s124, %s140
    %p142 = scmp.eq.s32.totalorder %s17, 0
    %p143 = por %p141, %p142
    %p144 = scmp.le.s32.totalorder 1, %s11
    %p145 = scmp.lt.s32.totalorder %s11, 5
    %p146 = pnand %p144, %p145
    %p147 = pneg %p146
    // Predicated region
    $region9: #{resconv_forward.3} parent=5 // pred_check
      _
    $region10: #{resconv_forward.3} parent=5 // pred_check_branch
      %149 = sbr.rel (%p146) target = $region12
    $region11: #{resconv_forward.3} parent=5 // pred_region
      %s150 = ssub.s32 %s11, 1
      // Predicated region
      $region13: #{resconv_forward.3} parent=11 // pred_check
        %p151 = pneg %p58
      $region14: #{resconv_forward.3} parent=11 // pred_check_branch
        %153 = sbr.rel (%p151) target = $region16
      $region15: #{resconv_forward.3} parent=11 // pred_region
        _
      $region16: #{resconv_forward.3} parent=11 // pred_fallthru
        _
    $region12: #{resconv_forward.3} parent=5 // pred_fallthru
      _
    %p154 = scmp.lt.s32.totalorder %s11, 4
    // Predicated region
    $region17: #{resconv_forward.3} parent=5 // pred_check
      %p155 = pneg %p154
    $region18: #{resconv_forward.3} parent=5 // pred_check_branch
      %157 = sbr.rel (%p155) target = $region20
    $region19: #{resconv_forward.3} parent=5 // pred_region
      // Predicated region
      $region21: #{resconv_forward.3} parent=19 // pred_check
        %p158 = pneg %p31
      $region22: #{resconv_forward.3} parent=19 // pred_check_branch
        %160 = sbr.rel (%p158) target = $region24
      $region23: #{resconv_forward.3} parent=19 // pred_region
        %p161 = scmp.lt.s32.totalorder %s11, 3
        %s162 = scalar_select %p161, %s11, 3
        %s163 = smul.addr %s162, 32
        %s164 = smul.addr %s163, 8
        %s165 = scalar_lea.vmem %s0, %s164
      $region24: #{resconv_forward.3} parent=19 // pred_fallthru
        _
    $region20: #{resconv_forward.3} parent=5 // pred_fallthru
      _
    %p166 = scmp.le.s32.totalorder 1, %s11
    %p167 = scmp.lt.s32.totalorder %s11, 5
    %p168 = pnand %p166, %p167
    %p169 = pneg %p168
    // Predicated region
    $region25: #{resconv_forward.3} parent=5 // pred_check
      _
    $region26: #{resconv_forward.3} parent=5 // pred_check_branch
      %171 = sbr.rel (%p168) target = $region28
    $region27: #{resconv_forward.3} parent=5 // pred_region
      %s172 = ssub.s32 %s11, 1
      %p173 = scmp.lt.s32.totalorder %s16, 3
      %s174 = scalar_select %p173, %s16, 3
      %s175 = smul.addr %s174, 32
      %s176 = smul.addr %s175, 8
      %s177 = scalar_lea.vmem %s0, %s176
      %p178 = pneg %p37
      %p179 = pneg %p34
      %p180 = pneg %p58
      %p181 = pneg %p55
      %p182 = pneg %p84
      %p183 = pneg %p81
      %p184 = scmp.lt.s32.totalorder %s16, 3
      %s185 = scalar_select %p184, %s16, 3
      %s186 = smul.addr %s185, 32
      %s187 = smul.addr %s186, 4
      %s188 = scalar_lea.vmem %s2, %s187
      %p189 = pneg %p110
      %p190 = pneg %p107
      %p191 = scmp.lt.s32.totalorder %s16, 3
      %s192 = scalar_select %p191, %s16, 3
      %s193 = scalar_lea.vmem %s3, %s192
      %p194 = pneg %p136
      %p195 = pneg %p133
      %p196 = scmp.lt.s32.totalorder %s16, 3
      %s197 = scalar_select %p196, %s16, 3
      %s198 = scalar_lea.vmem %s4, %s197
      %p199 = scmp.lt.s32.totalorder %s16, 3
      %s200 = scalar_select %p199, %s16, 3
      %s201 = smul.addr %s200, 32
      %s202 = smul.addr %s201, 8
      %s203 = scalar_lea.vmem %s0, %s202
      %p204 = scmp.lt.s32.totalorder %s16, 3
      %s205 = scalar_select %p204, %s16, 3
      %s206 = smul.addr %s205, 32
      %s207 = smul.addr %s206, 4
      %s208 = scalar_lea.vmem %s2, %s207
      %p209 = scmp.lt.s32.totalorder %s16, 3
      %s210 = scalar_select %p209, %s16, 3
      %s211 = scalar_lea.vmem %s3, %s210
      %p212 = scmp.lt.s32.totalorder %s16, 3
      %s213 = scalar_select %p212, %s16, 3
      %s214 = scalar_lea.vmem %s4, %s213
      %v216 = vld [vmem:[%s203] sm:$0xff]
      %v217 = vld [vmem:[%s203 + $0x8] sm:$0xff]
      %v218 = vld [vmem:[%s203 + $0x10] sm:$0xff]
      %v219 = vld [vmem:[%s203 + $0x18] sm:$0xff]
      %v220 = vld [vmem:[%s203 + $0x20] sm:$0xff]
      %v221 = vld [vmem:[%s203 + $0x28] sm:$0xff]
      %v222 = vld [vmem:[%s203 + $0x30] sm:$0xff]
      %v223 = vld [vmem:[%s203 + $0x38] sm:$0xff]
      %v224 = vld [vmem:[%s203 + $0x40] sm:$0xff]
      %v225 = vld [vmem:[%s203 + $0x48] sm:$0xff]
      %v226 = vld [vmem:[%s203 + $0x50] sm:$0xff]
      %v227 = vld [vmem:[%s203 + $0x58] sm:$0xff]
      %v228 = vld [vmem:[%s203 + $0x60] sm:$0xff]
      %v229 = vld [vmem:[%s203 + $0x68] sm:$0xff]
      %v230 = vld [vmem:[%s203 + $0x70] sm:$0xff]
      %v231 = vld [vmem:[%s203 + $0x78] sm:$0xff]
      %v232 = vld [vmem:[%s203 + $0x80] sm:$0xff]
      %v233 = vld [vmem:[%s203 + $0x88] sm:$0xff]
      %v234 = vld [vmem:[%s203 + $0x90] sm:$0xff]
      %v235 = vld [vmem:[%s203 + $0x98] sm:$0xff]
      %v236 = vld [vmem:[%s203 + $0xa0] sm:$0xff]
      %v237 = vld [vmem:[%s203 + $0xa8] sm:$0xff]
      %v238 = vld [vmem:[%s203 + $0xb0] sm:$0xff]
      %v239 = vld [vmem:[%s203 + $0xb8] sm:$0xff]
      %v240 = vld [vmem:[%s203 + $0xc0] sm:$0xff]
      %v241 = vld [vmem:[%s203 + $0xc8] sm:$0xff]
      %v242 = vld [vmem:[%s203 + $0xd0] sm:$0xff]
      %v243 = vld [vmem:[%s203 + $0xd8] sm:$0xff]
      %v244 = vld [vmem:[%s203 + $0xe0] sm:$0xff]
      %v245 = vld [vmem:[%s203 + $0xe8] sm:$0xff]
      %v246 = vld [vmem:[%s203 + $0xf0] sm:$0xff]
      %v247 = vld [vmem:[%s203 + $0xf8] sm:$0xff]
      %v248 = vpack.c.bf16 %v217, %v216
      %v249 = vpack.c.bf16 %v219, %v218
      %v250 = vpack.c.bf16 %v221, %v220
      %v251 = vpack.c.bf16 %v223, %v222
      %v252 = vpack.c.bf16 %v225, %v224
      %v253 = vpack.c.bf16 %v227, %v226
      %v254 = vpack.c.bf16 %v229, %v228
      %v255 = vpack.c.bf16 %v231, %v230
      %v256 = vpack.c.bf16 %v233, %v232
      %v257 = vpack.c.bf16 %v235, %v234
      %v258 = vpack.c.bf16 %v237, %v236
      %v259 = vpack.c.bf16 %v239, %v238
      %v260 = vpack.c.bf16 %v241, %v240
      %v261 = vpack.c.bf16 %v243, %v242
      %v262 = vpack.c.bf16 %v245, %v244
      %v263 = vpack.c.bf16 %v247, %v246
      %v264 = vld [vmem:[%s1] sm:$0xf]
      %v265 = vld [vmem:[%s1 + $0x4] sm:$0xf]
      %v266 = vld [vmem:[%s1 + $0x8] sm:$0xf]
      %v267 = vld [vmem:[%s1 + $0xc] sm:$0xf]
      %v268 = vld [vmem:[%s1 + $0x10] sm:$0xf]
      %v269 = vld [vmem:[%s1 + $0x14] sm:$0xf]
      %v270 = vld [vmem:[%s1 + $0x18] sm:$0xf]
      %v271 = vld [vmem:[%s1 + $0x1c] sm:$0xf]
      %v272 = vld [vmem:[%s1 + $0x20] sm:$0xf]
      %v273 = vld [vmem:[%s1 + $0x24] sm:$0xf]
      %v274 = vld [vmem:[%s1 + $0x28] sm:$0xf]
      %v275 = vld [vmem:[%s1 + $0x2c] sm:$0xf]
      %v276 = vld [vmem:[%s1 + $0x30] sm:$0xf]
      %v277 = vld [vmem:[%s1 + $0x34] sm:$0xf]
      %v278 = vld [vmem:[%s1 + $0x38] sm:$0xf]
      %v279 = vld [vmem:[%s1 + $0x3c] sm:$0xf]
      %v280 = vld [vmem:[%s1 + $0x40] sm:$0xf]
      %v281 = vld [vmem:[%s1 + $0x44] sm:$0xf]
      %v283 = vshrl.u32 %v248, 16
      %v285 = vrot.slane %v283, 7
      %v286 = vshll.u32 %v248, 16
      %v288 = vor.u32 %v285, %v286
      %v290 = vshrl.u32 %v249, 16
      %v292 = vrot.slane %v290, 7
      %v293 = vshll.u32 %v249, 16
      %v295 = vor.u32 %v292, %v293
      %v297 = vshrl.u32 %v250, 16
      %v299 = vrot.slane %v297, 7
      %v300 = vshll.u32 %v250, 16
      %v302 = vor.u32 %v299, %v300
      %v304 = vshrl.u32 %v251, 16
      %v306 = vrot.slane %v304, 7
      %v307 = vshll.u32 %v251, 16
      %v309 = vor.u32 %v306, %v307
      %v311 = vshrl.u32 %v252, 16
      %v313 = vrot.slane %v311, 7
      %v314 = vshll.u32 %v252, 16
      %v316 = vor.u32 %v313, %v314
      %v318 = vshrl.u32 %v253, 16
      %v320 = vrot.slane %v318, 7
      %v321 = vshll.u32 %v253, 16
      %v323 = vor.u32 %v320, %v321
      %v325 = vshrl.u32 %v254, 16
      %v327 = vrot.slane %v325, 7
      %v328 = vshll.u32 %v254, 16
      %v330 = vor.u32 %v327, %v328
      %v332 = vshrl.u32 %v255, 16
      %v334 = vrot.slane %v332, 7
      %v335 = vshll.u32 %v255, 16
      %v337 = vor.u32 %v334, %v335
      %v339 = vshrl.u32 %v256, 16
      %v341 = vrot.slane %v339, 7
      %v342 = vshll.u32 %v256, 16
      %v344 = vor.u32 %v341, %v342
      %v346 = vshrl.u32 %v257, 16
      %v348 = vrot.slane %v346, 7
      %v349 = vshll.u32 %v257, 16
      %v351 = vor.u32 %v348, %v349
      %v353 = vshrl.u32 %v258, 16
      %v355 = vrot.slane %v353, 7
      %v356 = vshll.u32 %v258, 16
      %v358 = vor.u32 %v355, %v356
      %v360 = vshrl.u32 %v259, 16
      %v362 = vrot.slane %v360, 7
      %v363 = vshll.u32 %v259, 16
      %v365 = vor.u32 %v362, %v363
      %v367 = vshrl.u32 %v260, 16
      %v369 = vrot.slane %v367, 7
      %v370 = vshll.u32 %v260, 16
      %v372 = vor.u32 %v369, %v370
      %v374 = vshrl.u32 %v261, 16
      %v376 = vrot.slane %v374, 7
      %v377 = vshll.u32 %v261, 16
      %v379 = vor.u32 %v376, %v377
      %v381 = vshrl.u32 %v262, 16
      %v383 = vrot.slane %v381, 7
      %v384 = vshll.u32 %v262, 16
      %v386 = vor.u32 %v383, %v384
      %v388 = vshrl.u32 %v263, 16
      %v390 = vrot.slane %v388, 7
      %v391 = vshll.u32 %v263, 16
      %v393 = vor.u32 %v390, %v391
      %vm426 = vcmask 1040384
      %vm427 = vsmask.f32 256
      %vm428 = vmand %vm426, %vm427
      %v429 = vsel %vm428, 0, %v288
      %v430 = vsel %vm428, 0, %v295
      %v431 = vsel %vm428, 0, %v302
      %v432 = vsel %vm428, 0, %v309
      %v433 = vsel %vm428, 0, %v316
      %v434 = vsel %vm428, 0, %v323
      %v435 = vsel %vm428, 0, %v330
      %v436 = vsel %vm428, 0, %v337
      %v437 = vsel %vm428, 0, %v344
      %v438 = vsel %vm428, 0, %v351
      %v439 = vsel %vm428, 0, %v358
      %v440 = vsel %vm428, 0, %v365
      %v441 = vsel %vm428, 0, %v372
      %v442 = vsel %vm428, 0, %v379
      %v443 = vsel %vm428, 0, %v386
      %v444 = vsel %vm428, 0, %v393
      %v445 = vsel %vm428, %v285, 0
      %v446 = vsel %vm428, %v292, 0
      %v447 = vsel %vm428, %v299, 0
      %v448 = vsel %vm428, %v306, 0
      %v449 = vsel %vm428, %v313, 0
      %v450 = vsel %vm428, %v320, 0
      %v451 = vsel %vm428, %v327, 0
      %v452 = vsel %vm428, %v334, 0
      %v453 = vsel %vm428, %v341, 0
      %v454 = vsel %vm428, %v348, 0
      %v455 = vsel %vm428, %v355, 0
      %v456 = vsel %vm428, %v362, 0
      %v457 = vsel %vm428, %v369, 0
      %v458 = vsel %vm428, %v376, 0
      %v459 = vsel %vm428, %v383, 0
      %v460 = vsel %vm428, %v390, 0
      %vm461 = vsmask.f32 7424
      %v463 = vshrl.u32 0, 16
      %v465 = vshll.u32 0, 16
      %v467 = vrot.slane %v465, 1
      %v468 = vor.u32 %v463, %v467
      %v469 = vsel %vm461, %v468, %v467
      %v471 = vshrl.u32 %v429, 16
      %v473 = vshll.u32 %v429, 16
      %v475 = vrot.slane %v473, 1
      %v476 = vor.u32 %v471, %v475
      %v478 = vshll.u32 %v445, 16
      %v480 = vrot.slane %v478, 1
      %v481 = vsel %vm461, %v476, %v480
      %v483 = vshrl.u32 %v430, 16
      %v485 = vshll.u32 %v430, 16
      %v487 = vrot.slane %v485, 1
      %v488 = vor.u32 %v483, %v487
      %v490 = vshll.u32 %v446, 16
      %v492 = vrot.slane %v490, 1
      %v493 = vsel %vm461, %v488, %v492
      %v495 = vshrl.u32 %v431, 16
      %v497 = vshll.u32 %v431, 16
      %v499 = vrot.slane %v497, 1
      %v500 = vor.u32 %v495, %v499
      %v502 = vshll.u32 %v447, 16
      %v504 = vrot.slane %v502, 1
      %v505 = vsel %vm461, %v500, %v504
      %v507 = vshrl.u32 %v432, 16
      %v509 = vshll.u32 %v432, 16
      %v511 = vrot.slane %v509, 1
      %v512 = vor.u32 %v507, %v511
      %v514 = vshll.u32 %v448, 16
      %v516 = vrot.slane %v514, 1
      %v517 = vsel %vm461, %v512, %v516
      %v519 = vshrl.u32 %v433, 16
      %v521 = vshll.u32 %v433, 16
      %v523 = vrot.slane %v521, 1
      %v524 = vor.u32 %v519, %v523
      %v526 = vshll.u32 %v449, 16
      %v528 = vrot.slane %v526, 1
      %v529 = vsel %vm461, %v524, %v528
      %v531 = vshrl.u32 %v434, 16
      %v533 = vshll.u32 %v434, 16
      %v535 = vrot.slane %v533, 1
      %v536 = vor.u32 %v531, %v535
      %v538 = vshll.u32 %v450, 16
      %v540 = vrot.slane %v538, 1
      %v541 = vsel %vm461, %v536, %v540
      %v543 = vshrl.u32 %v435, 16
      %v545 = vshll.u32 %v435, 16
      %v547 = vrot.slane %v545, 1
      %v548 = vor.u32 %v543, %v547
      %v550 = vshll.u32 %v451, 16
      %v552 = vrot.slane %v550, 1
      %v553 = vsel %vm461, %v548, %v552
      %v555 = vshrl.u32 %v436, 16
      %v557 = vshll.u32 %v436, 16
      %v559 = vrot.slane %v557, 1
      %v560 = vor.u32 %v555, %v559
      %v562 = vshll.u32 %v452, 16
      %v564 = vrot.slane %v562, 1
      %v565 = vsel %vm461, %v560, %v564
      %v567 = vshrl.u32 %v437, 16
      %v569 = vshll.u32 %v437, 16
      %v571 = vrot.slane %v569, 1
      %v572 = vor.u32 %v567, %v571
      %v574 = vshll.u32 %v453, 16
      %v576 = vrot.slane %v574, 1
      %v577 = vsel %vm461, %v572, %v576
      %v579 = vshrl.u32 %v438, 16
      %v581 = vshll.u32 %v438, 16
      %v583 = vrot.slane %v581, 1
      %v584 = vor.u32 %v579, %v583
      %v586 = vshll.u32 %v454, 16
      %v588 = vrot.slane %v586, 1
      %v589 = vsel %vm461, %v584, %v588
      %v591 = vshrl.u32 %v439, 16
      %v593 = vshll.u32 %v439, 16
      %v595 = vrot.slane %v593, 1
      %v596 = vor.u32 %v591, %v595
      %v598 = vshll.u32 %v455, 16
      %v600 = vrot.slane %v598, 1
      %v601 = vsel %vm461, %v596, %v600
      %v603 = vshrl.u32 %v440, 16
      %v605 = vshll.u32 %v440, 16
      %v607 = vrot.slane %v605, 1
      %v608 = vor.u32 %v603, %v607
      %v610 = vshll.u32 %v456, 16
      %v612 = vrot.slane %v610, 1
      %v613 = vsel %vm461, %v608, %v612
      %v615 = vshrl.u32 %v441, 16
      %v617 = vshll.u32 %v441, 16
      %v619 = vrot.slane %v617, 1
      %v620 = vor.u32 %v615, %v619
      %v622 = vshll.u32 %v457, 16
      %v624 = vrot.slane %v622, 1
      %v625 = vsel %vm461, %v620, %v624
      %v627 = vshrl.u32 %v442, 16
      %v629 = vshll.u32 %v442, 16
      %v631 = vrot.slane %v629, 1
      %v632 = vor.u32 %v627, %v631
      %v634 = vshll.u32 %v458, 16
      %v636 = vrot.slane %v634, 1
      %v637 = vsel %vm461, %v632, %v636
      %v639 = vshrl.u32 %v443, 16
      %v641 = vshll.u32 %v443, 16
      %v643 = vrot.slane %v641, 1
      %v644 = vor.u32 %v639, %v643
      %v646 = vshll.u32 %v459, 16
      %v648 = vrot.slane %v646, 1
      %v649 = vsel %vm461, %v644, %v648
      %650 = vrot.lane.b32.xlu0 %v469, 16
      %v651 = vpop.permute.xlu0 %650
      %652 = vrot.lane.b32.xlu0 %v481, 16
      %v653 = vpop.permute.xlu0 %652
      %654 = vrot.lane.b32.xlu0 %v493, 16
      %v655 = vpop.permute.xlu0 %654
      %656 = vrot.lane.b32.xlu0 %v505, 16
      %v657 = vpop.permute.xlu0 %656
      %658 = vrot.lane.b32.xlu0 %v517, 16
      %v659 = vpop.permute.xlu0 %658
      %660 = vrot.lane.b32.xlu0 %v529, 16
      %v661 = vpop.permute.xlu0 %660
      %662 = vrot.lane.b32.xlu0 %v541, 16
      %v663 = vpop.permute.xlu0 %662
      %664 = vrot.lane.b32.xlu0 %v553, 16
      %v665 = vpop.permute.xlu0 %664
      %666 = vrot.lane.b32.xlu0 %v565, 16
      %v667 = vpop.permute.xlu0 %666
      %668 = vrot.lane.b32.xlu0 %v577, 16
      %v669 = vpop.permute.xlu0 %668
      %670 = vrot.lane.b32.xlu0 %v589, 16
      %v671 = vpop.permute.xlu0 %670
      %672 = vrot.lane.b32.xlu0 %v601, 16
      %v673 = vpop.permute.xlu0 %672
      %674 = vrot.lane.b32.xlu0 %v613, 16
      %v675 = vpop.permute.xlu0 %674
      %676 = vrot.lane.b32.xlu0 %v625, 16
      %v677 = vpop.permute.xlu0 %676
      %678 = vrot.lane.b32.xlu0 %v637, 16
      %v679 = vpop.permute.xlu0 %678
      %680 = vrot.lane.b32.xlu0 %v649, 16
      %v681 = vpop.permute.xlu0 %680
      %vm713 = vcmask 1046528
      %v714 = vrot.slane 0, 1
      %v715 = vsel %vm713, %v714, %v714
      %v716 = vrot.slane %v429, 1
      %v717 = vrot.slane %v445, 1
      %v718 = vsel %vm713, %v716, %v717
      %v719 = vrot.slane %v430, 1
      %v720 = vrot.slane %v446, 1
      %v721 = vsel %vm713, %v719, %v720
      %v722 = vrot.slane %v431, 1
      %v723 = vrot.slane %v447, 1
      %v724 = vsel %vm713, %v722, %v723
      %v725 = vrot.slane %v432, 1
      %v726 = vrot.slane %v448, 1
      %v727 = vsel %vm713, %v725, %v726
      %v728 = vrot.slane %v433, 1
      %v729 = vrot.slane %v449, 1
      %v730 = vsel %vm713, %v728, %v729
      %v731 = vrot.slane %v434, 1
      %v732 = vrot.slane %v450, 1
      %v733 = vsel %vm713, %v731, %v732
      %v734 = vrot.slane %v435, 1
      %v735 = vrot.slane %v451, 1
      %v736 = vsel %vm713, %v734, %v735
      %v737 = vrot.slane %v436, 1
      %v738 = vrot.slane %v452, 1
      %v739 = vsel %vm713, %v737, %v738
      %v740 = vrot.slane %v437, 1
      %v741 = vrot.slane %v453, 1
      %v742 = vsel %vm713, %v740, %v741
      %v743 = vrot.slane %v438, 1
      %v744 = vrot.slane %v454, 1
      %v745 = vsel %vm713, %v743, %v744
      %v746 = vrot.slane %v439, 1
      %v747 = vrot.slane %v455, 1
      %v748 = vsel %vm713, %v746, %v747
      %v749 = vrot.slane %v440, 1
      %v750 = vrot.slane %v456, 1
      %v751 = vsel %vm713, %v749, %v750
      %v752 = vrot.slane %v441, 1
      %v753 = vrot.slane %v457, 1
      %v754 = vsel %vm713, %v752, %v753
      %v755 = vrot.slane %v442, 1
      %v756 = vrot.slane %v458, 1
      %v757 = vsel %vm713, %v755, %v756
      %v758 = vrot.slane %v443, 1
      %v759 = vrot.slane %v459, 1
      %v760 = vsel %vm713, %v758, %v759
      %761 = vrot.lane.b32.xlu0 %v715, 32
      %v762 = vpop.permute.xlu0 %761
      %763 = vrot.lane.b32.xlu0 %v718, 32
      %v764 = vpop.permute.xlu0 %763
      %765 = vrot.lane.b32.xlu0 %v721, 32
      %v766 = vpop.permute.xlu0 %765
      %767 = vrot.lane.b32.xlu0 %v724, 32
      %v768 = vpop.permute.xlu0 %767
      %769 = vrot.lane.b32.xlu0 %v727, 32
      %v770 = vpop.permute.xlu0 %769
      %771 = vrot.lane.b32.xlu0 %v730, 32
      %v772 = vpop.permute.xlu0 %771
      %773 = vrot.lane.b32.xlu0 %v733, 32
      %v774 = vpop.permute.xlu0 %773
      %775 = vrot.lane.b32.xlu0 %v736, 32
      %v776 = vpop.permute.xlu0 %775
      %777 = vrot.lane.b32.xlu0 %v739, 32
      %v778 = vpop.permute.xlu0 %777
      %779 = vrot.lane.b32.xlu0 %v742, 32
      %v780 = vpop.permute.xlu0 %779
      %781 = vrot.lane.b32.xlu0 %v745, 32
      %v782 = vpop.permute.xlu0 %781
      %783 = vrot.lane.b32.xlu0 %v748, 32
      %v784 = vpop.permute.xlu0 %783
      %785 = vrot.lane.b32.xlu0 %v751, 32
      %v786 = vpop.permute.xlu0 %785
      %787 = vrot.lane.b32.xlu0 %v754, 32
      %v788 = vpop.permute.xlu0 %787
      %789 = vrot.lane.b32.xlu0 %v757, 32
      %v790 = vpop.permute.xlu0 %789
      %791 = vrot.lane.b32.xlu0 %v760, 32
      %v792 = vpop.permute.xlu0 %791
      %vm793 = vcmask 130048
      %v795 = vsel %vm793, 0, %v651
      %v797 = vsel %vm793, %v429, %v653
      %v799 = vsel %vm793, %v430, %v655
      %v801 = vsel %vm793, %v431, %v657
      %v803 = vsel %vm793, %v432, %v659
      %v805 = vsel %vm793, %v433, %v661
      %v807 = vsel %vm793, %v434, %v663
      %v809 = vsel %vm793, %v435, %v665
      %v811 = vsel %vm793, %v436, %v667
      %v813 = vsel %vm793, %v437, %v669
      %v815 = vsel %vm793, %v438, %v671
      %v817 = vsel %vm793, %v439, %v673
      %v819 = vsel %vm793, %v440, %v675
      %v821 = vsel %vm793, %v441, %v677
      %v823 = vsel %vm793, %v442, %v679
      %v825 = vsel %vm793, %v443, %v681
      %vm826 = vcmask 261120
      %v828 = vsel %vm826, %v795, %v762
      %v830 = vsel %vm826, %v797, %v764
      %v832 = vsel %vm826, %v799, %v766
      %v834 = vsel %vm826, %v801, %v768
      %v836 = vsel %vm826, %v803, %v770
      %v838 = vsel %vm826, %v805, %v772
      %v840 = vsel %vm826, %v807, %v774
      %v842 = vsel %vm826, %v809, %v776
      %v844 = vsel %vm826, %v811, %v778
      %v846 = vsel %vm826, %v813, %v780
      %v848 = vsel %vm826, %v815, %v782
      %v850 = vsel %vm826, %v817, %v784
      %v852 = vsel %vm826, %v819, %v786
      %v854 = vsel %vm826, %v821, %v788
      %v856 = vsel %vm826, %v823, %v790
      %v858 = vsel %vm826, %v825, %v792
      %v860 = vshrl.u32 %v444, 16
      %v862 = vshll.u32 %v444, 16
      %v864 = vrot.slane %v862, 1
      %v865 = vor.u32 %v860, %v864
      %v867 = vshll.u32 %v460, 16
      %v869 = vrot.slane %v867, 1
      %v870 = vsel %vm461, %v865, %v869
      %871 = vrot.lane.b32.xlu0 %v870, 16
      %v872 = vpop.permute.xlu0 %871
      %v875 = vrot.slane %v444, 1
      %v876 = vrot.slane %v460, 1
      %v877 = vsel %vm713, %v875, %v876
      %878 = vrot.lane.b32.xlu0 %v877, 32
      %v879 = vpop.permute.xlu0 %878
      %v881 = vsel %vm793, %v444, %v872
      %v883 = vsel %vm826, %v881, %v879
      %v890 = vunpack.c.l.b16 %v270
      %v891 = vunpack.c.l.b16 %v271
      %v892 = vunpack.c.l.b16 %v272
      %v893 = vunpack.c.l.b16 %v273
      %v894 = vunpack.c.l.b16 %v274
      %v895 = vunpack.c.l.b16 %v275
      %v896 = vpack.c.b16 %v891, %v890
      %v897 = vpack.c.b16 %v893, %v892
      %v898 = vpack.c.b16 %v895, %v894
      %vm902 = vcmask 392192
      %v903 = vsel %vm902, %v830, 0
      %v905 = vsel %vm902, %v832, 0
      %v907 = vsel %vm902, %v834, 0
      %v909 = vsel %vm902, %v836, 0
      %v911 = vsel %vm902, %v838, 0
      %v913 = vsel %vm902, %v840, 0
      %v915 = vsel %vm902, %v842, 0
      %v917 = vsel %vm902, %v844, 0
      %v919 = vsel %vm902, %v846, 0
      %v921 = vsel %vm902, %v848, 0
      %v923 = vsel %vm902, %v850, 0
      %v925 = vsel %vm902, %v852, 0
      %v927 = vsel %vm902, %v854, 0
      %v929 = vsel %vm902, %v856, 0
      %v931 = vsel %vm902, %v858, 0
      %v933 = vsel %vm902, %v883, 0
      %935 = vmatprep.subr.bf16.mxu0 0
      %936 = vmatpush1.bf16.msra.mxu0 0
      %937 = vmatprep.subr.bf16.mxu0 0
      %938 = vmatpush1.bf16.msra.mxu0 0
      %939 = vmatprep.subr.bf16.mxu0 0
      %940 = vmatpush1.bf16.msra.mxu0 0
      %941 = vmatprep.subr.bf16.mxu0 0
      %942 = vmatpush1.bf16.msra.mxu0 0
      %943 = vmatprep.subr.bf16.mxu0 0
      %944 = vmatpush1.bf16.msra.mxu0 0
      %945 = vmatprep.subr.bf16.mxu0 0
      %946 = vmatpush1.bf16.msra.mxu0 %v898
      %947 = vmatprep.subr.bf16.mxu0 0
      %948 = vmatpush1.bf16.msra.mxu0 %v897
      %949 = vmatprep.subr.bf16.mxu0 0
      %950 = vmatpush1.bf16.msra.mxu0 %v896
      %951 = vmatprep.subr.bf16.mxu0 0
      %952 = vmatpush2.bf16.msra.mxu0 0
      %953 = vmatprep.subr.bf16.mxu0 0
      %954 = vmatpush2.bf16.msra.mxu0 0
      %955 = vmatprep.subr.bf16.mxu0 0
      %956 = vmatpush2.bf16.msra.mxu0 0
      %957 = vmatprep.subr.bf16.mxu0 0
      %958 = vmatpush2.bf16.msra.mxu0 0
      %959 = vmatprep.subr.bf16.mxu0 0
      %960 = vmatpush2.bf16.msra.mxu0 0
      %961 = vmatprep.subr.bf16.mxu0 0
      %962 = vmatpush2.bf16.msra.mxu0 0
      %963 = vmatprep.subr.bf16.mxu0 0
      %964 = vmatpush2.bf16.msra.mxu0 0
      %965 = vmatprep.subr.bf16.mxu0 0
      %966 = vmatpush2.bf16.msra.mxu0 0
      %967 = vmatprep.mubr.bf16.mxu0 0
      %968 = vmatmul.mubr.bf16.gmra.mxu0 %v903
      %v969 = vpop.f32.mrf.mxu0
      %v970 = vadd.f32 0.0, %v969
      %v971 = vpop.f32.mrf.mxu0
      %v972 = vpop.f32.mrf.mxu0
      %v973 = vadd.f32 0.0, %v972
      %v974 = vpop.f32.mrf.mxu0
      %975 = vmatprep.mubr.bf16.mxu0 0
      %976 = vmatmul.mubr.bf16.gmra.mxu0 %v905
      %v977 = vpop.f32.mrf.mxu0
      %v978 = vadd.f32 0.0, %v977
      %v979 = vpop.f32.mrf.mxu0
      %v980 = vpop.f32.mrf.mxu0
      %v981 = vadd.f32 0.0, %v980
      %v982 = vpop.f32.mrf.mxu0
      %983 = vmatprep.mubr.bf16.mxu0 0
      %984 = vmatmul.mubr.bf16.gmra.mxu0 %v907
      %v985 = vpop.f32.mrf.mxu0
      %v986 = vadd.f32 0.0, %v985
      %v987 = vpop.f32.mrf.mxu0
      %v988 = vpop.f32.mrf.mxu0
      %v989 = vadd.f32 0.0, %v988
      %v990 = vpop.f32.mrf.mxu0
      %991 = vmatprep.mubr.bf16.mxu0 0
      %992 = vmatmul.mubr.bf16.gmra.mxu0 %v909
      %v993 = vpop.f32.mrf.mxu0
      %v994 = vadd.f32 0.0, %v993
      %v995 = vpop.f32.mrf.mxu0
      %v996 = vpop.f32.mrf.mxu0
      %v997 = vadd.f32 0.0, %v996
      %v998 = vpop.f32.mrf.mxu0
      %999 = vmatprep.mubr.bf16.mxu0 0
      %1000 = vmatmul.mubr.bf16.gmra.mxu0 %v911
      %v1001 = vpop.f32.mrf.mxu0
      %v1002 = vadd.f32 0.0, %v1001
      %v1003 = vpop.f32.mrf.mxu0
      %v1004 = vpop.f32.mrf.mxu0
      %v1005 = vadd.f32 0.0, %v1004
      %v1006 = vpop.f32.mrf.mxu0
      %1007 = vmatprep.mubr.bf16.mxu0 0
      %1008 = vmatmul.mubr.bf16.gmra.mxu0 %v913
      %v1009 = vpop.f32.mrf.mxu0
      %v1010 = vadd.f32 0.0, %v1009
      %v1011 = vpop.f32.mrf.mxu0
      %v1012 = vpop.f32.mrf.mxu0
      %v1013 = vadd.f32 0.0, %v1012
      %v1014 = vpop.f32.mrf.mxu0
      %1015 = vmatprep.mubr.bf16.mxu0 0
      %1016 = vmatmul.mubr.bf16.gmra.mxu0 %v915
      %v1017 = vpop.f32.mrf.mxu0
      %v1018 = vadd.f32 0.0, %v1017
      %v1019 = vpop.f32.mrf.mxu0
      %v1020 = vpop.f32.mrf.mxu0
      %v1021 = vadd.f32 0.0, %v1020
      %v1022 = vpop.f32.mrf.mxu0
      %1023 = vmatprep.mubr.bf16.mxu0 0
      %1024 = vmatmul.mubr.bf16.gmra.mxu0 %v917
      %v1025 = vpop.f32.mrf.mxu0
      %v1026 = vadd.f32 0.0, %v1025
      %v1027 = vpop.f32.mrf.mxu0
      %v1028 = vpop.f32.mrf.mxu0
      %v1029 = vadd.f32 0.0, %v1028
      %v1030 = vpop.f32.mrf.mxu0
      %1031 = vmatprep.mubr.bf16.mxu0 0
      %1032 = vmatmul.mubr.bf16.gmra.mxu0 %v919
      %v1033 = vpop.f32.mrf.mxu0
      %v1034 = vadd.f32 0.0, %v1033
      %v1035 = vpop.f32.mrf.mxu0
      %v1036 = vpop.f32.mrf.mxu0
      %v1037 = vadd.f32 0.0, %v1036
      %v1038 = vpop.f32.mrf.mxu0
      %1039 = vmatprep.mubr.bf16.mxu0 0
      %1040 = vmatmul.mubr.bf16.gmra.mxu0 %v921
      %v1041 = vpop.f32.mrf.mxu0
      %v1042 = vadd.f32 0.0, %v1041
      %v1043 = vpop.f32.mrf.mxu0
      %v1044 = vpop.f32.mrf.mxu0
      %v1045 = vadd.f32 0.0, %v1044
      %v1046 = vpop.f32.mrf.mxu0
      %1047 = vmatprep.mubr.bf16.mxu0 0
      %1048 = vmatmul.mubr.bf16.gmra.mxu0 %v923
      %v1049 = vpop.f32.mrf.mxu0
      %v1050 = vadd.f32 0.0, %v1049
      %v1051 = vpop.f32.mrf.mxu0
      %v1052 = vpop.f32.mrf.mxu0
      %v1053 = vadd.f32 0.0, %v1052
      %v1054 = vpop.f32.mrf.mxu0
      %1055 = vmatprep.mubr.bf16.mxu0 0
      %1056 = vmatmul.mubr.bf16.gmra.mxu0 %v925
      %v1057 = vpop.f32.mrf.mxu0
      %v1058 = vadd.f32 0.0, %v1057
      %v1059 = vpop.f32.mrf.mxu0
      %v1060 = vpop.f32.mrf.mxu0
      %v1061 = vadd.f32 0.0, %v1060
      %v1062 = vpop.f32.mrf.mxu0
      %1063 = vmatprep.mubr.bf16.mxu0 0
      %1064 = vmatmul.mubr.bf16.gmra.mxu0 %v927
      %v1065 = vpop.f32.mrf.mxu0
      %v1066 = vadd.f32 0.0, %v1065
      %v1067 = vpop.f32.mrf.mxu0
      %v1068 = vpop.f32.mrf.mxu0
      %v1069 = vadd.f32 0.0, %v1068
      %v1070 = vpop.f32.mrf.mxu0
      %1071 = vmatprep.mubr.bf16.mxu0 0
      %1072 = vmatmul.mubr.bf16.gmra.mxu0 %v929
      %v1073 = vpop.f32.mrf.mxu0
      %v1074 = vadd.f32 0.0, %v1073
      %v1075 = vpop.f32.mrf.mxu0
      %v1076 = vpop.f32.mrf.mxu0
      %v1077 = vadd.f32 0.0, %v1076
      %v1078 = vpop.f32.mrf.mxu0
      %1079 = vmatprep.mubr.bf16.mxu0 0
      %1080 = vmatmul.mubr.bf16.gmra.mxu0 %v931
      %v1081 = vpop.f32.mrf.mxu0
      %v1082 = vadd.f32 0.0, %v1081
      %v1083 = vpop.f32.mrf.mxu0
      %v1084 = vpop.f32.mrf.mxu0
      %v1085 = vadd.f32 0.0, %v1084
      %v1086 = vpop.f32.mrf.mxu0
      %1087 = vmatprep.mubr.bf16.mxu0 0
      %1088 = vmatmul.mubr.bf16.gmra.mxu0 %v933
      %v1089 = vpop.f32.mrf.mxu0
      %v1090 = vadd.f32 0.0, %v1089
      %v1091 = vpop.f32.mrf.mxu0
      %v1092 = vpop.f32.mrf.mxu0
      %v1093 = vadd.f32 0.0, %v1092
      %v1094 = vpop.f32.mrf.mxu0
      %1095 = vdwg.mxu0
      %v1102 = vunpack.c.l.b16 %v264
      %v1103 = vunpack.c.l.b16 %v265
      %v1104 = vunpack.c.l.b16 %v266
      %v1105 = vunpack.c.l.b16 %v267
      %v1106 = vunpack.c.l.b16 %v268
      %v1107 = vunpack.c.l.b16 %v269
      %v1108 = vpack.c.b16 %v1103, %v1102
      %v1109 = vpack.c.b16 %v1105, %v1104
      %v1110 = vpack.c.b16 %v1107, %v1106
      %v1114 = vsel %vm902, %v828, 0
      %1116 = vmatprep.subr.bf16.mxu0 0
      %1117 = vmatpush1.bf16.msra.mxu0 0
      %1118 = vmatprep.subr.bf16.mxu0 0
      %1119 = vmatpush1.bf16.msra.mxu0 0
      %1120 = vmatprep.subr.bf16.mxu0 0
      %1121 = vmatpush1.bf16.msra.mxu0 0
      %1122 = vmatprep.subr.bf16.mxu0 0
      %1123 = vmatpush1.bf16.msra.mxu0 0
      %1124 = vmatprep.subr.bf16.mxu0 0
      %1125 = vmatpush1.bf16.msra.mxu0 0
      %1126 = vmatprep.subr.bf16.mxu0 0
      %1127 = vmatpush1.bf16.msra.mxu0 %v1110
      %1128 = vmatprep.subr.bf16.mxu0 0
      %1129 = vmatpush1.bf16.msra.mxu0 %v1109
      %1130 = vmatprep.subr.bf16.mxu0 0
      %1131 = vmatpush1.bf16.msra.mxu0 %v1108
      %1132 = vmatprep.subr.bf16.mxu0 0
      %1133 = vmatpush2.bf16.msra.mxu0 0
      %1134 = vmatprep.subr.bf16.mxu0 0
      %1135 = vmatpush2.bf16.msra.mxu0 0
      %1136 = vmatprep.subr.bf16.mxu0 0
      %1137 = vmatpush2.bf16.msra.mxu0 0
      %1138 = vmatprep.subr.bf16.mxu0 0
      %1139 = vmatpush2.bf16.msra.mxu0 0
      %1140 = vmatprep.subr.bf16.mxu0 0
      %1141 = vmatpush2.bf16.msra.mxu0 0
      %1142 = vmatprep.subr.bf16.mxu0 0
      %1143 = vmatpush2.bf16.msra.mxu0 0
      %1144 = vmatprep.subr.bf16.mxu0 0
      %1145 = vmatpush2.bf16.msra.mxu0 0
      %1146 = vmatprep.subr.bf16.mxu0 0
      %1147 = vmatpush2.bf16.msra.mxu0 0
      %1148 = vmatprep.mubr.bf16.mxu0 0
      %1149 = vmatmul.mubr.bf16.gmra.mxu0 %v1114
      %v1150 = vpop.f32.mrf.mxu0
      %v1151 = vadd.f32 %v970, %v1150
      %v1152 = vpop.f32.mrf.mxu0
      %v1153 = vpop.f32.mrf.mxu0
      %v1154 = vadd.f32 %v973, %v1153
      %v1155 = vpop.f32.mrf.mxu0
      %1156 = vmatprep.mubr.bf16.mxu0 0
      %1157 = vmatmul.mubr.bf16.gmra.mxu0 %v903
      %v1158 = vpop.f32.mrf.mxu0
      %v1159 = vadd.f32 %v978, %v1158
      %v1160 = vpop.f32.mrf.mxu0
      %v1161 = vpop.f32.mrf.mxu0
      %v1162 = vadd.f32 %v981, %v1161
      %v1163 = vpop.f32.mrf.mxu0
      %1164 = vmatprep.mubr.bf16.mxu0 0
      %1165 = vmatmul.mubr.bf16.gmra.mxu0 %v905
      %v1166 = vpop.f32.mrf.mxu0
      %v1167 = vadd.f32 %v986, %v1166
      %v1168 = vpop.f32.mrf.mxu0
      %v1169 = vpop.f32.mrf.mxu0
      %v1170 = vadd.f32 %v989, %v1169
      %v1171 = vpop.f32.mrf.mxu0
      %1172 = vmatprep.mubr.bf16.mxu0 0
      %1173 = vmatmul.mubr.bf16.gmra.mxu0 %v907
      %v1174 = vpop.f32.mrf.mxu0
      %v1175 = vadd.f32 %v994, %v1174
      %v1176 = vpop.f32.mrf.mxu0
      %v1177 = vpop.f32.mrf.mxu0
      %v1178 = vadd.f32 %v997, %v1177
      %v1179 = vpop.f32.mrf.mxu0
      %1180 = vmatprep.mubr.bf16.mxu0 0
      %1181 = vmatmul.mubr.bf16.gmra.mxu0 %v909
      %v1182 = vpop.f32.mrf.mxu0
      %v1183 = vadd.f32 %v1002, %v1182
      %v1184 = vpop.f32.mrf.mxu0
      %v1185 = vpop.f32.mrf.mxu0
      %v1186 = vadd.f32 %v1005, %v1185
      %v1187 = vpop.f32.mrf.mxu0
      %1188 = vmatprep.mubr.bf16.mxu0 0
      %1189 = vmatmul.mubr.bf16.gmra.mxu0 %v911
      %v1190 = vpop.f32.mrf.mxu0
      %v1191 = vadd.f32 %v1010, %v1190
      %v1192 = vpop.f32.mrf.mxu0
      %v1193 = vpop.f32.mrf.mxu0
      %v1194 = vadd.f32 %v1013, %v1193
      %v1195 = vpop.f32.mrf.mxu0
      %1196 = vmatprep.mubr.bf16.mxu0 0
      %1197 = vmatmul.mubr.bf16.gmra.mxu0 %v913
      %v1198 = vpop.f32.mrf.mxu0
      %v1199 = vadd.f32 %v1018, %v1198
      %v1200 = vpop.f32.mrf.mxu0
      %v1201 = vpop.f32.mrf.mxu0
      %v1202 = vadd.f32 %v1021, %v1201
      %v1203 = vpop.f32.mrf.mxu0
      %1204 = vmatprep.mubr.bf16.mxu0 0
      %1205 = vmatmul.mubr.bf16.gmra.mxu0 %v915
      %v1206 = vpop.f32.mrf.mxu0
      %v1207 = vadd.f32 %v1026, %v1206
      %v1208 = vpop.f32.mrf.mxu0
      %v1209 = vpop.f32.mrf.mxu0
      %v1210 = vadd.f32 %v1029, %v1209
      %v1211 = vpop.f32.mrf.mxu0
      %1212 = vmatprep.mubr.bf16.mxu0 0
      %1213 = vmatmul.mubr.bf16.gmra.mxu0 %v917
      %v1214 = vpop.f32.mrf.mxu0
      %v1215 = vadd.f32 %v1034, %v1214
      %v1216 = vpop.f32.mrf.mxu0
      %v1217 = vpop.f32.mrf.mxu0
      %v1218 = vadd.f32 %v1037, %v1217
      %v1219 = vpop.f32.mrf.mxu0
      %1220 = vmatprep.mubr.bf16.mxu0 0
      %1221 = vmatmul.mubr.bf16.gmra.mxu0 %v919
      %v1222 = vpop.f32.mrf.mxu0
      %v1223 = vadd.f32 %v1042, %v1222
      %v1224 = vpop.f32.mrf.mxu0
      %v1225 = vpop.f32.mrf.mxu0
      %v1226 = vadd.f32 %v1045, %v1225
      %v1227 = vpop.f32.mrf.mxu0
      %1228 = vmatprep.mubr.bf16.mxu0 0
      %1229 = vmatmul.mubr.bf16.gmra.mxu0 %v921
      %v1230 = vpop.f32.mrf.mxu0
      %v1231 = vadd.f32 %v1050, %v1230
      %v1232 = vpop.f32.mrf.mxu0
      %v1233 = vpop.f32.mrf.mxu0
      %v1234 = vadd.f32 %v1053, %v1233
      %v1235 = vpop.f32.mrf.mxu0
      %1236 = vmatprep.mubr.bf16.mxu0 0
      %1237 = vmatmul.mubr.bf16.gmra.mxu0 %v923
      %v1238 = vpop.f32.mrf.mxu0
      %v1239 = vadd.f32 %v1058, %v1238
      %v1240 = vpop.f32.mrf.mxu0
      %v1241 = vpop.f32.mrf.mxu0
      %v1242 = vadd.f32 %v1061, %v1241
      %v1243 = vpop.f32.mrf.mxu0
      %1244 = vmatprep.mubr.bf16.mxu0 0
      %1245 = vmatmul.mubr.bf16.gmra.mxu0 %v925
      %v1246 = vpop.f32.mrf.mxu0
      %v1247 = vadd.f32 %v1066, %v1246
      %v1248 = vpop.f32.mrf.mxu0
      %v1249 = vpop.f32.mrf.mxu0
      %v1250 = vadd.f32 %v1069, %v1249
      %v1251 = vpop.f32.mrf.mxu0
      %1252 = vmatprep.mubr.bf16.mxu0 0
      %1253 = vmatmul.mubr.bf16.gmra.mxu0 %v927
      %v1254 = vpop.f32.mrf.mxu0
      %v1255 = vadd.f32 %v1074, %v1254
      %v1256 = vpop.f32.mrf.mxu0
      %v1257 = vpop.f32.mrf.mxu0
      %v1258 = vadd.f32 %v1077, %v1257
      %v1259 = vpop.f32.mrf.mxu0
      %1260 = vmatprep.mubr.bf16.mxu0 0
      %1261 = vmatmul.mubr.bf16.gmra.mxu0 %v929
      %v1262 = vpop.f32.mrf.mxu0
      %v1263 = vadd.f32 %v1082, %v1262
      %v1264 = vpop.f32.mrf.mxu0
      %v1265 = vpop.f32.mrf.mxu0
      %v1266 = vadd.f32 %v1085, %v1265
      %v1267 = vpop.f32.mrf.mxu0
      %1268 = vmatprep.mubr.bf16.mxu0 0
      %1269 = vmatmul.mubr.bf16.gmra.mxu0 %v931
      %v1270 = vpop.f32.mrf.mxu0
      %v1271 = vadd.f32 %v1090, %v1270
      %v1272 = vpop.f32.mrf.mxu0
      %v1273 = vpop.f32.mrf.mxu0
      %v1274 = vadd.f32 %v1093, %v1273
      %v1275 = vpop.f32.mrf.mxu0
      %1276 = vdwg.mxu0
      %v1283 = vunpack.c.l.b16 %v276
      %v1284 = vunpack.c.l.b16 %v277
      %v1285 = vunpack.c.l.b16 %v278
      %v1286 = vunpack.c.l.b16 %v279
      %v1287 = vunpack.c.l.b16 %v280
      %v1288 = vunpack.c.l.b16 %v281
      %v1289 = vpack.c.b16 %v1284, %v1283
      %v1290 = vpack.c.b16 %v1286, %v1285
      %v1291 = vpack.c.b16 %v1288, %v1287
      %1295 = vmatprep.subr.bf16.mxu0 0
      %1296 = vmatpush1.bf16.msra.mxu0 0
      %1297 = vmatprep.subr.bf16.mxu0 0
      %1298 = vmatpush1.bf16.msra.mxu0 0
      %1299 = vmatprep.subr.bf16.mxu0 0
      %1300 = vmatpush1.bf16.msra.mxu0 0
      %1301 = vmatprep.subr.bf16.mxu0 0
      %1302 = vmatpush1.bf16.msra.mxu0 0
      %1303 = vmatprep.subr.bf16.mxu0 0
      %1304 = vmatpush1.bf16.msra.mxu0 0
      %1305 = vmatprep.subr.bf16.mxu0 0
      %1306 = vmatpush1.bf16.msra.mxu0 %v1291
      %1307 = vmatprep.subr.bf16.mxu0 0
      %1308 = vmatpush1.bf16.msra.mxu0 %v1290
      %1309 = vmatprep.subr.bf16.mxu0 0
      %1310 = vmatpush1.bf16.msra.mxu0 %v1289
      %1311 = vmatprep.subr.bf16.mxu0 0
      %1312 = vmatpush2.bf16.msra.mxu0 0
      %1313 = vmatprep.subr.bf16.mxu0 0
      %1314 = vmatpush2.bf16.msra.mxu0 0
      %1315 = vmatprep.subr.bf16.mxu0 0
      %1316 = vmatpush2.bf16.msra.mxu0 0
      %1317 = vmatprep.subr.bf16.mxu0 0
      %1318 = vmatpush2.bf16.msra.mxu0 0
      %1319 = vmatprep.subr.bf16.mxu0 0
      %1320 = vmatpush2.bf16.msra.mxu0 0
      %1321 = vmatprep.subr.bf16.mxu0 0
      %1322 = vmatpush2.bf16.msra.mxu0 0
      %1323 = vmatprep.subr.bf16.mxu0 0
      %1324 = vmatpush2.bf16.msra.mxu0 0
      %1325 = vmatprep.subr.bf16.mxu0 0
      %1326 = vmatpush2.bf16.msra.mxu0 0
      %1327 = vmatprep.mubr.bf16.mxu0 0
      %1328 = vmatmul.mubr.bf16.gmra.mxu0 %v905
      %v1329 = vpop.f32.mrf.mxu0
      %v1330 = vadd.f32 0.0, %v1329
      %v1331 = vpop.f32.mrf.mxu0
      %v1332 = vpop.f32.mrf.mxu0
      %v1333 = vadd.f32 0.0, %v1332
      %v1334 = vpop.f32.mrf.mxu0
      %1335 = vmatprep.mubr.bf16.mxu0 0
      %1336 = vmatmul.mubr.bf16.gmra.mxu0 %v907
      %v1337 = vpop.f32.mrf.mxu0
      %v1338 = vadd.f32 0.0, %v1337
      %v1339 = vpop.f32.mrf.mxu0
      %v1340 = vpop.f32.mrf.mxu0
      %v1341 = vadd.f32 0.0, %v1340
      %v1342 = vpop.f32.mrf.mxu0
      %1343 = vmatprep.mubr.bf16.mxu0 0
      %1344 = vmatmul.mubr.bf16.gmra.mxu0 %v909
      %v1345 = vpop.f32.mrf.mxu0
      %v1346 = vadd.f32 0.0, %v1345
      %v1347 = vpop.f32.mrf.mxu0
      %v1348 = vpop.f32.mrf.mxu0
      %v1349 = vadd.f32 0.0, %v1348
      %v1350 = vpop.f32.mrf.mxu0
      %1351 = vmatprep.mubr.bf16.mxu0 0
      %1352 = vmatmul.mubr.bf16.gmra.mxu0 %v911
      %v1353 = vpop.f32.mrf.mxu0
      %v1354 = vadd.f32 0.0, %v1353
      %v1355 = vpop.f32.mrf.mxu0
      %v1356 = vpop.f32.mrf.mxu0
      %v1357 = vadd.f32 0.0, %v1356
      %v1358 = vpop.f32.mrf.mxu0
      %1359 = vmatprep.mubr.bf16.mxu0 0
      %1360 = vmatmul.mubr.bf16.gmra.mxu0 %v913
      %v1361 = vpop.f32.mrf.mxu0
      %v1362 = vadd.f32 0.0, %v1361
      %v1363 = vpop.f32.mrf.mxu0
      %v1364 = vpop.f32.mrf.mxu0
      %v1365 = vadd.f32 0.0, %v1364
      %v1366 = vpop.f32.mrf.mxu0
      %1367 = vmatprep.mubr.bf16.mxu0 0
      %1368 = vmatmul.mubr.bf16.gmra.mxu0 %v915
      %v1369 = vpop.f32.mrf.mxu0
      %v1370 = vadd.f32 0.0, %v1369
      %v1371 = vpop.f32.mrf.mxu0
      %v1372 = vpop.f32.mrf.mxu0
      %v1373 = vadd.f32 0.0, %v1372
      %v1374 = vpop.f32.mrf.mxu0
      %1375 = vmatprep.mubr.bf16.mxu0 0
      %1376 = vmatmul.mubr.bf16.gmra.mxu0 %v917
      %v1377 = vpop.f32.mrf.mxu0
      %v1378 = vadd.f32 0.0, %v1377
      %v1379 = vpop.f32.mrf.mxu0
      %v1380 = vpop.f32.mrf.mxu0
      %v1381 = vadd.f32 0.0, %v1380
      %v1382 = vpop.f32.mrf.mxu0
      %1383 = vmatprep.mubr.bf16.mxu0 0
      %1384 = vmatmul.mubr.bf16.gmra.mxu0 %v919
      %v1385 = vpop.f32.mrf.mxu0
      %v1386 = vadd.f32 0.0, %v1385
      %v1387 = vpop.f32.mrf.mxu0
      %v1388 = vpop.f32.mrf.mxu0
      %v1389 = vadd.f32 0.0, %v1388
      %v1390 = vpop.f32.mrf.mxu0
      %1391 = vmatprep.mubr.bf16.mxu0 0
      %1392 = vmatmul.mubr.bf16.gmra.mxu0 %v921
      %v1393 = vpop.f32.mrf.mxu0
      %v1394 = vadd.f32 0.0, %v1393
      %v1395 = vpop.f32.mrf.mxu0
      %v1396 = vpop.f32.mrf.mxu0
      %v1397 = vadd.f32 0.0, %v1396
      %v1398 = vpop.f32.mrf.mxu0
      %1399 = vmatprep.mubr.bf16.mxu0 0
      %1400 = vmatmul.mubr.bf16.gmra.mxu0 %v923
      %v1401 = vpop.f32.mrf.mxu0
      %v1402 = vadd.f32 0.0, %v1401
      %v1403 = vpop.f32.mrf.mxu0
      %v1404 = vpop.f32.mrf.mxu0
      %v1405 = vadd.f32 0.0, %v1404
      %v1406 = vpop.f32.mrf.mxu0
      %1407 = vmatprep.mubr.bf16.mxu0 0
      %1408 = vmatmul.mubr.bf16.gmra.mxu0 %v925
      %v1409 = vpop.f32.mrf.mxu0
      %v1410 = vadd.f32 0.0, %v1409
      %v1411 = vpop.f32.mrf.mxu0
      %v1412 = vpop.f32.mrf.mxu0
      %v1413 = vadd.f32 0.0, %v1412
      %v1414 = vpop.f32.mrf.mxu0
      %1415 = vmatprep.mubr.bf16.mxu0 0
      %1416 = vmatmul.mubr.bf16.gmra.mxu0 %v927
      %v1417 = vpop.f32.mrf.mxu0
      %v1418 = vadd.f32 0.0, %v1417
      %v1419 = vpop.f32.mrf.mxu0
      %v1420 = vpop.f32.mrf.mxu0
      %v1421 = vadd.f32 0.0, %v1420
      %v1422 = vpop.f32.mrf.mxu0
      %1423 = vmatprep.mubr.bf16.mxu0 0
      %1424 = vmatmul.mubr.bf16.gmra.mxu0 %v929
      %v1425 = vpop.f32.mrf.mxu0
      %v1426 = vadd.f32 0.0, %v1425
      %v1427 = vpop.f32.mrf.mxu0
      %v1428 = vpop.f32.mrf.mxu0
      %v1429 = vadd.f32 0.0, %v1428
      %v1430 = vpop.f32.mrf.mxu0
      %1431 = vmatprep.mubr.bf16.mxu0 0
      %1432 = vmatmul.mubr.bf16.gmra.mxu0 %v931
      %v1433 = vpop.f32.mrf.mxu0
      %v1434 = vadd.f32 0.0, %v1433
      %v1435 = vpop.f32.mrf.mxu0
      %v1436 = vpop.f32.mrf.mxu0
      %v1437 = vadd.f32 0.0, %v1436
      %v1438 = vpop.f32.mrf.mxu0
      %1439 = vmatprep.mubr.bf16.mxu0 0
      %1440 = vmatmul.mubr.bf16.gmra.mxu0 %v933
      %v1441 = vpop.f32.mrf.mxu0
      %v1442 = vadd.f32 0.0, %v1441
      %v1443 = vpop.f32.mrf.mxu0
      %v1444 = vpop.f32.mrf.mxu0
      %v1445 = vadd.f32 0.0, %v1444
      %v1446 = vpop.f32.mrf.mxu0
      %1447 = vmatprep.mubr.bf16.mxu0 0
      %1448 = vmatmul.mubr.bf16.gmra.mxu0 %v1114
      %v1449 = vpop.f32.mrf.mxu0
      %v1450 = vadd.f32 0.0, %v1449
      %v1451 = vpop.f32.mrf.mxu0
      %v1452 = vpop.f32.mrf.mxu0
      %v1453 = vadd.f32 0.0, %v1452
      %v1454 = vpop.f32.mrf.mxu0
      %1455 = vdwg.mxu0
      %v1456 = vadd.f32 %v1151, %v1330
      %v1457 = vadd.f32 %v1154, %v1333
      %v1458 = vadd.f32 %v1159, %v1338
      %v1459 = vadd.f32 %v1162, %v1341
      %v1460 = vadd.f32 %v1167, %v1346
      %v1461 = vadd.f32 %v1170, %v1349
      %v1462 = vadd.f32 %v1175, %v1354
      %v1463 = vadd.f32 %v1178, %v1357
      %v1464 = vadd.f32 %v1183, %v1362
      %v1465 = vadd.f32 %v1186, %v1365
      %v1466 = vadd.f32 %v1191, %v1370
      %v1467 = vadd.f32 %v1194, %v1373
      %v1468 = vadd.f32 %v1199, %v1378
      %v1469 = vadd.f32 %v1202, %v1381
      %v1470 = vadd.f32 %v1207, %v1386
      %v1471 = vadd.f32 %v1210, %v1389
      %v1472 = vadd.f32 %v1215, %v1394
      %v1473 = vadd.f32 %v1218, %v1397
      %v1474 = vadd.f32 %v1223, %v1402
      %v1475 = vadd.f32 %v1226, %v1405
      %v1476 = vadd.f32 %v1231, %v1410
      %v1477 = vadd.f32 %v1234, %v1413
      %v1478 = vadd.f32 %v1239, %v1418
      %v1479 = vadd.f32 %v1242, %v1421
      %v1480 = vadd.f32 %v1247, %v1426
      %v1481 = vadd.f32 %v1250, %v1429
      %v1482 = vadd.f32 %v1255, %v1434
      %v1483 = vadd.f32 %v1258, %v1437
      %v1484 = vadd.f32 %v1263, %v1442
      %v1485 = vadd.f32 %v1266, %v1445
      %v1486 = vadd.f32 %v1271, %v1450
      %v1487 = vadd.f32 %v1274, %v1453
      %v1488 = vpack.c.bf16 %v1457, %v1456
      %v1489 = vpack.c.bf16 %v1459, %v1458
      %v1490 = vpack.c.bf16 %v1461, %v1460
      %v1491 = vpack.c.bf16 %v1463, %v1462
      %v1492 = vpack.c.bf16 %v1465, %v1464
      %v1493 = vpack.c.bf16 %v1467, %v1466
      %v1494 = vpack.c.bf16 %v1469, %v1468
      %v1495 = vpack.c.bf16 %v1471, %v1470
      %v1496 = vpack.c.bf16 %v1473, %v1472
      %v1497 = vpack.c.bf16 %v1475, %v1474
      %v1498 = vpack.c.bf16 %v1477, %v1476
      %v1499 = vpack.c.bf16 %v1479, %v1478
      %v1500 = vpack.c.bf16 %v1481, %v1480
      %v1501 = vpack.c.bf16 %v1483, %v1482
      %v1502 = vpack.c.bf16 %v1485, %v1484
      %v1503 = vpack.c.bf16 %v1487, %v1486
      %v1520 = vunpack.c.l.b16 %v1488
      %v1521 = vunpack.c.h.b16 %v1488
      %v1522 = vunpack.c.l.b16 %v1489
      %v1523 = vunpack.c.h.b16 %v1489
      %v1524 = vunpack.c.l.b16 %v1490
      %v1525 = vunpack.c.h.b16 %v1490
      %v1526 = vunpack.c.l.b16 %v1491
      %v1527 = vunpack.c.h.b16 %v1491
      %v1528 = vunpack.c.l.b16 %v1492
      %v1529 = vunpack.c.h.b16 %v1492
      %v1530 = vunpack.c.l.b16 %v1493
      %v1531 = vunpack.c.h.b16 %v1493
      %v1532 = vunpack.c.l.b16 %v1494
      %v1533 = vunpack.c.h.b16 %v1494
      %v1534 = vunpack.c.l.b16 %v1495
      %v1535 = vunpack.c.h.b16 %v1495
      %v1536 = vunpack.c.l.b16 %v1496
      %v1537 = vunpack.c.h.b16 %v1496
      %v1538 = vunpack.c.l.b16 %v1497
      %v1539 = vunpack.c.h.b16 %v1497
      %v1540 = vunpack.c.l.b16 %v1498
      %v1541 = vunpack.c.h.b16 %v1498
      %v1542 = vunpack.c.l.b16 %v1499
      %v1543 = vunpack.c.h.b16 %v1499
      %v1544 = vunpack.c.l.b16 %v1500
      %v1545 = vunpack.c.h.b16 %v1500
      %v1546 = vunpack.c.l.b16 %v1501
      %v1547 = vunpack.c.h.b16 %v1501
      %v1548 = vunpack.c.l.b16 %v1502
      %v1549 = vunpack.c.h.b16 %v1502
      %v1550 = vunpack.c.l.b16 %v1503
      %v1551 = vunpack.c.h.b16 %v1503
      %v1552 = vpack.c.b16 %v1520, %v1520
      %v1553 = vpack.c.b16 %v1521, %v1521
      %v1554 = vpack.c.b16 %v1522, %v1522
      %v1555 = vpack.c.b16 %v1523, %v1523
      %v1556 = vpack.c.b16 %v1524, %v1524
      %v1557 = vpack.c.b16 %v1525, %v1525
      %v1558 = vpack.c.b16 %v1526, %v1526
      %v1559 = vpack.c.b16 %v1527, %v1527
      %v1560 = vpack.c.b16 %v1528, %v1528
      %v1561 = vpack.c.b16 %v1529, %v1529
      %v1562 = vpack.c.b16 %v1530, %v1530
      %v1563 = vpack.c.b16 %v1531, %v1531
      %v1564 = vpack.c.b16 %v1532, %v1532
      %v1565 = vpack.c.b16 %v1533, %v1533
      %v1566 = vpack.c.b16 %v1534, %v1534
      %v1567 = vpack.c.b16 %v1535, %v1535
      %v1568 = vpack.c.b16 %v1536, %v1536
      %v1569 = vpack.c.b16 %v1537, %v1537
      %v1570 = vpack.c.b16 %v1538, %v1538
      %v1571 = vpack.c.b16 %v1539, %v1539
      %v1572 = vpack.c.b16 %v1540, %v1540
      %v1573 = vpack.c.b16 %v1541, %v1541
      %v1574 = vpack.c.b16 %v1542, %v1542
      %v1575 = vpack.c.b16 %v1543, %v1543
      %v1576 = vpack.c.b16 %v1544, %v1544
      %v1577 = vpack.c.b16 %v1545, %v1545
      %v1578 = vpack.c.b16 %v1546, %v1546
      %v1579 = vpack.c.b16 %v1547, %v1547
      %v1580 = vpack.c.b16 %v1548, %v1548
      %v1581 = vpack.c.b16 %v1549, %v1549
      %v1582 = vpack.c.b16 %v1550, %v1550
      %v1583 = vpack.c.b16 %v1551, %v1551
      %vm1616 = vcmask 125952
      %1617 = vst.msk [vmem:[%s208] sm:$0xf] %vm1616, %v1552
      %1618 = vst.msk [vmem:[%s208 + $0x4] sm:$0xf] %vm1616, %v1553
      %1619 = vst.msk [vmem:[%s208 + $0x8] sm:$0xf] %vm1616, %v1554
      %1620 = vst.msk [vmem:[%s208 + $0xc] sm:$0xf] %vm1616, %v1555
      %1621 = vst.msk [vmem:[%s208 + $0x10] sm:$0xf] %vm1616, %v1556
      %1622 = vst.msk [vmem:[%s208 + $0x14] sm:$0xf] %vm1616, %v1557
      %1623 = vst.msk [vmem:[%s208 + $0x18] sm:$0xf] %vm1616, %v1558
      %1624 = vst.msk [vmem:[%s208 + $0x1c] sm:$0xf] %vm1616, %v1559
      %1625 = vst.msk [vmem:[%s208 + $0x20] sm:$0xf] %vm1616, %v1560
      %1626 = vst.msk [vmem:[%s208 + $0x24] sm:$0xf] %vm1616, %v1561
      %1627 = vst.msk [vmem:[%s208 + $0x28] sm:$0xf] %vm1616, %v1562
      %1628 = vst.msk [vmem:[%s208 + $0x2c] sm:$0xf] %vm1616, %v1563
      %1629 = vst.msk [vmem:[%s208 + $0x30] sm:$0xf] %vm1616, %v1564
      %1630 = vst.msk [vmem:[%s208 + $0x34] sm:$0xf] %vm1616, %v1565
      %1631 = vst.msk [vmem:[%s208 + $0x38] sm:$0xf] %vm1616, %v1566
      %1632 = vst.msk [vmem:[%s208 + $0x3c] sm:$0xf] %vm1616, %v1567
      %1633 = vst.msk [vmem:[%s208 + $0x40] sm:$0xf] %vm1616, %v1568
      %1634 = vst.msk [vmem:[%s208 + $0x44] sm:$0xf] %vm1616, %v1569
      %1635 = vst.msk [vmem:[%s208 + $0x48] sm:$0xf] %vm1616, %v1570
      %1636 = vst.msk [vmem:[%s208 + $0x4c] sm:$0xf] %vm1616, %v1571
      %1637 = vst.msk [vmem:[%s208 + $0x50] sm:$0xf] %vm1616, %v1572
      %1638 = vst.msk [vmem:[%s208 + $0x54] sm:$0xf] %vm1616, %v1573
      %1639 = vst.msk [vmem:[%s208 + $0x58] sm:$0xf] %vm1616, %v1574
      %1640 = vst.msk [vmem:[%s208 + $0x5c] sm:$0xf] %vm1616, %v1575
      %1641 = vst.msk [vmem:[%s208 + $0x60] sm:$0xf] %vm1616, %v1576
      %1642 = vst.msk [vmem:[%s208 + $0x64] sm:$0xf] %vm1616, %v1577
      %1643 = vst.msk [vmem:[%s208 + $0x68] sm:$0xf] %vm1616, %v1578
      %1644 = vst.msk [vmem:[%s208 + $0x6c] sm:$0xf] %vm1616, %v1579
      %1645 = vst.msk [vmem:[%s208 + $0x70] sm:$0xf] %vm1616, %v1580
      %1646 = vst.msk [vmem:[%s208 + $0x74] sm:$0xf] %vm1616, %v1581
      %1647 = vst.msk [vmem:[%s208 + $0x78] sm:$0xf] %vm1616, %v1582
      %1648 = vst.msk [vmem:[%s208 + $0x7c] sm:$0xf] %vm1616, %v1583
      %v1649 = vsel %vm793, %v1456, 0.0
      %v1650 = vsel %vm793, %v1457, 0.0
      %v1651 = vadd.f32 %v1649, %v1650
      %v1652 = vsel %vm793, %v1458, 0.0
      %v1653 = vadd.f32 %v1651, %v1652
      %v1654 = vsel %vm793, %v1459, 0.0
      %v1655 = vadd.f32 %v1653, %v1654
      %v1656 = vsel %vm793, %v1460, 0.0
      %v1657 = vadd.f32 %v1655, %v1656
      %v1658 = vsel %vm793, %v1461, 0.0
      %v1659 = vadd.f32 %v1657, %v1658
      %v1660 = vsel %vm793, %v1462, 0.0
      %v1661 = vadd.f32 %v1659, %v1660
      %v1662 = vsel %vm793, %v1463, 0.0
      %v1663 = vadd.f32 %v1661, %v1662
      %v1664 = vsel %vm793, %v1464, 0.0
      %v1665 = vadd.f32 %v1663, %v1664
      %v1666 = vsel %vm793, %v1465, 0.0
      %v1667 = vadd.f32 %v1665, %v1666
      %v1668 = vsel %vm793, %v1466, 0.0
      %v1669 = vadd.f32 %v1667, %v1668
      %v1670 = vsel %vm793, %v1467, 0.0
      %v1671 = vadd.f32 %v1669, %v1670
      %v1672 = vsel %vm793, %v1468, 0.0
      %v1673 = vadd.f32 %v1671, %v1672
      %v1674 = vsel %vm793, %v1469, 0.0
      %v1675 = vadd.f32 %v1673, %v1674
      %v1676 = vsel %vm793, %v1470, 0.0
      %v1677 = vadd.f32 %v1675, %v1676
      %v1678 = vsel %vm793, %v1471, 0.0
      %v1679 = vadd.f32 %v1677, %v1678
      %v1680 = vsel %vm793, %v1472, 0.0
      %v1681 = vadd.f32 %v1679, %v1680
      %v1682 = vsel %vm793, %v1473, 0.0
      %v1683 = vadd.f32 %v1681, %v1682
      %v1684 = vsel %vm793, %v1474, 0.0
      %v1685 = vadd.f32 %v1683, %v1684
      %v1686 = vsel %vm793, %v1475, 0.0
      %v1687 = vadd.f32 %v1685, %v1686
      %v1688 = vsel %vm793, %v1476, 0.0
      %v1689 = vadd.f32 %v1687, %v1688
      %v1690 = vsel %vm793, %v1477, 0.0
      %v1691 = vadd.f32 %v1689, %v1690
      %v1692 = vsel %vm793, %v1478, 0.0
      %v1693 = vadd.f32 %v1691, %v1692
      %v1694 = vsel %vm793, %v1479, 0.0
      %v1695 = vadd.f32 %v1693, %v1694
      %v1696 = vsel %vm793, %v1480, 0.0
      %v1697 = vadd.f32 %v1695, %v1696
      %v1698 = vsel %vm793, %v1481, 0.0
      %v1699 = vadd.f32 %v1697, %v1698
      %v1700 = vsel %vm793, %v1482, 0.0
      %v1701 = vadd.f32 %v1699, %v1700
      %v1702 = vsel %vm793, %v1483, 0.0
      %v1703 = vadd.f32 %v1701, %v1702
      %v1704 = vsel %vm793, %v1484, 0.0
      %v1705 = vadd.f32 %v1703, %v1704
      %v1706 = vsel %vm793, %v1485, 0.0
      %v1707 = vadd.f32 %v1705, %v1706
      %v1708 = vsel %vm793, %v1486, 0.0
      %v1709 = vadd.f32 %v1707, %v1708
      %v1710 = vsel %vm793, %v1487, 0.0
      %v1711 = vadd.f32 %v1709, %v1710
      %v1712 = vrot.slane %v1711, 4
      %v1713 = vadd.f32 %v1711, %v1712
      %v1714 = vrot.slane %v1713, 2
      %v1715 = vadd.f32 %v1713, %v1714
      %v1716 = vrot.slane %v1715, 1
      %v1717 = vadd.f32 %v1715, %v1716
      %vm1718 = vcmask 122880
      %1719 = vst.msk [vmem:[%s211] sm:$0x1] %vm1718, %v1717
      %v1720 = vmul.f32 %v1456, %v1456
      %v1721 = vmul.f32 %v1457, %v1457
      %v1722 = vmul.f32 %v1458, %v1458
      %v1723 = vmul.f32 %v1459, %v1459
      %v1724 = vmul.f32 %v1460, %v1460
      %v1725 = vmul.f32 %v1461, %v1461
      %v1726 = vmul.f32 %v1462, %v1462
      %v1727 = vmul.f32 %v1463, %v1463
      %v1728 = vmul.f32 %v1464, %v1464
      %v1729 = vmul.f32 %v1465, %v1465
      %v1730 = vmul.f32 %v1466, %v1466
      %v1731 = vmul.f32 %v1467, %v1467
      %v1732 = vmul.f32 %v1468, %v1468
      %v1733 = vmul.f32 %v1469, %v1469
      %v1734 = vmul.f32 %v1470, %v1470
      %v1735 = vmul.f32 %v1471, %v1471
      %v1736 = vmul.f32 %v1472, %v1472
      %v1737 = vmul.f32 %v1473, %v1473
      %v1738 = vmul.f32 %v1474, %v1474
      %v1739 = vmul.f32 %v1475, %v1475
      %v1740 = vmul.f32 %v1476, %v1476
      %v1741 = vmul.f32 %v1477, %v1477
      %v1742 = vmul.f32 %v1478, %v1478
      %v1743 = vmul.f32 %v1479, %v1479
      %v1744 = vmul.f32 %v1480, %v1480
      %v1745 = vmul.f32 %v1481, %v1481
      %v1746 = vmul.f32 %v1482, %v1482
      %v1747 = vmul.f32 %v1483, %v1483
      %v1748 = vmul.f32 %v1484, %v1484
      %v1749 = vmul.f32 %v1485, %v1485
      %v1750 = vmul.f32 %v1486, %v1486
      %v1751 = vmul.f32 %v1487, %v1487
      %v1752 = vsel %vm793, %v1720, 0.0
      %v1753 = vsel %vm793, %v1721, 0.0
      %v1754 = vadd.f32 %v1752, %v1753
      %v1755 = vsel %vm793, %v1722, 0.0
      %v1756 = vadd.f32 %v1754, %v1755
      %v1757 = vsel %vm793, %v1723, 0.0
      %v1758 = vadd.f32 %v1756, %v1757
      %v1759 = vsel %vm793, %v1724, 0.0
      %v1760 = vadd.f32 %v1758, %v1759
      %v1761 = vsel %vm793, %v1725, 0.0
      %v1762 = vadd.f32 %v1760, %v1761
      %v1763 = vsel %vm793, %v1726, 0.0
      %v1764 = vadd.f32 %v1762, %v1763
      %v1765 = vsel %vm793, %v1727, 0.0
      %v1766 = vadd.f32 %v1764, %v1765
      %v1767 = vsel %vm793, %v1728, 0.0
      %v1768 = vadd.f32 %v1766, %v1767
      %v1769 = vsel %vm793, %v1729, 0.0
      %v1770 = vadd.f32 %v1768, %v1769
      %v1771 = vsel %vm793, %v1730, 0.0
      %v1772 = vadd.f32 %v1770, %v1771
      %v1773 = vsel %vm793, %v1731, 0.0
      %v1774 = vadd.f32 %v1772, %v1773
      %v1775 = vsel %vm793, %v1732, 0.0
      %v1776 = vadd.f32 %v1774, %v1775
      %v1777 = vsel %vm793, %v1733, 0.0
      %v1778 = vadd.f32 %v1776, %v1777
      %v1779 = vsel %vm793, %v1734, 0.0
      %v1780 = vadd.f32 %v1778, %v1779
      %v1781 = vsel %vm793, %v1735, 0.0
      %v1782 = vadd.f32 %v1780, %v1781
      %v1783 = vsel %vm793, %v1736, 0.0
      %v1784 = vadd.f32 %v1782, %v1783
      %v1785 = vsel %vm793, %v1737, 0.0
      %v1786 = vadd.f32 %v1784, %v1785
      %v1787 = vsel %vm793, %v1738, 0.0
      %v1788 = vadd.f32 %v1786, %v1787
      %v1789 = vsel %vm793, %v1739, 0.0
      %v1790 = vadd.f32 %v1788, %v1789
      %v1791 = vsel %vm793, %v1740, 0.0
      %v1792 = vadd.f32 %v1790, %v1791
      %v1793 = vsel %vm793, %v1741, 0.0
      %v1794 = vadd.f32 %v1792, %v1793
      %v1795 = vsel %vm793, %v1742, 0.0
      %v1796 = vadd.f32 %v1794, %v1795
      %v1797 = vsel %vm793, %v1743, 0.0
      %v1798 = vadd.f32 %v1796, %v1797
      %v1799 = vsel %vm793, %v1744, 0.0
      %v1800 = vadd.f32 %v1798, %v1799
      %v1801 = vsel %vm793, %v1745, 0.0
      %v1802 = vadd.f32 %v1800, %v1801
      %v1803 = vsel %vm793, %v1746, 0.0
      %v1804 = vadd.f32 %v1802, %v1803
      %v1805 = vsel %vm793, %v1747, 0.0
      %v1806 = vadd.f32 %v1804, %v1805
      %v1807 = vsel %vm793, %v1748, 0.0
      %v1808 = vadd.f32 %v1806, %v1807
      %v1809 = vsel %vm793, %v1749, 0.0
      %v1810 = vadd.f32 %v1808, %v1809
      %v1811 = vsel %vm793, %v1750, 0.0
      %v1812 = vadd.f32 %v1810, %v1811
      %v1813 = vsel %vm793, %v1751, 0.0
      %v1814 = vadd.f32 %v1812, %v1813
      %v1815 = vrot.slane %v1814, 4
      %v1816 = vadd.f32 %v1814, %v1815
      %v1817 = vrot.slane %v1816, 2
      %v1818 = vadd.f32 %v1816, %v1817
      %v1819 = vrot.slane %v1818, 1
      %v1820 = vadd.f32 %v1818, %v1819
      %1821 = vst.msk [vmem:[%s214] sm:$0x1] %vm1718, %v1820
      %p1822 = scmp.lt.s32.totalorder %s16, 3
      %s1823 = scalar_select %p1822, %s16, 3
      %s1824 = smul.addr %s1823, 32
      %s1825 = smul.addr %s1824, 4
      %s1826 = scalar_lea.vmem %s2, %s1825
      %p1827 = scmp.lt.s32.totalorder %s16, 3
      %s1828 = scalar_select %p1827, %s16, 3
      %s1829 = scalar_lea.vmem %s3, %s1828
      %p1830 = scmp.lt.s32.totalorder %s16, 3
      %s1831 = scalar_select %p1830, %s16, 3
      %s1832 = scalar_lea.vmem %s4, %s1831
      // Predicated region
      $region29: #{resconv_forward.3} parent=27 // pred_check
        %p1833 = pneg %p81
      $region30: #{resconv_forward.3} parent=27 // pred_check_branch
        %1835 = sbr.rel (%p1833) target = $region32
      $region31: #{resconv_forward.3} parent=27 // pred_region
        _
      $region32: #{resconv_forward.3} parent=27 // pred_fallthru
        _
      // Predicated region
      $region33: #{resconv_forward.3} parent=27 // pred_check
        %p1836 = pneg %p107
      $region34: #{resconv_forward.3} parent=27 // pred_check_branch
        %1838 = sbr.rel (%p1836) target = $region36
      $region35: #{resconv_forward.3} parent=27 // pred_region
        _
      $region36: #{resconv_forward.3} parent=27 // pred_fallthru
        _
      // Predicated region
      $region37: #{resconv_forward.3} parent=27 // pred_check
        %p1839 = pneg %p133
      $region38: #{resconv_forward.3} parent=27 // pred_check_branch
        %1841 = sbr.rel (%p1839) target = $region40
      $region39: #{resconv_forward.3} parent=27 // pred_region
        _
      $region40: #{resconv_forward.3} parent=27 // pred_fallthru
        _
    $region28: #{resconv_forward.3} parent=5 // pred_fallthru
      _
    %p1842 = scmp.le.s32.totalorder 2, %s11
    // Predicated region
    $region41: #{resconv_forward.3} parent=5 // pred_check
      %p1843 = pneg %p1842
    $region42: #{resconv_forward.3} parent=5 // pred_check_branch
      %1845 = sbr.rel (%p1843) target = $region44
    $region43: #{resconv_forward.3} parent=5 // pred_region
      %s1846 = ssub.s32 %s11, 2
      // Predicated region
      $region45: #{resconv_forward.3} parent=43 // pred_check
        %p1847 = pneg %p87
      $region46: #{resconv_forward.3} parent=43 // pred_check_branch
        %1849 = sbr.rel (%p1847) target = $region48
      $region47: #{resconv_forward.3} parent=43 // pred_region
        %p1850 = scmp.lt.s32.totalorder %s17, 3
        %s1851 = scalar_select %p1850, %s17, 3
        %s1852 = smul.addr %s1851, 32
        %s1853 = smul.addr %s1852, 4
        %s1854 = scalar_lea.vmem %s2, %s1853
      $region48: #{resconv_forward.3} parent=43 // pred_fallthru
        _
      // Predicated region
      $region49: #{resconv_forward.3} parent=43 // pred_check
        %p1855 = pneg %p113
      $region50: #{resconv_forward.3} parent=43 // pred_check_branch
        %1857 = sbr.rel (%p1855) target = $region52
      $region51: #{resconv_forward.3} parent=43 // pred_region
        %p1858 = scmp.lt.s32.totalorder %s17, 3
        %s1859 = scalar_select %p1858, %s17, 3
        %s1860 = scalar_lea.vmem %s3, %s1859
      $region52: #{resconv_forward.3} parent=43 // pred_fallthru
        _
      // Predicated region
      $region53: #{resconv_forward.3} parent=43 // pred_check
        %p1861 = pneg %p139
      $region54: #{resconv_forward.3} parent=43 // pred_check_branch
        %1863 = sbr.rel (%p1861) target = $region56
      $region55: #{resconv_forward.3} parent=43 // pred_region
        %p1864 = scmp.lt.s32.totalorder %s17, 3
        %s1865 = scalar_select %p1864, %s17, 3
        %s1866 = scalar_lea.vmem %s4, %s1865
      $region56: #{resconv_forward.3} parent=43 // pred_fallthru
        _
    $region44: #{resconv_forward.3} parent=5 // pred_fallthru
      _
  $region6: #{resconv_forward.3} parent=0 // loop_footer
    %s15 = sadd.s32 1, %s11
  $region7: #{resconv_forward.3} parent=0 // loop_footer_branch
    %10 = sbr.rel target = $region3
  $region8: #{resconv_forward.3} parent=0 // loop_exit
    _

// kernel: resconv_forward.4
$region0: #{resconv_forward.4}
  #allocation0 [shape = 'u32[]', space=smem, size = 0x4, offset = 0x4, fixed_abs, tag = 'smem constant byte address 0x4 - core index']
  #allocation1 [shape = 'u32[144,128]{1,0:T(1,128)}', space=vmem, size = 0x12000, scoped, tag = 'internal scratch']
  %s0 = inlined_call_operand.vmem [shape: bf16[4,16,16,16], index: 0, kind: input, shape index: {}]
  %s1 = inlined_call_operand.vmem [shape: f32[1,16], index: 1, kind: input, shape index: {}]
  %s2 = inlined_call_operand.vmem [shape: f32[1,16], index: 2, kind: input, shape index: {}]
  %s3 = inlined_call_operand.vmem [shape: bf16[144,16], index: 3, kind: input, shape index: {}]
  %s4 = inlined_call_operand.vmem [shape: bf16[4,16,16,16], index: 4, kind: output, shape index: {0}]
  %s5 = inlined_call_operand.vmem [shape: f32[4,1,16], index: 5, kind: output, shape index: {1}]
  %s6 = inlined_call_operand.vmem [shape: f32[4,1,16], index: 6, kind: output, shape index: {2}]
  %7 = xla_tuple %s4, %s5, %s6
  %s8 = sld [smem:[#allocation0]]
  $region65: #{resconv_forward.4} parent=0
    _
  %s10 = ssub.s32 1, %s8
  %s11 = scalar_select 0, %s10, %s8
  loop: start=0, step=1, limit=6
  $region2: #{resconv_forward.4} parent=0 // loop_pre_header
    _
  $region3: #{resconv_forward.4} parent=0 // loop_header
    %s13 = sphi 0, %s17
    %p14 = scmp.ge.s32.totalorder %s13, 6
    %s23 = sphi 0, %s25
    %s26 = sphi 0, %s23
    %s27 = sphi 0, %s26
    %s43 = sphi 0, %s27
    %s47 = sphi 0, %s47
    %s49 = sphi 0, %s47
    %s50 = sphi 0, %s49
    %s64 = sphi 0, %s50
    %s68 = sphi 0, %s68
    %s70 = sphi 0, %s68
    %s71 = sphi 0, %s70
    %s85 = sphi 0, %s71
    %s89 = sphi 0, %s89
    %s91 = sphi 0, %s89
    %s92 = sphi 0, %s91
    %s106 = sphi 0, %s92
    %s112 = sphi 0, %s114
    %s115 = sphi 0, %s112
    %s116 = sphi 0, %s115
    %s132 = sphi 0, %s116
    %s138 = sphi 0, %s140
    %s141 = sphi 0, %s138
    %s142 = sphi 0, %s141
    %s158 = sphi 0, %s142
    %s164 = sphi 0, %s166
    %s167 = sphi 0, %s164
    %s168 = sphi 0, %s167
    %s184 = sphi 0, %s168
  $region4: #{resconv_forward.4} parent=0 // loop_header_branch
    %16 = sbr.rel (%p14) target = $region8
  $region5: #{resconv_forward.4} parent=0 // loop_body
    %s18 = ssub.s32 %s13, 1
    %s19 = ssub.s32 %s13, 2
    %s20 = sadd.s32 %s13, 1
    %s21 = ssub.s32 %s13, %s20
    %p22 = scmp.eq.s32.totalorder %s21, 0
    %s24 = sadd.s32 %s23, 1
    %s25 = scalar_select %p22, %s23, %s24
    %p28 = pneg %p22
    %p29 = scmp.eq.s32.totalorder %s13, 3
    %p30 = por %p28, %p29
    %p31 = scmp.ne.s32.totalorder %s23, %s26
    %p32 = scmp.eq.s32.totalorder %s13, 0
    %p33 = por %p31, %p32
    %p34 = scmp.ne.s32.totalorder %s23, %s26
    %p35 = scmp.eq.s32.totalorder %s18, 3
    %p36 = por %p34, %p35
    %p37 = scmp.ne.s32.totalorder %s26, %s27
    %p38 = scmp.eq.s32.totalorder %s18, 0
    %p39 = por %p37, %p38
    %p40 = scmp.ne.s32.totalorder %s26, %s27
    %p41 = scmp.eq.s32.totalorder %s19, 3
    %p42 = por %p40, %p41
    %p44 = scmp.ne.s32.totalorder %s27, %s43
    %p45 = scmp.eq.s32.totalorder %s19, 0
    %p46 = por %p44, %p45
    %s48 = sadd.s32 %s47, 1
    %p51 = scmp.eq.s32.totalorder %s13, 3
    %p52 = scmp.ne.s32.totalorder %s47, %s49
    %p53 = scmp.eq.s32.totalorder %s13, 0
    %p54 = por %p52, %p53
    %p55 = scmp.ne.s32.totalorder %s47, %s49
    %p56 = scmp.eq.s32.totalorder %s18, 3
    %p57 = por %p55, %p56
    %p58 = scmp.ne.s32.totalorder %s49, %s50
    %p59 = scmp.eq.s32.totalorder %s18, 0
    %p60 = por %p58, %p59
    %p61 = scmp.ne.s32.totalorder %s49, %s50
    %p62 = scmp.eq.s32.totalorder %s19, 3
    %p63 = por %p61, %p62
    %p65 = scmp.ne.s32.totalorder %s50, %s64
    %p66 = scmp.eq.s32.totalorder %s19, 0
    %p67 = por %p65, %p66
    %s69 = sadd.s32 %s68, 1
    %p72 = scmp.eq.s32.totalorder %s13, 3
    %p73 = scmp.ne.s32.totalorder %s68, %s70
    %p74 = scmp.eq.s32.totalorder %s13, 0
    %p75 = por %p73, %p74
    %p76 = scmp.ne.s32.totalorder %s68, %s70
    %p77 = scmp.eq.s32.totalorder %s18, 3
    %p78 = por %p76, %p77
    %p79 = scmp.ne.s32.totalorder %s70, %s71
    %p80 = scmp.eq.s32.totalorder %s18, 0
    %p81 = por %p79, %p80
    %p82 = scmp.ne.s32.totalorder %s70, %s71
    %p83 = scmp.eq.s32.totalorder %s19, 3
    %p84 = por %p82, %p83
    %p86 = scmp.ne.s32.totalorder %s71, %s85
    %p87 = scmp.eq.s32.totalorder %s19, 0
    %p88 = por %p86, %p87
    %s90 = sadd.s32 %s89, 1
    %p93 = scmp.eq.s32.totalorder %s13, 3
    %p94 = scmp.ne.s32.totalorder %s89, %s91
    %p95 = scmp.eq.s32.totalorder %s13, 0
    %p96 = por %p94, %p95
    %p97 = scmp.ne.s32.totalorder %s89, %s91
    %p98 = scmp.eq.s32.totalorder %s18, 3
    %p99 = por %p97, %p98
    %p100 = scmp.ne.s32.totalorder %s91, %s92
    %p101 = scmp.eq.s32.totalorder %s18, 0
    %p102 = por %p100, %p101
    %p103 = scmp.ne.s32.totalorder %s91, %s92
    %p104 = scmp.eq.s32.totalorder %s19, 3
    %p105 = por %p103, %p104
    %p107 = scmp.ne.s32.totalorder %s92, %s106
    %p108 = scmp.eq.s32.totalorder %s19, 0
    %p109 = por %p107, %p108
    %s110 = ssub.s32 %s13, %s20
    %p111 = scmp.eq.s32.totalorder %s110, 0
    %s113 = sadd.s32 %s112, 1
    %s114 = scalar_select %p111, %s112, %s113
    %p117 = pneg %p111
    %p118 = scmp.eq.s32.totalorder %s13, 3
    %p119 = por %p117, %p118
    %p120 = scmp.ne.s32.totalorder %s112, %s115
    %p121 = scmp.eq.s32.totalorder %s13, 0
    %p122 = por %p120, %p121
    %p123 = scmp.ne.s32.totalorder %s112, %s115
    %p124 = scmp.eq.s32.totalorder %s18, 3
    %p125 = por %p123, %p124
    %p126 = scmp.ne.s32.totalorder %s115, %s116
    %p127 = scmp.eq.s32.totalorder %s18, 0
    %p128 = por %p126, %p127
    %p129 = scmp.ne.s32.totalorder %s115, %s116
    %p130 = scmp.eq.s32.totalorder %s19, 3
    %p131 = por %p129, %p130
    %p133 = scmp.ne.s32.totalorder %s116, %s132
    %p134 = scmp.eq.s32.totalorder %s19, 0
    %p135 = por %p133, %p134
    %s136 = ssub.s32 %s13, %s20
    %p137 = scmp.eq.s32.totalorder %s136, 0
    %s139 = sadd.s32 %s138, 1
    %s140 = scalar_select %p137, %s138, %s139
    %p143 = pneg %p137
    %p144 = scmp.eq.s32.totalorder %s13, 3
    %p145 = por %p143, %p144
    %p146 = scmp.ne.s32.totalorder %s138, %s141
    %p147 = scmp.eq.s32.totalorder %s13, 0
    %p148 = por %p146, %p147
    %p149 = scmp.ne.s32.totalorder %s138, %s141
    %p150 = scmp.eq.s32.totalorder %s18, 3
    %p151 = por %p149, %p150
    %p152 = scmp.ne.s32.totalorder %s141, %s142
    %p153 = scmp.eq.s32.totalorder %s18, 0
    %p154 = por %p152, %p153
    %p155 = scmp.ne.s32.totalorder %s141, %s142
    %p156 = scmp.eq.s32.totalorder %s19, 3
    %p157 = por %p155, %p156
    %p159 = scmp.ne.s32.totalorder %s142, %s158
    %p160 = scmp.eq.s32.totalorder %s19, 0
    %p161 = por %p159, %p160
    %s162 = ssub.s32 %s13, %s20
    %p163 = scmp.eq.s32.totalorder %s162, 0
    %s165 = sadd.s32 %s164, 1
    %s166 = scalar_select %p163, %s164, %s165
    %p169 = pneg %p163
    %p170 = scmp.eq.s32.totalorder %s13, 3
    %p171 = por %p169, %p170
    %p172 = scmp.ne.s32.totalorder %s164, %s167
    %p173 = scmp.eq.s32.totalorder %s13, 0
    %p174 = por %p172, %p173
    %p175 = scmp.ne.s32.totalorder %s164, %s167
    %p176 = scmp.eq.s32.totalorder %s18, 3
    %p177 = por %p175, %p176
    %p178 = scmp.ne.s32.totalorder %s167, %s168
    %p179 = scmp.eq.s32.totalorder %s18, 0
    %p180 = por %p178, %p179
    %p181 = scmp.ne.s32.totalorder %s167, %s168
    %p182 = scmp.eq.s32.totalorder %s19, 3
    %p183 = por %p181, %p182
    %p185 = scmp.ne.s32.totalorder %s168, %s184
    %p186 = scmp.eq.s32.totalorder %s19, 0
    %p187 = por %p185, %p186
    %p188 = scmp.le.s32.totalorder 1, %s13
    %p189 = scmp.lt.s32.totalorder %s13, 5
    %p190 = pnand %p188, %p189
    %p191 = pneg %p190
    // Predicated region
    $region9: #{resconv_forward.4} parent=5 // pred_check
      _
    $region10: #{resconv_forward.4} parent=5 // pred_check_branch
      %193 = sbr.rel (%p190) target = $region12
    $region11: #{resconv_forward.4} parent=5 // pred_region
      %s194 = ssub.s32 %s13, 1
      // Predicated region
      $region13: #{resconv_forward.4} parent=11 // pred_check
        %p195 = pneg %p60
      $region14: #{resconv_forward.4} parent=11 // pred_check_branch
        %197 = sbr.rel (%p195) target = $region16
      $region15: #{resconv_forward.4} parent=11 // pred_region
        _
      $region16: #{resconv_forward.4} parent=11 // pred_fallthru
        _
      // Predicated region
      $region17: #{resconv_forward.4} parent=11 // pred_check
        %p198 = pneg %p81
      $region18: #{resconv_forward.4} parent=11 // pred_check_branch
        %200 = sbr.rel (%p198) target = $region20
      $region19: #{resconv_forward.4} parent=11 // pred_region
        _
      $region20: #{resconv_forward.4} parent=11 // pred_fallthru
        _
      // Predicated region
      $region21: #{resconv_forward.4} parent=11 // pred_check
        %p201 = pneg %p102
      $region22: #{resconv_forward.4} parent=11 // pred_check_branch
        %203 = sbr.rel (%p201) target = $region24
      $region23: #{resconv_forward.4} parent=11 // pred_region
        _
      $region24: #{resconv_forward.4} parent=11 // pred_fallthru
        _
    $region12: #{resconv_forward.4} parent=5 // pred_fallthru
      _
    %p204 = scmp.lt.s32.totalorder %s13, 4
    // Predicated region
    $region25: #{resconv_forward.4} parent=5 // pred_check
      %p205 = pneg %p204
    $region26: #{resconv_forward.4} parent=5 // pred_check_branch
      %207 = sbr.rel (%p205) target = $region28
    $region27: #{resconv_forward.4} parent=5 // pred_region
      // Predicated region
      $region29: #{resconv_forward.4} parent=27 // pred_check
        %p208 = pneg %p33
      $region30: #{resconv_forward.4} parent=27 // pred_check_branch
        %210 = sbr.rel (%p208) target = $region32
      $region31: #{resconv_forward.4} parent=27 // pred_region
        %p211 = scmp.lt.s32.totalorder %s13, 3
        %s212 = scalar_select %p211, %s13, 3
        %s213 = smul.addr %s212, 32
        %s214 = smul.addr %s213, 4
        %s215 = scalar_lea.vmem %s0, %s214
      $region32: #{resconv_forward.4} parent=27 // pred_fallthru
        _
    $region28: #{resconv_forward.4} parent=5 // pred_fallthru
      _
    %p216 = scmp.le.s32.totalorder 1, %s13
    %p217 = scmp.lt.s32.totalorder %s13, 5
    %p218 = pnand %p216, %p217
    %p219 = pneg %p218
    // Predicated region
    $region33: #{resconv_forward.4} parent=5 // pred_check
      _
    $region34: #{resconv_forward.4} parent=5 // pred_check_branch
      %221 = sbr.rel (%p218) target = $region36
    $region35: #{resconv_forward.4} parent=5 // pred_region
      %s222 = ssub.s32 %s13, 1
      %p223 = scmp.lt.s32.totalorder %s18, 3
      %s224 = scalar_select %p223, %s18, 3
      %s225 = smul.addr %s224, 32
      %s226 = smul.addr %s225, 4
      %s227 = scalar_lea.vmem %s0, %s226
      %p228 = pneg %p39
      %p229 = pneg %p36
      %p230 = pneg %p60
      %p231 = pneg %p57
      %p232 = pneg %p81
      %p233 = pneg %p78
      %p234 = pneg %p102
      %p235 = pneg %p99
      %p236 = pneg %p128
      %p237 = pneg %p125
      %p238 = scmp.lt.s32.totalorder %s18, 3
      %s239 = scalar_select %p238, %s18, 3
      %s240 = smul.addr %s239, 32
      %s241 = smul.addr %s240, 4
      %s242 = scalar_lea.vmem %s4, %s241
      %p243 = pneg %p154
      %p244 = pneg %p151
      %p245 = scmp.lt.s32.totalorder %s18, 3
      %s246 = scalar_select %p245, %s18, 3
      %s247 = scalar_lea.vmem %s5, %s246
      %p248 = pneg %p180
      %p249 = pneg %p177
      %p250 = scmp.lt.s32.totalorder %s18, 3
      %s251 = scalar_select %p250, %s18, 3
      %s252 = scalar_lea.vmem %s6, %s251
      %p253 = scmp.lt.s32.totalorder %s18, 3
      %s254 = scalar_select %p253, %s18, 3
      %s255 = smul.addr %s254, 32
      %s256 = smul.addr %s255, 4
      %s257 = scalar_lea.vmem %s0, %s256
      %p258 = scmp.lt.s32.totalorder %s18, 3
      %s259 = scalar_select %p258, %s18, 3
      %s260 = smul.addr %s259, 32
      %s261 = smul.addr %s260, 4
      %s262 = scalar_lea.vmem %s4, %s261
      %p263 = scmp.lt.s32.totalorder %s18, 3
      %s264 = scalar_select %p263, %s18, 3
      %s265 = scalar_lea.vmem %s5, %s264
      %p266 = scmp.lt.s32.totalorder %s18, 3
      %s267 = scalar_select %p266, %s18, 3
      %s268 = scalar_lea.vmem %s6, %s267
      %v270 = vld [vmem:[%s257] sm:$0xf]
      %v271 = vld [vmem:[%s257 + $0x4] sm:$0xf]
      %v272 = vld [vmem:[%s257 + $0x8] sm:$0xf]
      %v273 = vld [vmem:[%s257 + $0xc] sm:$0xf]
      %v274 = vld [vmem:[%s257 + $0x10] sm:$0xf]
      %v275 = vld [vmem:[%s257 + $0x14] sm:$0xf]
      %v276 = vld [vmem:[%s257 + $0x18] sm:$0xf]
      %v277 = vld [vmem:[%s257 + $0x1c] sm:$0xf]
      %v278 = vld [vmem:[%s257 + $0x20] sm:$0xf]
      %v279 = vld [vmem:[%s257 + $0x24] sm:$0xf]
      %v280 = vld [vmem:[%s257 + $0x28] sm:$0xf]
      %v281 = vld [vmem:[%s257 + $0x2c] sm:$0xf]
      %v282 = vld [vmem:[%s257 + $0x30] sm:$0xf]
      %v283 = vld [vmem:[%s257 + $0x34] sm:$0xf]
      %v284 = vld [vmem:[%s257 + $0x38] sm:$0xf]
      %v285 = vld [vmem:[%s257 + $0x3c] sm:$0xf]
      %v286 = vld [vmem:[%s257 + $0x40] sm:$0xf]
      %v287 = vld [vmem:[%s257 + $0x44] sm:$0xf]
      %v288 = vld [vmem:[%s257 + $0x48] sm:$0xf]
      %v289 = vld [vmem:[%s257 + $0x4c] sm:$0xf]
      %v290 = vld [vmem:[%s257 + $0x50] sm:$0xf]
      %v291 = vld [vmem:[%s257 + $0x54] sm:$0xf]
      %v292 = vld [vmem:[%s257 + $0x58] sm:$0xf]
      %v293 = vld [vmem:[%s257 + $0x5c] sm:$0xf]
      %v294 = vld [vmem:[%s257 + $0x60] sm:$0xf]
      %v295 = vld [vmem:[%s257 + $0x64] sm:$0xf]
      %v296 = vld [vmem:[%s257 + $0x68] sm:$0xf]
      %v297 = vld [vmem:[%s257 + $0x6c] sm:$0xf]
      %v298 = vld [vmem:[%s257 + $0x70] sm:$0xf]
      %v299 = vld [vmem:[%s257 + $0x74] sm:$0xf]
      %v300 = vld [vmem:[%s257 + $0x78] sm:$0xf]
      %v301 = vld [vmem:[%s257 + $0x7c] sm:$0xf]
      %v302 = vunpack.c.l.bf16 %v270
      %v303 = vunpack.c.l.bf16 %v271
      %v304 = vunpack.c.l.bf16 %v272
      %v305 = vunpack.c.l.bf16 %v273
      %v306 = vunpack.c.l.bf16 %v274
      %v307 = vunpack.c.l.bf16 %v275
      %v308 = vunpack.c.l.bf16 %v276
      %v309 = vunpack.c.l.bf16 %v277
      %v310 = vunpack.c.l.bf16 %v278
      %v311 = vunpack.c.l.bf16 %v279
      %v312 = vunpack.c.l.bf16 %v280
      %v313 = vunpack.c.l.bf16 %v281
      %v314 = vunpack.c.l.bf16 %v282
      %v315 = vunpack.c.l.bf16 %v283
      %v316 = vunpack.c.l.bf16 %v284
      %v317 = vunpack.c.l.bf16 %v285
      %v318 = vunpack.c.l.bf16 %v286
      %v319 = vunpack.c.l.bf16 %v287
      %v320 = vunpack.c.l.bf16 %v288
      %v321 = vunpack.c.l.bf16 %v289
      %v322 = vunpack.c.l.bf16 %v290
      %v323 = vunpack.c.l.bf16 %v291
      %v324 = vunpack.c.l.bf16 %v292
      %v325 = vunpack.c.l.bf16 %v293
      %v326 = vunpack.c.l.bf16 %v294
      %v327 = vunpack.c.l.bf16 %v295
      %v328 = vunpack.c.l.bf16 %v296
      %v329 = vunpack.c.l.bf16 %v297
      %v330 = vunpack.c.l.bf16 %v298
      %v331 = vunpack.c.l.bf16 %v299
      %v332 = vunpack.c.l.bf16 %v300
      %v333 = vunpack.c.l.bf16 %v301
      %v334 = vld [vmem:[%s1] sm:$0x1]
      %v336 = vlaneseq
      %v337 = vshrl.u32 %v336, 7
      %v338 = vsub.s32 0, %v337
      %v339 = vrot.slane %v334, %v338
      %v341 = vmul.f32 %v302, %v339
      %v342 = vmul.f32 %v303, %v339
      %v343 = vmul.f32 %v304, %v339
      %v344 = vmul.f32 %v305, %v339
      %v345 = vmul.f32 %v306, %v339
      %v346 = vmul.f32 %v307, %v339
      %v347 = vmul.f32 %v308, %v339
      %v348 = vmul.f32 %v309, %v339
      %v349 = vmul.f32 %v310, %v339
      %v350 = vmul.f32 %v311, %v339
      %v351 = vmul.f32 %v312, %v339
      %v352 = vmul.f32 %v313, %v339
      %v353 = vmul.f32 %v314, %v339
      %v354 = vmul.f32 %v315, %v339
      %v355 = vmul.f32 %v316, %v339
      %v356 = vmul.f32 %v317, %v339
      %v357 = vmul.f32 %v318, %v339
      %v358 = vmul.f32 %v319, %v339
      %v359 = vmul.f32 %v320, %v339
      %v360 = vmul.f32 %v321, %v339
      %v361 = vmul.f32 %v322, %v339
      %v362 = vmul.f32 %v323, %v339
      %v363 = vmul.f32 %v324, %v339
      %v364 = vmul.f32 %v325, %v339
      %v365 = vmul.f32 %v326, %v339
      %v366 = vmul.f32 %v327, %v339
      %v367 = vmul.f32 %v328, %v339
      %v368 = vmul.f32 %v329, %v339
      %v369 = vmul.f32 %v330, %v339
      %v370 = vmul.f32 %v331, %v339
      %v371 = vmul.f32 %v332, %v339
      %v372 = vmul.f32 %v333, %v339
      %v373 = vld [vmem:[%s2] sm:$0x1]
      %v375 = vlaneseq
      %v376 = vshrl.u32 %v375, 7
      %v377 = vsub.s32 0, %v376
      %v378 = vrot.slane %v373, %v377
      %v380 = vadd.f32 %v341, %v378
      %v381 = vadd.f32 %v342, %v378
      %v382 = vadd.f32 %v343, %v378
      %v383 = vadd.f32 %v344, %v378
      %v384 = vadd.f32 %v345, %v378
      %v385 = vadd.f32 %v346, %v378
      %v386 = vadd.f32 %v347, %v378
      %v387 = vadd.f32 %v348, %v378
      %v388 = vadd.f32 %v349, %v378
      %v389 = vadd.f32 %v350, %v378
      %v390 = vadd.f32 %v351, %v378
      %v391 = vadd.f32 %v352, %v378
      %v392 = vadd.f32 %v353, %v378
      %v393 = vadd.f32 %v354, %v378
      %v394 = vadd.f32 %v355, %v378
      %v395 = vadd.f32 %v356, %v378
      %v396 = vadd.f32 %v357, %v378
      %v397 = vadd.f32 %v358, %v378
      %v398 = vadd.f32 %v359, %v378
      %v399 = vadd.f32 %v360, %v378
      %v400 = vadd.f32 %v361, %v378
      %v401 = vadd.f32 %v362, %v378
      %v402 = vadd.f32 %v363, %v378
      %v403 = vadd.f32 %v364, %v378
      %v404 = vadd.f32 %v365, %v378
      %v405 = vadd.f32 %v366, %v378
      %v406 = vadd.f32 %v367, %v378
      %v407 = vadd.f32 %v368, %v378
      %v408 = vadd.f32 %v369, %v378
      %v409 = vadd.f32 %v370, %v378
      %v410 = vadd.f32 %v371, %v378
      %v411 = vadd.f32 %v372, %v378
      %v412 = vmax.f32 %v380, 0.0
      %v413 = vmax.f32 %v381, 0.0
      %v414 = vmax.f32 %v382, 0.0
      %v415 = vmax.f32 %v383, 0.0
      %v416 = vmax.f32 %v384, 0.0
      %v417 = vmax.f32 %v385, 0.0
      %v418 = vmax.f32 %v386, 0.0
      %v419 = vmax.f32 %v387, 0.0
      %v420 = vmax.f32 %v388, 0.0
      %v421 = vmax.f32 %v389, 0.0
      %v422 = vmax.f32 %v390, 0.0
      %v423 = vmax.f32 %v391, 0.0
      %v424 = vmax.f32 %v392, 0.0
      %v425 = vmax.f32 %v393, 0.0
      %v426 = vmax.f32 %v394, 0.0
      %v427 = vmax.f32 %v395, 0.0
      %v428 = vmax.f32 %v396, 0.0
      %v429 = vmax.f32 %v397, 0.0
      %v430 = vmax.f32 %v398, 0.0
      %v431 = vmax.f32 %v399, 0.0
      %v432 = vmax.f32 %v400, 0.0
      %v433 = vmax.f32 %v401, 0.0
      %v434 = vmax.f32 %v402, 0.0
      %v435 = vmax.f32 %v403, 0.0
      %v436 = vmax.f32 %v404, 0.0
      %v437 = vmax.f32 %v405, 0.0
      %v438 = vmax.f32 %v406, 0.0
      %v439 = vmax.f32 %v407, 0.0
      %v440 = vmax.f32 %v408, 0.0
      %v441 = vmax.f32 %v409, 0.0
      %v442 = vmax.f32 %v410, 0.0
      %v443 = vmax.f32 %v411, 0.0
      %v444 = vpack.c.bf16 %v413, %v412
      %v445 = vpack.c.bf16 %v415, %v414
      %v446 = vpack.c.bf16 %v417, %v416
      %v447 = vpack.c.bf16 %v419, %v418
      %v448 = vpack.c.bf16 %v421, %v420
      %v449 = vpack.c.bf16 %v423, %v422
      %v450 = vpack.c.bf16 %v425, %v424
      %v451 = vpack.c.bf16 %v427, %v426
      %v452 = vpack.c.bf16 %v429, %v428
      %v453 = vpack.c.bf16 %v431, %v430
      %v454 = vpack.c.bf16 %v433, %v432
      %v455 = vpack.c.bf16 %v435, %v434
      %v456 = vpack.c.bf16 %v437, %v436
      %v457 = vpack.c.bf16 %v439, %v438
      %v458 = vpack.c.bf16 %v441, %v440
      %v459 = vpack.c.bf16 %v443, %v442
      %v460 = vld [vmem:[%s3] sm:$0xf]
      %v461 = vld [vmem:[%s3 + $0x4] sm:$0xf]
      %v462 = vld [vmem:[%s3 + $0x8] sm:$0xf]
      %v463 = vld [vmem:[%s3 + $0xc] sm:$0xf]
      %v464 = vld [vmem:[%s3 + $0x10] sm:$0xf]
      %v465 = vld [vmem:[%s3 + $0x14] sm:$0xf]
      %v466 = vld [vmem:[%s3 + $0x18] sm:$0xf]
      %v467 = vld [vmem:[%s3 + $0x1c] sm:$0xf]
      %v468 = vld [vmem:[%s3 + $0x20] sm:$0xf]
      %v469 = vld [vmem:[%s3 + $0x24] sm:$0xf]
      %v470 = vld [vmem:[%s3 + $0x28] sm:$0xf]
      %v471 = vld [vmem:[%s3 + $0x2c] sm:$0xf]
      %v472 = vld [vmem:[%s3 + $0x30] sm:$0xf]
      %v473 = vld [vmem:[%s3 + $0x34] sm:$0xf]
      %v474 = vld [vmem:[%s3 + $0x38] sm:$0xf]
      %v475 = vld [vmem:[%s3 + $0x3c] sm:$0xf]
      %v476 = vld [vmem:[%s3 + $0x40] sm:$0xf]
      %v477 = vld [vmem:[%s3 + $0x44] sm:$0xf]
      %v479 = vshrl.u32 %v444, 16
      %v481 = vrot.slane %v479, 7
      %v482 = vshll.u32 %v444, 16
      %v484 = vor.u32 %v481, %v482
      %v486 = vshrl.u32 %v445, 16
      %v488 = vrot.slane %v486, 7
      %v489 = vshll.u32 %v445, 16
      %v491 = vor.u32 %v488, %v489
      %v493 = vshrl.u32 %v446, 16
      %v495 = vrot.slane %v493, 7
      %v496 = vshll.u32 %v446, 16
      %v498 = vor.u32 %v495, %v496
      %v500 = vshrl.u32 %v447, 16
      %v502 = vrot.slane %v500, 7
      %v503 = vshll.u32 %v447, 16
      %v505 = vor.u32 %v502, %v503
      %v507 = vshrl.u32 %v448, 16
      %v509 = vrot.slane %v507, 7
      %v510 = vshll.u32 %v448, 16
      %v512 = vor.u32 %v509, %v510
      %v514 = vshrl.u32 %v449, 16
      %v516 = vrot.slane %v514, 7
      %v517 = vshll.u32 %v449, 16
      %v519 = vor.u32 %v516, %v517
      %v521 = vshrl.u32 %v450, 16
      %v523 = vrot.slane %v521, 7
      %v524 = vshll.u32 %v450, 16
      %v526 = vor.u32 %v523, %v524
      %v528 = vshrl.u32 %v451, 16
      %v530 = vrot.slane %v528, 7
      %v531 = vshll.u32 %v451, 16
      %v533 = vor.u32 %v530, %v531
      %v535 = vshrl.u32 %v452, 16
      %v537 = vrot.slane %v535, 7
      %v538 = vshll.u32 %v452, 16
      %v540 = vor.u32 %v537, %v538
      %v542 = vshrl.u32 %v453, 16
      %v544 = vrot.slane %v542, 7
      %v545 = vshll.u32 %v453, 16
      %v547 = vor.u32 %v544, %v545
      %v549 = vshrl.u32 %v454, 16
      %v551 = vrot.slane %v549, 7
      %v552 = vshll.u32 %v454, 16
      %v554 = vor.u32 %v551, %v552
      %v556 = vshrl.u32 %v455, 16
      %v558 = vrot.slane %v556, 7
      %v559 = vshll.u32 %v455, 16
      %v561 = vor.u32 %v558, %v559
      %v563 = vshrl.u32 %v456, 16
      %v565 = vrot.slane %v563, 7
      %v566 = vshll.u32 %v456, 16
      %v568 = vor.u32 %v565, %v566
      %v570 = vshrl.u32 %v457, 16
      %v572 = vrot.slane %v570, 7
      %v573 = vshll.u32 %v457, 16
      %v575 = vor.u32 %v572, %v573
      %v577 = vshrl.u32 %v458, 16
      %v579 = vrot.slane %v577, 7
      %v580 = vshll.u32 %v458, 16
      %v582 = vor.u32 %v579, %v580
      %v584 = vshrl.u32 %v459, 16
      %v586 = vrot.slane %v584, 7
      %v587 = vshll.u32 %v459, 16
      %v589 = vor.u32 %v586, %v587
      %vm622 = vcmask 1040384
      %vm623 = vsmask.f32 256
      %vm624 = vmand %vm622, %vm623
      %v625 = vsel %vm624, 0, %v484
      %v626 = vsel %vm624, 0, %v491
      %v627 = vsel %vm624, 0, %v498
      %v628 = vsel %vm624, 0, %v505
      %v629 = vsel %vm624, 0, %v512
      %v630 = vsel %vm624, 0, %v519
      %v631 = vsel %vm624, 0, %v526
      %v632 = vsel %vm624, 0, %v533
      %v633 = vsel %vm624, 0, %v540
      %v634 = vsel %vm624, 0, %v547
      %v635 = vsel %vm624, 0, %v554
      %v636 = vsel %vm624, 0, %v561
      %v637 = vsel %vm624, 0, %v568
      %v638 = vsel %vm624, 0, %v575
      %v639 = vsel %vm624, 0, %v582
      %v640 = vsel %vm624, 0, %v589
      %v641 = vsel %vm624, %v481, 0
      %v642 = vsel %vm624, %v488, 0
      %v643 = vsel %vm624, %v495, 0
      %v644 = vsel %vm624, %v502, 0
      %v645 = vsel %vm624, %v509, 0
      %v646 = vsel %vm624, %v516, 0
      %v647 = vsel %vm624, %v523, 0
      %v648 = vsel %vm624, %v530, 0
      %v649 = vsel %vm624, %v537, 0
      %v650 = vsel %vm624, %v544, 0
      %v651 = vsel %vm624, %v551, 0
      %v652 = vsel %vm624, %v558, 0
      %v653 = vsel %vm624, %v565, 0
      %v654 = vsel %vm624, %v572, 0
      %v655 = vsel %vm624, %v579, 0
      %v656 = vsel %vm624, %v586, 0
      %vm657 = vsmask.f32 7424
      %v659 = vshrl.u32 0, 16
      %v661 = vshll.u32 0, 16
      %v663 = vrot.slane %v661, 1
      %v664 = vor.u32 %v659, %v663
      %v665 = vsel %vm657, %v664, %v663
      %v667 = vshrl.u32 %v625, 16
      %v669 = vshll.u32 %v625, 16
      %v671 = vrot.slane %v669, 1
      %v672 = vor.u32 %v667, %v671
      %v674 = vshll.u32 %v641, 16
      %v676 = vrot.slane %v674, 1
      %v677 = vsel %vm657, %v672, %v676
      %v679 = vshrl.u32 %v626, 16
      %v681 = vshll.u32 %v626, 16
      %v683 = vrot.slane %v681, 1
      %v684 = vor.u32 %v679, %v683
      %v686 = vshll.u32 %v642, 16
      %v688 = vrot.slane %v686, 1
      %v689 = vsel %vm657, %v684, %v688
      %v691 = vshrl.u32 %v627, 16
      %v693 = vshll.u32 %v627, 16
      %v695 = vrot.slane %v693, 1
      %v696 = vor.u32 %v691, %v695
      %v698 = vshll.u32 %v643, 16
      %v700 = vrot.slane %v698, 1
      %v701 = vsel %vm657, %v696, %v700
      %v703 = vshrl.u32 %v628, 16
      %v705 = vshll.u32 %v628, 16
      %v707 = vrot.slane %v705, 1
      %v708 = vor.u32 %v703, %v707
      %v710 = vshll.u32 %v644, 16
      %v712 = vrot.slane %v710, 1
      %v713 = vsel %vm657, %v708, %v712
      %v715 = vshrl.u32 %v629, 16
      %v717 = vshll.u32 %v629, 16
      %v719 = vrot.slane %v717, 1
      %v720 = vor.u32 %v715, %v719
      %v722 = vshll.u32 %v645, 16
      %v724 = vrot.slane %v722, 1
      %v725 = vsel %vm657, %v720, %v724
      %v727 = vshrl.u32 %v630, 16
      %v729 = vshll.u32 %v630, 16
      %v731 = vrot.slane %v729, 1
      %v732 = vor.u32 %v727, %v731
      %v734 = vshll.u32 %v646, 16
      %v736 = vrot.slane %v734, 1
      %v737 = vsel %vm657, %v732, %v736
      %v739 = vshrl.u32 %v631, 16
      %v741 = vshll.u32 %v631, 16
      %v743 = vrot.slane %v741, 1
      %v744 = vor.u32 %v739, %v743
      %v746 = vshll.u32 %v647, 16
      %v748 = vrot.slane %v746, 1
      %v749 = vsel %vm657, %v744, %v748
      %v751 = vshrl.u32 %v632, 16
      %v753 = vshll.u32 %v632, 16
      %v755 = vrot.slane %v753, 1
      %v756 = vor.u32 %v751, %v755
      %v758 = vshll.u32 %v648, 16
      %v760 = vrot.slane %v758, 1
      %v761 = vsel %vm657, %v756, %v760
      %v763 = vshrl.u32 %v633, 16
      %v765 = vshll.u32 %v633, 16
      %v767 = vrot.slane %v765, 1
      %v768 = vor.u32 %v763, %v767
      %v770 = vshll.u32 %v649, 16
      %v772 = vrot.slane %v770, 1
      %v773 = vsel %vm657, %v768, %v772
      %v775 = vshrl.u32 %v634, 16
      %v777 = vshll.u32 %v634, 16
      %v779 = vrot.slane %v777, 1
      %v780 = vor.u32 %v775, %v779
      %v782 = vshll.u32 %v650, 16
      %v784 = vrot.slane %v782, 1
      %v785 = vsel %vm657, %v780, %v784
      %v787 = vshrl.u32 %v635, 16
      %v789 = vshll.u32 %v635, 16
      %v791 = vrot.slane %v789, 1
      %v792 = vor.u32 %v787, %v791
      %v794 = vshll.u32 %v651, 16
      %v796 = vrot.slane %v794, 1
      %v797 = vsel %vm657, %v792, %v796
      %v799 = vshrl.u32 %v636, 16
      %v801 = vshll.u32 %v636, 16
      %v803 = vrot.slane %v801, 1
      %v804 = vor.u32 %v799, %v803
      %v806 = vshll.u32 %v652, 16
      %v808 = vrot.slane %v806, 1
      %v809 = vsel %vm657, %v804, %v808
      %v811 = vshrl.u32 %v637, 16
      %v813 = vshll.u32 %v637, 16
      %v815 = vrot.slane %v813, 1
      %v816 = vor.u32 %v811, %v815
      %v818 = vshll.u32 %v653, 16
      %v820 = vrot.slane %v818, 1
      %v821 = vsel %vm657, %v816, %v820
      %v823 = vshrl.u32 %v638, 16
      %v825 = vshll.u32 %v638, 16
      %v827 = vrot.slane %v825, 1
      %v828 = vor.u32 %v823, %v827
      %v830 = vshll.u32 %v654, 16
      %v832 = vrot.slane %v830, 1
      %v833 = vsel %vm657, %v828, %v832
      %v835 = vshrl.u32 %v639, 16
      %v837 = vshll.u32 %v639, 16
      %v839 = vrot.slane %v837, 1
      %v840 = vor.u32 %v835, %v839
      %v842 = vshll.u32 %v655, 16
      %v844 = vrot.slane %v842, 1
      %v845 = vsel %vm657, %v840, %v844
      %846 = vrot.lane.b32.xlu0 %v665, 16
      %v847 = vpop.permute.xlu0 %846
      %848 = vrot.lane.b32.xlu0 %v677, 16
      %v849 = vpop.permute.xlu0 %848
      %850 = vrot.lane.b32.xlu0 %v689, 16
      %v851 = vpop.permute.xlu0 %850
      %852 = vrot.lane.b32.xlu0 %v701, 16
      %v853 = vpop.permute.xlu0 %852
      %854 = vrot.lane.b32.xlu0 %v713, 16
      %v855 = vpop.permute.xlu0 %854
      %856 = vrot.lane.b32.xlu0 %v725, 16
      %v857 = vpop.permute.xlu0 %856
      %858 = vrot.lane.b32.xlu0 %v737, 16
      %v859 = vpop.permute.xlu0 %858
      %860 = vrot.lane.b32.xlu0 %v749, 16
      %v861 = vpop.permute.xlu0 %860
      %862 = vrot.lane.b32.xlu0 %v761, 16
      %v863 = vpop.permute.xlu0 %862
      %864 = vrot.lane.b32.xlu0 %v773, 16
      %v865 = vpop.permute.xlu0 %864
      %866 = vrot.lane.b32.xlu0 %v785, 16
      %v867 = vpop.permute.xlu0 %866
      %868 = vrot.lane.b32.xlu0 %v797, 16
      %v869 = vpop.permute.xlu0 %868
      %870 = vrot.lane.b32.xlu0 %v809, 16
      %v871 = vpop.permute.xlu0 %870
      %872 = vrot.lane.b32.xlu0 %v821, 16
      %v873 = vpop.permute.xlu0 %872
      %874 = vrot.lane.b32.xlu0 %v833, 16
      %v875 = vpop.permute.xlu0 %874
      %876 = vrot.lane.b32.xlu0 %v845, 16
      %v877 = vpop.permute.xlu0 %876
      %vm909 = vcmask 1046528
      %v910 = vrot.slane 0, 1
      %v911 = vsel %vm909, %v910, %v910
      %v912 = vrot.slane %v625, 1
      %v913 = vrot.slane %v641, 1
      %v914 = vsel %vm909, %v912, %v913
      %v915 = vrot.slane %v626, 1
      %v916 = vrot.slane %v642, 1
      %v917 = vsel %vm909, %v915, %v916
      %v918 = vrot.slane %v627, 1
      %v919 = vrot.slane %v643, 1
      %v920 = vsel %vm909, %v918, %v919
      %v921 = vrot.slane %v628, 1
      %v922 = vrot.slane %v644, 1
      %v923 = vsel %vm909, %v921, %v922
      %v924 = vrot.slane %v629, 1
      %v925 = vrot.slane %v645, 1
      %v926 = vsel %vm909, %v924, %v925
      %v927 = vrot.slane %v630, 1
      %v928 = vrot.slane %v646, 1
      %v929 = vsel %vm909, %v927, %v928
      %v930 = vrot.slane %v631, 1
      %v931 = vrot.slane %v647, 1
      %v932 = vsel %vm909, %v930, %v931
      %v933 = vrot.slane %v632, 1
      %v934 = vrot.slane %v648, 1
      %v935 = vsel %vm909, %v933, %v934
      %v936 = vrot.slane %v633, 1
      %v937 = vrot.slane %v649, 1
      %v938 = vsel %vm909, %v936, %v937
      %v939 = vrot.slane %v634, 1
      %v940 = vrot.slane %v650, 1
      %v941 = vsel %vm909, %v939, %v940
      %v942 = vrot.slane %v635, 1
      %v943 = vrot.slane %v651, 1
      %v944 = vsel %vm909, %v942, %v943
      %v945 = vrot.slane %v636, 1
      %v946 = vrot.slane %v652, 1
      %v947 = vsel %vm909, %v945, %v946
      %v948 = vrot.slane %v637, 1
      %v949 = vrot.slane %v653, 1
      %v950 = vsel %vm909, %v948, %v949
      %v951 = vrot.slane %v638, 1
      %v952 = vrot.slane %v654, 1
      %v953 = vsel %vm909, %v951, %v952
      %v954 = vrot.slane %v639, 1
      %v955 = vrot.slane %v655, 1
      %v956 = vsel %vm909, %v954, %v955
      %957 = vrot.lane.b32.xlu0 %v911, 32
      %v958 = vpop.permute.xlu0 %957
      %959 = vrot.lane.b32.xlu0 %v914, 32
      %v960 = vpop.permute.xlu0 %959
      %961 = vrot.lane.b32.xlu0 %v917, 32
      %v962 = vpop.permute.xlu0 %961
      %963 = vrot.lane.b32.xlu0 %v920, 32
      %v964 = vpop.permute.xlu0 %963
      %965 = vrot.lane.b32.xlu0 %v923, 32
      %v966 = vpop.permute.xlu0 %965
      %967 = vrot.lane.b32.xlu0 %v926, 32
      %v968 = vpop.permute.xlu0 %967
      %969 = vrot.lane.b32.xlu0 %v929, 32
      %v970 = vpop.permute.xlu0 %969
      %971 = vrot.lane.b32.xlu0 %v932, 32
      %v972 = vpop.permute.xlu0 %971
      %973 = vrot.lane.b32.xlu0 %v935, 32
      %v974 = vpop.permute.xlu0 %973
      %975 = vrot.lane.b32.xlu0 %v938, 32
      %v976 = vpop.permute.xlu0 %975
      %977 = vrot.lane.b32.xlu0 %v941, 32
      %v978 = vpop.permute.xlu0 %977
      %979 = vrot.lane.b32.xlu0 %v944, 32
      %v980 = vpop.permute.xlu0 %979
      %981 = vrot.lane.b32.xlu0 %v947, 32
      %v982 = vpop.permute.xlu0 %981
      %983 = vrot.lane.b32.xlu0 %v950, 32
      %v984 = vpop.permute.xlu0 %983
      %985 = vrot.lane.b32.xlu0 %v953, 32
      %v986 = vpop.permute.xlu0 %985
      %987 = vrot.lane.b32.xlu0 %v956, 32
      %v988 = vpop.permute.xlu0 %987
      %vm989 = vcmask 130048
      %v991 = vsel %vm989, 0, %v847
      %v993 = vsel %vm989, %v625, %v849
      %v995 = vsel %vm989, %v626, %v851
      %v997 = vsel %vm989, %v627, %v853
      %v999 = vsel %vm989, %v628, %v855
      %v1001 = vsel %vm989, %v629, %v857
      %v1003 = vsel %vm989, %v630, %v859
      %v1005 = vsel %vm989, %v631, %v861
      %v1007 = vsel %vm989, %v632, %v863
      %v1009 = vsel %vm989, %v633, %v865
      %v1011 = vsel %vm989, %v634, %v867
      %v1013 = vsel %vm989, %v635, %v869
      %v1015 = vsel %vm989, %v636, %v871
      %v1017 = vsel %vm989, %v637, %v873
      %v1019 = vsel %vm989, %v638, %v875
      %v1021 = vsel %vm989, %v639, %v877
      %vm1022 = vcmask 261120
      %v1024 = vsel %vm1022, %v991, %v958
      %v1026 = vsel %vm1022, %v993, %v960
      %v1028 = vsel %vm1022, %v995, %v962
      %v1030 = vsel %vm1022, %v997, %v964
      %v1032 = vsel %vm1022, %v999, %v966
      %v1034 = vsel %vm1022, %v1001, %v968
      %v1036 = vsel %vm1022, %v1003, %v970
      %v1038 = vsel %vm1022, %v1005, %v972
      %v1040 = vsel %vm1022, %v1007, %v974
      %v1042 = vsel %vm1022, %v1009, %v976
      %v1044 = vsel %vm1022, %v1011, %v978
      %v1046 = vsel %vm1022, %v1013, %v980
      %v1048 = vsel %vm1022, %v1015, %v982
      %v1050 = vsel %vm1022, %v1017, %v984
      %v1052 = vsel %vm1022, %v1019, %v986
      %v1054 = vsel %vm1022, %v1021, %v988
      %v1056 = vshrl.u32 %v640, 16
      %v1058 = vshll.u32 %v640, 16
      %v1060 = vrot.slane %v1058, 1
      %v1061 = vor.u32 %v1056, %v1060
      %v1063 = vshll.u32 %v656, 16
      %v1065 = vrot.slane %v1063, 1
      %v1066 = vsel %vm657, %v1061, %v1065
      %1067 = vrot.lane.b32.xlu0 %v1066, 16
      %v1068 = vpop.permute.xlu0 %1067
      %v1071 = vrot.slane %v640, 1
      %v1072 = vrot.slane %v656, 1
      %v1073 = vsel %vm909, %v1071, %v1072
      %1074 = vrot.lane.b32.xlu0 %v1073, 32
      %v1075 = vpop.permute.xlu0 %1074
      %v1077 = vsel %vm989, %v640, %v1068
      %v1079 = vsel %vm1022, %v1077, %v1075
      %v1086 = vunpack.c.l.b16 %v466
      %v1087 = vunpack.c.l.b16 %v467
      %v1088 = vunpack.c.l.b16 %v468
      %v1089 = vunpack.c.l.b16 %v469
      %v1090 = vunpack.c.l.b16 %v470
      %v1091 = vunpack.c.l.b16 %v471
      %v1092 = vpack.c.b16 %v1087, %v1086
      %v1093 = vpack.c.b16 %v1089, %v1088
      %v1094 = vpack.c.b16 %v1091, %v1090
      %vm1098 = vcmask 392192
      %v1099 = vsel %vm1098, %v1026, 0
      %v1101 = vsel %vm1098, %v1028, 0
      %v1103 = vsel %vm1098, %v1030, 0
      %v1105 = vsel %vm1098, %v1032, 0
      %v1107 = vsel %vm1098, %v1034, 0
      %v1109 = vsel %vm1098, %v1036, 0
      %v1111 = vsel %vm1098, %v1038, 0
      %v1113 = vsel %vm1098, %v1040, 0
      %v1115 = vsel %vm1098, %v1042, 0
      %v1117 = vsel %vm1098, %v1044, 0
      %v1119 = vsel %vm1098, %v1046, 0
      %v1121 = vsel %vm1098, %v1048, 0
      %v1123 = vsel %vm1098, %v1050, 0
      %v1125 = vsel %vm1098, %v1052, 0
      %v1127 = vsel %vm1098, %v1054, 0
      %v1129 = vsel %vm1098, %v1079, 0
      %1131 = vmatprep.subr.bf16.mxu0 0
      %1132 = vmatpush1.bf16.msra.mxu0 0
      %1133 = vmatprep.subr.bf16.mxu0 0
      %1134 = vmatpush1.bf16.msra.mxu0 0
      %1135 = vmatprep.subr.bf16.mxu0 0
      %1136 = vmatpush1.bf16.msra.mxu0 0
      %1137 = vmatprep.subr.bf16.mxu0 0
      %1138 = vmatpush1.bf16.msra.mxu0 0
      %1139 = vmatprep.subr.bf16.mxu0 0
      %1140 = vmatpush1.bf16.msra.mxu0 0
      %1141 = vmatprep.subr.bf16.mxu0 0
      %1142 = vmatpush1.bf16.msra.mxu0 %v1094
      %1143 = vmatprep.subr.bf16.mxu0 0
      %1144 = vmatpush1.bf16.msra.mxu0 %v1093
      %1145 = vmatprep.subr.bf16.mxu0 0
      %1146 = vmatpush1.bf16.msra.mxu0 %v1092
      %1147 = vmatprep.subr.bf16.mxu0 0
      %1148 = vmatpush2.bf16.msra.mxu0 0
      %1149 = vmatprep.subr.bf16.mxu0 0
      %1150 = vmatpush2.bf16.msra.mxu0 0
      %1151 = vmatprep.subr.bf16.mxu0 0
      %1152 = vmatpush2.bf16.msra.mxu0 0
      %1153 = vmatprep.subr.bf16.mxu0 0
      %1154 = vmatpush2.bf16.msra.mxu0 0
      %1155 = vmatprep.subr.bf16.mxu0 0
      %1156 = vmatpush2.bf16.msra.mxu0 0
      %1157 = vmatprep.subr.bf16.mxu0 0
      %1158 = vmatpush2.bf16.msra.mxu0 0
      %1159 = vmatprep.subr.bf16.mxu0 0
      %1160 = vmatpush2.bf16.msra.mxu0 0
      %1161 = vmatprep.subr.bf16.mxu0 0
      %1162 = vmatpush2.bf16.msra.mxu0 0
      %1163 = vmatprep.mubr.bf16.mxu0 0
      %1164 = vmatmul.mubr.bf16.gmra.mxu0 %v1099
      %v1165 = vpop.f32.mrf.mxu0
      %v1166 = vadd.f32 0.0, %v1165
      %v1167 = vpop.f32.mrf.mxu0
      %v1168 = vpop.f32.mrf.mxu0
      %v1169 = vadd.f32 0.0, %v1168
      %v1170 = vpop.f32.mrf.mxu0
      %1171 = vmatprep.mubr.bf16.mxu0 0
      %1172 = vmatmul.mubr.bf16.gmra.mxu0 %v1101
      %v1173 = vpop.f32.mrf.mxu0
      %v1174 = vadd.f32 0.0, %v1173
      %v1175 = vpop.f32.mrf.mxu0
      %v1176 = vpop.f32.mrf.mxu0
      %v1177 = vadd.f32 0.0, %v1176
      %v1178 = vpop.f32.mrf.mxu0
      %1179 = vmatprep.mubr.bf16.mxu0 0
      %1180 = vmatmul.mubr.bf16.gmra.mxu0 %v1103
      %v1181 = vpop.f32.mrf.mxu0
      %v1182 = vadd.f32 0.0, %v1181
      %v1183 = vpop.f32.mrf.mxu0
      %v1184 = vpop.f32.mrf.mxu0
      %v1185 = vadd.f32 0.0, %v1184
      %v1186 = vpop.f32.mrf.mxu0
      %1187 = vmatprep.mubr.bf16.mxu0 0
      %1188 = vmatmul.mubr.bf16.gmra.mxu0 %v1105
      %v1189 = vpop.f32.mrf.mxu0
      %v1190 = vadd.f32 0.0, %v1189
      %v1191 = vpop.f32.mrf.mxu0
      %v1192 = vpop.f32.mrf.mxu0
      %v1193 = vadd.f32 0.0, %v1192
      %v1194 = vpop.f32.mrf.mxu0
      %1195 = vmatprep.mubr.bf16.mxu0 0
      %1196 = vmatmul.mubr.bf16.gmra.mxu0 %v1107
      %v1197 = vpop.f32.mrf.mxu0
      %v1198 = vadd.f32 0.0, %v1197
      %v1199 = vpop.f32.mrf.mxu0
      %v1200 = vpop.f32.mrf.mxu0
      %v1201 = vadd.f32 0.0, %v1200
      %v1202 = vpop.f32.mrf.mxu0
      %1203 = vmatprep.mubr.bf16.mxu0 0
      %1204 = vmatmul.mubr.bf16.gmra.mxu0 %v1109
      %v1205 = vpop.f32.mrf.mxu0
      %v1206 = vadd.f32 0.0, %v1205
      %v1207 = vpop.f32.mrf.mxu0
      %v1208 = vpop.f32.mrf.mxu0
      %v1209 = vadd.f32 0.0, %v1208
      %v1210 = vpop.f32.mrf.mxu0
      %1211 = vmatprep.mubr.bf16.mxu0 0
      %1212 = vmatmul.mubr.bf16.gmra.mxu0 %v1111
      %v1213 = vpop.f32.mrf.mxu0
      %v1214 = vadd.f32 0.0, %v1213
      %v1215 = vpop.f32.mrf.mxu0
      %v1216 = vpop.f32.mrf.mxu0
      %v1217 = vadd.f32 0.0, %v1216
      %v1218 = vpop.f32.mrf.mxu0
      %1219 = vmatprep.mubr.bf16.mxu0 0
      %1220 = vmatmul.mubr.bf16.gmra.mxu0 %v1113
      %v1221 = vpop.f32.mrf.mxu0
      %v1222 = vadd.f32 0.0, %v1221
      %v1223 = vpop.f32.mrf.mxu0
      %v1224 = vpop.f32.mrf.mxu0
      %v1225 = vadd.f32 0.0, %v1224
      %v1226 = vpop.f32.mrf.mxu0
      %1227 = vmatprep.mubr.bf16.mxu0 0
      %1228 = vmatmul.mubr.bf16.gmra.mxu0 %v1115
      %v1229 = vpop.f32.mrf.mxu0
      %v1230 = vadd.f32 0.0, %v1229
      %v1231 = vpop.f32.mrf.mxu0
      %v1232 = vpop.f32.mrf.mxu0
      %v1233 = vadd.f32 0.0, %v1232
      %v1234 = vpop.f32.mrf.mxu0
      %1235 = vmatprep.mubr.bf16.mxu0 0
      %1236 = vmatmul.mubr.bf16.gmra.mxu0 %v1117
      %v1237 = vpop.f32.mrf.mxu0
      %v1238 = vadd.f32 0.0, %v1237
      %v1239 = vpop.f32.mrf.mxu0
      %v1240 = vpop.f32.mrf.mxu0
      %v1241 = vadd.f32 0.0, %v1240
      %v1242 = vpop.f32.mrf.mxu0
      %1243 = vmatprep.mubr.bf16.mxu0 0
      %1244 = vmatmul.mubr.bf16.gmra.mxu0 %v1119
      %v1245 = vpop.f32.mrf.mxu0
      %v1246 = vadd.f32 0.0, %v1245
      %v1247 = vpop.f32.mrf.mxu0
      %v1248 = vpop.f32.mrf.mxu0
      %v1249 = vadd.f32 0.0, %v1248
      %v1250 = vpop.f32.mrf.mxu0
      %1251 = vmatprep.mubr.bf16.mxu0 0
      %1252 = vmatmul.mubr.bf16.gmra.mxu0 %v1121
      %v1253 = vpop.f32.mrf.mxu0
      %v1254 = vadd.f32 0.0, %v1253
      %v1255 = vpop.f32.mrf.mxu0
      %v1256 = vpop.f32.mrf.mxu0
      %v1257 = vadd.f32 0.0, %v1256
      %v1258 = vpop.f32.mrf.mxu0
      %1259 = vmatprep.mubr.bf16.mxu0 0
      %1260 = vmatmul.mubr.bf16.gmra.mxu0 %v1123
      %v1261 = vpop.f32.mrf.mxu0
      %v1262 = vadd.f32 0.0, %v1261
      %v1263 = vpop.f32.mrf.mxu0
      %v1264 = vpop.f32.mrf.mxu0
      %v1265 = vadd.f32 0.0, %v1264
      %v1266 = vpop.f32.mrf.mxu0
      %1267 = vmatprep.mubr.bf16.mxu0 0
      %1268 = vmatmul.mubr.bf16.gmra.mxu0 %v1125
      %v1269 = vpop.f32.mrf.mxu0
      %v1270 = vadd.f32 0.0, %v1269
      %v1271 = vpop.f32.mrf.mxu0
      %v1272 = vpop.f32.mrf.mxu0
      %v1273 = vadd.f32 0.0, %v1272
      %v1274 = vpop.f32.mrf.mxu0
      %1275 = vmatprep.mubr.bf16.mxu0 0
      %1276 = vmatmul.mubr.bf16.gmra.mxu0 %v1127
      %v1277 = vpop.f32.mrf.mxu0
      %v1278 = vadd.f32 0.0, %v1277
      %v1279 = vpop.f32.mrf.mxu0
      %v1280 = vpop.f32.mrf.mxu0
      %v1281 = vadd.f32 0.0, %v1280
      %v1282 = vpop.f32.mrf.mxu0
      %1283 = vmatprep.mubr.bf16.mxu0 0
      %1284 = vmatmul.mubr.bf16.gmra.mxu0 %v1129
      %v1285 = vpop.f32.mrf.mxu0
      %v1286 = vadd.f32 0.0, %v1285
      %v1287 = vpop.f32.mrf.mxu0
      %v1288 = vpop.f32.mrf.mxu0
      %v1289 = vadd.f32 0.0, %v1288
      %v1290 = vpop.f32.mrf.mxu0
      %1291 = vdwg.mxu0
      %v1298 = vunpack.c.l.b16 %v460
      %v1299 = vunpack.c.l.b16 %v461
      %v1300 = vunpack.c.l.b16 %v462
      %v1301 = vunpack.c.l.b16 %v463
      %v1302 = vunpack.c.l.b16 %v464
      %v1303 = vunpack.c.l.b16 %v465
      %v1304 = vpack.c.b16 %v1299, %v1298
      %v1305 = vpack.c.b16 %v1301, %v1300
      %v1306 = vpack.c.b16 %v1303, %v1302
      %v1310 = vsel %vm1098, %v1024, 0
      %1312 = vmatprep.subr.bf16.mxu0 0
      %1313 = vmatpush1.bf16.msra.mxu0 0
      %1314 = vmatprep.subr.bf16.mxu0 0
      %1315 = vmatpush1.bf16.msra.mxu0 0
      %1316 = vmatprep.subr.bf16.mxu0 0
      %1317 = vmatpush1.bf16.msra.mxu0 0
      %1318 = vmatprep.subr.bf16.mxu0 0
      %1319 = vmatpush1.bf16.msra.mxu0 0
      %1320 = vmatprep.subr.bf16.mxu0 0
      %1321 = vmatpush1.bf16.msra.mxu0 0
      %1322 = vmatprep.subr.bf16.mxu0 0
      %1323 = vmatpush1.bf16.msra.mxu0 %v1306
      %1324 = vmatprep.subr.bf16.mxu0 0
      %1325 = vmatpush1.bf16.msra.mxu0 %v1305
      %1326 = vmatprep.subr.bf16.mxu0 0
      %1327 = vmatpush1.bf16.msra.mxu0 %v1304
      %1328 = vmatprep.subr.bf16.mxu0 0
      %1329 = vmatpush2.bf16.msra.mxu0 0
      %1330 = vmatprep.subr.bf16.mxu0 0
      %1331 = vmatpush2.bf16.msra.mxu0 0
      %1332 = vmatprep.subr.bf16.mxu0 0
      %1333 = vmatpush2.bf16.msra.mxu0 0
      %1334 = vmatprep.subr.bf16.mxu0 0
      %1335 = vmatpush2.bf16.msra.mxu0 0
      %1336 = vmatprep.subr.bf16.mxu0 0
      %1337 = vmatpush2.bf16.msra.mxu0 0
      %1338 = vmatprep.subr.bf16.mxu0 0
      %1339 = vmatpush2.bf16.msra.mxu0 0
      %1340 = vmatprep.subr.bf16.mxu0 0
      %1341 = vmatpush2.bf16.msra.mxu0 0
      %1342 = vmatprep.subr.bf16.mxu0 0
      %1343 = vmatpush2.bf16.msra.mxu0 0
      %1344 = vmatprep.mubr.bf16.mxu0 0
      %1345 = vmatmul.mubr.bf16.gmra.mxu0 %v1310
      %v1346 = vpop.f32.mrf.mxu0
      %v1347 = vadd.f32 %v1166, %v1346
      %v1348 = vpop.f32.mrf.mxu0
      %v1349 = vpop.f32.mrf.mxu0
      %v1350 = vadd.f32 %v1169, %v1349
      %v1351 = vpop.f32.mrf.mxu0
      %1352 = vmatprep.mubr.bf16.mxu0 0
      %1353 = vmatmul.mubr.bf16.gmra.mxu0 %v1099
      %v1354 = vpop.f32.mrf.mxu0
      %v1355 = vadd.f32 %v1174, %v1354
      %v1356 = vpop.f32.mrf.mxu0
      %v1357 = vpop.f32.mrf.mxu0
      %v1358 = vadd.f32 %v1177, %v1357
      %v1359 = vpop.f32.mrf.mxu0
      %1360 = vmatprep.mubr.bf16.mxu0 0
      %1361 = vmatmul.mubr.bf16.gmra.mxu0 %v1101
      %v1362 = vpop.f32.mrf.mxu0
      %v1363 = vadd.f32 %v1182, %v1362
      %v1364 = vpop.f32.mrf.mxu0
      %v1365 = vpop.f32.mrf.mxu0
      %v1366 = vadd.f32 %v1185, %v1365
      %v1367 = vpop.f32.mrf.mxu0
      %1368 = vmatprep.mubr.bf16.mxu0 0
      %1369 = vmatmul.mubr.bf16.gmra.mxu0 %v1103
      %v1370 = vpop.f32.mrf.mxu0
      %v1371 = vadd.f32 %v1190, %v1370
      %v1372 = vpop.f32.mrf.mxu0
      %v1373 = vpop.f32.mrf.mxu0
      %v1374 = vadd.f32 %v1193, %v1373
      %v1375 = vpop.f32.mrf.mxu0
      %1376 = vmatprep.mubr.bf16.mxu0 0
      %1377 = vmatmul.mubr.bf16.gmra.mxu0 %v1105
      %v1378 = vpop.f32.mrf.mxu0
      %v1379 = vadd.f32 %v1198, %v1378
      %v1380 = vpop.f32.mrf.mxu0
      %v1381 = vpop.f32.mrf.mxu0
      %v1382 = vadd.f32 %v1201, %v1381
      %v1383 = vpop.f32.mrf.mxu0
      %1384 = vmatprep.mubr.bf16.mxu0 0
      %1385 = vmatmul.mubr.bf16.gmra.mxu0 %v1107
      %v1386 = vpop.f32.mrf.mxu0
      %v1387 = vadd.f32 %v1206, %v1386
      %v1388 = vpop.f32.mrf.mxu0
      %v1389 = vpop.f32.mrf.mxu0
      %v1390 = vadd.f32 %v1209, %v1389
      %v1391 = vpop.f32.mrf.mxu0
      %1392 = vmatprep.mubr.bf16.mxu0 0
      %1393 = vmatmul.mubr.bf16.gmra.mxu0 %v1109
      %v1394 = vpop.f32.mrf.mxu0
      %v1395 = vadd.f32 %v1214, %v1394
      %v1396 = vpop.f32.mrf.mxu0
      %v1397 = vpop.f32.mrf.mxu0
      %v1398 = vadd.f32 %v1217, %v1397
      %v1399 = vpop.f32.mrf.mxu0
      %1400 = vmatprep.mubr.bf16.mxu0 0
      %1401 = vmatmul.mubr.bf16.gmra.mxu0 %v1111
      %v1402 = vpop.f32.mrf.mxu0
      %v1403 = vadd.f32 %v1222, %v1402
      %v1404 = vpop.f32.mrf.mxu0
      %v1405 = vpop.f32.mrf.mxu0
      %v1406 = vadd.f32 %v1225, %v1405
      %v1407 = vpop.f32.mrf.mxu0
      %1408 = vmatprep.mubr.bf16.mxu0 0
      %1409 = vmatmul.mubr.bf16.gmra.mxu0 %v1113
      %v1410 = vpop.f32.mrf.mxu0
      %v1411 = vadd.f32 %v1230, %v1410
      %v1412 = vpop.f32.mrf.mxu0
      %v1413 = vpop.f32.mrf.mxu0
      %v1414 = vadd.f32 %v1233, %v1413
      %v1415 = vpop.f32.mrf.mxu0
      %1416 = vmatprep.mubr.bf16.mxu0 0
      %1417 = vmatmul.mubr.bf16.gmra.mxu0 %v1115
      %v1418 = vpop.f32.mrf.mxu0
      %v1419 = vadd.f32 %v1238, %v1418
      %v1420 = vpop.f32.mrf.mxu0
      %v1421 = vpop.f32.mrf.mxu0
      %v1422 = vadd.f32 %v1241, %v1421
      %v1423 = vpop.f32.mrf.mxu0
      %1424 = vmatprep.mubr.bf16.mxu0 0
      %1425 = vmatmul.mubr.bf16.gmra.mxu0 %v1117
      %v1426 = vpop.f32.mrf.mxu0
      %v1427 = vadd.f32 %v1246, %v1426
      %v1428 = vpop.f32.mrf.mxu0
      %v1429 = vpop.f32.mrf.mxu0
      %v1430 = vadd.f32 %v1249, %v1429
      %v1431 = vpop.f32.mrf.mxu0
      %1432 = vmatprep.mubr.bf16.mxu0 0
      %1433 = vmatmul.mubr.bf16.gmra.mxu0 %v1119
      %v1434 = vpop.f32.mrf.mxu0
      %v1435 = vadd.f32 %v1254, %v1434
      %v1436 = vpop.f32.mrf.mxu0
      %v1437 = vpop.f32.mrf.mxu0
      %v1438 = vadd.f32 %v1257, %v1437
      %v1439 = vpop.f32.mrf.mxu0
      %1440 = vmatprep.mubr.bf16.mxu0 0
      %1441 = vmatmul.mubr.bf16.gmra.mxu0 %v1121
      %v1442 = vpop.f32.mrf.mxu0
      %v1443 = vadd.f32 %v1262, %v1442
      %v1444 = vpop.f32.mrf.mxu0
      %v1445 = vpop.f32.mrf.mxu0
      %v1446 = vadd.f32 %v1265, %v1445
      %v1447 = vpop.f32.mrf.mxu0
      %1448 = vmatprep.mubr.bf16.mxu0 0
      %1449 = vmatmul.mubr.bf16.gmra.mxu0 %v1123
      %v1450 = vpop.f32.mrf.mxu0
      %v1451 = vadd.f32 %v1270, %v1450
      %v1452 = vpop.f32.mrf.mxu0
      %v1453 = vpop.f32.mrf.mxu0
      %v1454 = vadd.f32 %v1273, %v1453
      %v1455 = vpop.f32.mrf.mxu0
      %1456 = vmatprep.mubr.bf16.mxu0 0
      %1457 = vmatmul.mubr.bf16.gmra.mxu0 %v1125
      %v1458 = vpop.f32.mrf.mxu0
      %v1459 = vadd.f32 %v1278, %v1458
      %v1460 = vpop.f32.mrf.mxu0
      %v1461 = vpop.f32.mrf.mxu0
      %v1462 = vadd.f32 %v1281, %v1461
      %v1463 = vpop.f32.mrf.mxu0
      %1464 = vmatprep.mubr.bf16.mxu0 0
      %1465 = vmatmul.mubr.bf16.gmra.mxu0 %v1127
      %v1466 = vpop.f32.mrf.mxu0
      %v1467 = vadd.f32 %v1286, %v1466
      %v1468 = vpop.f32.mrf.mxu0
      %v1469 = vpop.f32.mrf.mxu0
      %v1470 = vadd.f32 %v1289, %v1469
      %v1471 = vpop.f32.mrf.mxu0
      %1472 = vdwg.mxu0
      %v1479 = vunpack.c.l.b16 %v472
      %v1480 = vunpack.c.l.b16 %v473
      %v1481 = vunpack.c.l.b16 %v474
      %v1482 = vunpack.c.l.b16 %v475
      %v1483 = vunpack.c.l.b16 %v476
      %v1484 = vunpack.c.l.b16 %v477
      %v1485 = vpack.c.b16 %v1480, %v1479
      %v1486 = vpack.c.b16 %v1482, %v1481
      %v1487 = vpack.c.b16 %v1484, %v1483
      %1491 = vmatprep.subr.bf16.mxu0 0
      %1492 = vmatpush1.bf16.msra.mxu0 0
      %1493 = vmatprep.subr.bf16.mxu0 0
      %1494 = vmatpush1.bf16.msra.mxu0 0
      %1495 = vmatprep.subr.bf16.mxu0 0
      %1496 = vmatpush1.bf16.msra.mxu0 0
      %1497 = vmatprep.subr.bf16.mxu0 0
      %1498 = vmatpush1.bf16.msra.mxu0 0
      %1499 = vmatprep.subr.bf16.mxu0 0
      %1500 = vmatpush1.bf16.msra.mxu0 0
      %1501 = vmatprep.subr.bf16.mxu0 0
      %1502 = vmatpush1.bf16.msra.mxu0 %v1487
      %1503 = vmatprep.subr.bf16.mxu0 0
      %1504 = vmatpush1.bf16.msra.mxu0 %v1486
      %1505 = vmatprep.subr.bf16.mxu0 0
      %1506 = vmatpush1.bf16.msra.mxu0 %v1485
      %1507 = vmatprep.subr.bf16.mxu0 0
      %1508 = vmatpush2.bf16.msra.mxu0 0
      %1509 = vmatprep.subr.bf16.mxu0 0
      %1510 = vmatpush2.bf16.msra.mxu0 0
      %1511 = vmatprep.subr.bf16.mxu0 0
      %1512 = vmatpush2.bf16.msra.mxu0 0
      %1513 = vmatprep.subr.bf16.mxu0 0
      %1514 = vmatpush2.bf16.msra.mxu0 0
      %1515 = vmatprep.subr.bf16.mxu0 0
      %1516 = vmatpush2.bf16.msra.mxu0 0
      %1517 = vmatprep.subr.bf16.mxu0 0
      %1518 = vmatpush2.bf16.msra.mxu0 0
      %1519 = vmatprep.subr.bf16.mxu0 0
      %1520 = vmatpush2.bf16.msra.mxu0 0
      %1521 = vmatprep.subr.bf16.mxu0 0
      %1522 = vmatpush2.bf16.msra.mxu0 0
      %1523 = vmatprep.mubr.bf16.mxu0 0
      %1524 = vmatmul.mubr.bf16.gmra.mxu0 %v1101
      %v1525 = vpop.f32.mrf.mxu0
      %v1526 = vadd.f32 0.0, %v1525
      %v1527 = vpop.f32.mrf.mxu0
      %v1528 = vpop.f32.mrf.mxu0
      %v1529 = vadd.f32 0.0, %v1528
      %v1530 = vpop.f32.mrf.mxu0
      %1531 = vmatprep.mubr.bf16.mxu0 0
      %1532 = vmatmul.mubr.bf16.gmra.mxu0 %v1103
      %v1533 = vpop.f32.mrf.mxu0
      %v1534 = vadd.f32 0.0, %v1533
      %v1535 = vpop.f32.mrf.mxu0
      %v1536 = vpop.f32.mrf.mxu0
      %v1537 = vadd.f32 0.0, %v1536
      %v1538 = vpop.f32.mrf.mxu0
      %1539 = vmatprep.mubr.bf16.mxu0 0
      %1540 = vmatmul.mubr.bf16.gmra.mxu0 %v1105
      %v1541 = vpop.f32.mrf.mxu0
      %v1542 = vadd.f32 0.0, %v1541
      %v1543 = vpop.f32.mrf.mxu0
      %v1544 = vpop.f32.mrf.mxu0
      %v1545 = vadd.f32 0.0, %v1544
      %v1546 = vpop.f32.mrf.mxu0
      %1547 = vmatprep.mubr.bf16.mxu0 0
      %1548 = vmatmul.mubr.bf16.gmra.mxu0 %v1107
      %v1549 = vpop.f32.mrf.mxu0
      %v1550 = vadd.f32 0.0, %v1549
      %v1551 = vpop.f32.mrf.mxu0
      %v1552 = vpop.f32.mrf.mxu0
      %v1553 = vadd.f32 0.0, %v1552
      %v1554 = vpop.f32.mrf.mxu0
      %1555 = vmatprep.mubr.bf16.mxu0 0
      %1556 = vmatmul.mubr.bf16.gmra.mxu0 %v1109
      %v1557 = vpop.f32.mrf.mxu0
      %v1558 = vadd.f32 0.0, %v1557
      %v1559 = vpop.f32.mrf.mxu0
      %v1560 = vpop.f32.mrf.mxu0
      %v1561 = vadd.f32 0.0, %v1560
      %v1562 = vpop.f32.mrf.mxu0
      %1563 = vmatprep.mubr.bf16.mxu0 0
      %1564 = vmatmul.mubr.bf16.gmra.mxu0 %v1111
      %v1565 = vpop.f32.mrf.mxu0
      %v1566 = vadd.f32 0.0, %v1565
      %v1567 = vpop.f32.mrf.mxu0
      %v1568 = vpop.f32.mrf.mxu0
      %v1569 = vadd.f32 0.0, %v1568
      %v1570 = vpop.f32.mrf.mxu0
      %1571 = vmatprep.mubr.bf16.mxu0 0
      %1572 = vmatmul.mubr.bf16.gmra.mxu0 %v1113
      %v1573 = vpop.f32.mrf.mxu0
      %v1574 = vadd.f32 0.0, %v1573
      %v1575 = vpop.f32.mrf.mxu0
      %v1576 = vpop.f32.mrf.mxu0
      %v1577 = vadd.f32 0.0, %v1576
      %v1578 = vpop.f32.mrf.mxu0
      %1579 = vmatprep.mubr.bf16.mxu0 0
      %1580 = vmatmul.mubr.bf16.gmra.mxu0 %v1115
      %v1581 = vpop.f32.mrf.mxu0
      %v1582 = vadd.f32 0.0, %v1581
      %v1583 = vpop.f32.mrf.mxu0
      %v1584 = vpop.f32.mrf.mxu0
      %v1585 = vadd.f32 0.0, %v1584
      %v1586 = vpop.f32.mrf.mxu0
      %1587 = vmatprep.mubr.bf16.mxu0 0
      %1588 = vmatmul.mubr.bf16.gmra.mxu0 %v1117
      %v1589 = vpop.f32.mrf.mxu0
      %v1590 = vadd.f32 0.0, %v1589
      %v1591 = vpop.f32.mrf.mxu0
      %v1592 = vpop.f32.mrf.mxu0
      %v1593 = vadd.f32 0.0, %v1592
      %v1594 = vpop.f32.mrf.mxu0
      %1595 = vmatprep.mubr.bf16.mxu0 0
      %1596 = vmatmul.mubr.bf16.gmra.mxu0 %v1119
      %v1597 = vpop.f32.mrf.mxu0
      %v1598 = vadd.f32 0.0, %v1597
      %v1599 = vpop.f32.mrf.mxu0
      %v1600 = vpop.f32.mrf.mxu0
      %v1601 = vadd.f32 0.0, %v1600
      %v1602 = vpop.f32.mrf.mxu0
      %1603 = vmatprep.mubr.bf16.mxu0 0
      %1604 = vmatmul.mubr.bf16.gmra.mxu0 %v1121
      %v1605 = vpop.f32.mrf.mxu0
      %v1606 = vadd.f32 0.0, %v1605
      %v1607 = vpop.f32.mrf.mxu0
      %v1608 = vpop.f32.mrf.mxu0
      %v1609 = vadd.f32 0.0, %v1608
      %v1610 = vpop.f32.mrf.mxu0
      %1611 = vmatprep.mubr.bf16.mxu0 0
      %1612 = vmatmul.mubr.bf16.gmra.mxu0 %v1123
      %v1613 = vpop.f32.mrf.mxu0
      %v1614 = vadd.f32 0.0, %v1613
      %v1615 = vpop.f32.mrf.mxu0
      %v1616 = vpop.f32.mrf.mxu0
      %v1617 = vadd.f32 0.0, %v1616
      %v1618 = vpop.f32.mrf.mxu0
      %1619 = vmatprep.mubr.bf16.mxu0 0
      %1620 = vmatmul.mubr.bf16.gmra.mxu0 %v1125
      %v1621 = vpop.f32.mrf.mxu0
      %v1622 = vadd.f32 0.0, %v1621
      %v1623 = vpop.f32.mrf.mxu0
      %v1624 = vpop.f32.mrf.mxu0
      %v1625 = vadd.f32 0.0, %v1624
      %v1626 = vpop.f32.mrf.mxu0
      %1627 = vmatprep.mubr.bf16.mxu0 0
      %1628 = vmatmul.mubr.bf16.gmra.mxu0 %v1127
      %v1629 = vpop.f32.mrf.mxu0
      %v1630 = vadd.f32 0.0, %v1629
      %v1631 = vpop.f32.mrf.mxu0
      %v1632 = vpop.f32.mrf.mxu0
      %v1633 = vadd.f32 0.0, %v1632
      %v1634 = vpop.f32.mrf.mxu0
      %1635 = vmatprep.mubr.bf16.mxu0 0
      %1636 = vmatmul.mubr.bf16.gmra.mxu0 %v1129
      %v1637 = vpop.f32.mrf.mxu0
      %v1638 = vadd.f32 0.0, %v1637
      %v1639 = vpop.f32.mrf.mxu0
      %v1640 = vpop.f32.mrf.mxu0
      %v1641 = vadd.f32 0.0, %v1640
      %v1642 = vpop.f32.mrf.mxu0
      %1643 = vmatprep.mubr.bf16.mxu0 0
      %1644 = vmatmul.mubr.bf16.gmra.mxu0 %v1310
      %v1645 = vpop.f32.mrf.mxu0
      %v1646 = vadd.f32 0.0, %v1645
      %v1647 = vpop.f32.mrf.mxu0
      %v1648 = vpop.f32.mrf.mxu0
      %v1649 = vadd.f32 0.0, %v1648
      %v1650 = vpop.f32.mrf.mxu0
      %1651 = vdwg.mxu0
      %v1652 = vadd.f32 %v1347, %v1526
      %v1653 = vadd.f32 %v1350, %v1529
      %v1654 = vadd.f32 %v1355, %v1534
      %v1655 = vadd.f32 %v1358, %v1537
      %v1656 = vadd.f32 %v1363, %v1542
      %v1657 = vadd.f32 %v1366, %v1545
      %v1658 = vadd.f32 %v1371, %v1550
      %v1659 = vadd.f32 %v1374, %v1553
      %v1660 = vadd.f32 %v1379, %v1558
      %v1661 = vadd.f32 %v1382, %v1561
      %v1662 = vadd.f32 %v1387, %v1566
      %v1663 = vadd.f32 %v1390, %v1569
      %v1664 = vadd.f32 %v1395, %v1574
      %v1665 = vadd.f32 %v1398, %v1577
      %v1666 = vadd.f32 %v1403, %v1582
      %v1667 = vadd.f32 %v1406, %v1585
      %v1668 = vadd.f32 %v1411, %v1590
      %v1669 = vadd.f32 %v1414, %v1593
      %v1670 = vadd.f32 %v1419, %v1598
      %v1671 = vadd.f32 %v1422, %v1601
      %v1672 = vadd.f32 %v1427, %v1606
      %v1673 = vadd.f32 %v1430, %v1609
      %v1674 = vadd.f32 %v1435, %v1614
      %v1675 = vadd.f32 %v1438, %v1617
      %v1676 = vadd.f32 %v1443, %v1622
      %v1677 = vadd.f32 %v1446, %v1625
      %v1678 = vadd.f32 %v1451, %v1630
      %v1679 = vadd.f32 %v1454, %v1633
      %v1680 = vadd.f32 %v1459, %v1638
      %v1681 = vadd.f32 %v1462, %v1641
      %v1682 = vadd.f32 %v1467, %v1646
      %v1683 = vadd.f32 %v1470, %v1649
      %v1684 = vpack.c.bf16 %v1653, %v1652
      %v1685 = vpack.c.bf16 %v1655, %v1654
      %v1686 = vpack.c.bf16 %v1657, %v1656
      %v1687 = vpack.c.bf16 %v1659, %v1658
      %v1688 = vpack.c.bf16 %v1661, %v1660
      %v1689 = vpack.c.bf16 %v1663, %v1662
      %v1690 = vpack.c.bf16 %v1665, %v1664
      %v1691 = vpack.c.bf16 %v1667, %v1666
      %v1692 = vpack.c.bf16 %v1669, %v1668
      %v1693 = vpack.c.bf16 %v1671, %v1670
      %v1694 = vpack.c.bf16 %v1673, %v1672
      %v1695 = vpack.c.bf16 %v1675, %v1674
      %v1696 = vpack.c.bf16 %v1677, %v1676
      %v1697 = vpack.c.bf16 %v1679, %v1678
      %v1698 = vpack.c.bf16 %v1681, %v1680
      %v1699 = vpack.c.bf16 %v1683, %v1682
      %v1716 = vunpack.c.l.b16 %v1684
      %v1717 = vunpack.c.h.b16 %v1684
      %v1718 = vunpack.c.l.b16 %v1685
      %v1719 = vunpack.c.h.b16 %v1685
      %v1720 = vunpack.c.l.b16 %v1686
      %v1721 = vunpack.c.h.b16 %v1686
      %v1722 = vunpack.c.l.b16 %v1687
      %v1723 = vunpack.c.h.b16 %v1687
      %v1724 = vunpack.c.l.b16 %v1688
      %v1725 = vunpack.c.h.b16 %v1688
      %v1726 = vunpack.c.l.b16 %v1689
      %v1727 = vunpack.c.h.b16 %v1689
      %v1728 = vunpack.c.l.b16 %v1690
      %v1729 = vunpack.c.h.b16 %v1690
      %v1730 = vunpack.c.l.b16 %v1691
      %v1731 = vunpack.c.h.b16 %v1691
      %v1732 = vunpack.c.l.b16 %v1692
      %v1733 = vunpack.c.h.b16 %v1692
      %v1734 = vunpack.c.l.b16 %v1693
      %v1735 = vunpack.c.h.b16 %v1693
      %v1736 = vunpack.c.l.b16 %v1694
      %v1737 = vunpack.c.h.b16 %v1694
      %v1738 = vunpack.c.l.b16 %v1695
      %v1739 = vunpack.c.h.b16 %v1695
      %v1740 = vunpack.c.l.b16 %v1696
      %v1741 = vunpack.c.h.b16 %v1696
      %v1742 = vunpack.c.l.b16 %v1697
      %v1743 = vunpack.c.h.b16 %v1697
      %v1744 = vunpack.c.l.b16 %v1698
      %v1745 = vunpack.c.h.b16 %v1698
      %v1746 = vunpack.c.l.b16 %v1699
      %v1747 = vunpack.c.h.b16 %v1699
      %v1748 = vpack.c.b16 %v1716, %v1716
      %v1749 = vpack.c.b16 %v1717, %v1717
      %v1750 = vpack.c.b16 %v1718, %v1718
      %v1751 = vpack.c.b16 %v1719, %v1719
      %v1752 = vpack.c.b16 %v1720, %v1720
      %v1753 = vpack.c.b16 %v1721, %v1721
      %v1754 = vpack.c.b16 %v1722, %v1722
      %v1755 = vpack.c.b16 %v1723, %v1723
      %v1756 = vpack.c.b16 %v1724, %v1724
      %v1757 = vpack.c.b16 %v1725, %v1725
      %v1758 = vpack.c.b16 %v1726, %v1726
      %v1759 = vpack.c.b16 %v1727, %v1727
      %v1760 = vpack.c.b16 %v1728, %v1728
      %v1761 = vpack.c.b16 %v1729, %v1729
      %v1762 = vpack.c.b16 %v1730, %v1730
      %v1763 = vpack.c.b16 %v1731, %v1731
      %v1764 = vpack.c.b16 %v1732, %v1732
      %v1765 = vpack.c.b16 %v1733, %v1733
      %v1766 = vpack.c.b16 %v1734, %v1734
      %v1767 = vpack.c.b16 %v1735, %v1735
      %v1768 = vpack.c.b16 %v1736, %v1736
      %v1769 = vpack.c.b16 %v1737, %v1737
      %v1770 = vpack.c.b16 %v1738, %v1738
      %v1771 = vpack.c.b16 %v1739, %v1739
      %v1772 = vpack.c.b16 %v1740, %v1740
      %v1773 = vpack.c.b16 %v1741, %v1741
      %v1774 = vpack.c.b16 %v1742, %v1742
      %v1775 = vpack.c.b16 %v1743, %v1743
      %v1776 = vpack.c.b16 %v1744, %v1744
      %v1777 = vpack.c.b16 %v1745, %v1745
      %v1778 = vpack.c.b16 %v1746, %v1746
      %v1779 = vpack.c.b16 %v1747, %v1747
      %vm1812 = vcmask 125952
      %1813 = vst.msk [vmem:[%s262] sm:$0xf] %vm1812, %v1748
      %1814 = vst.msk [vmem:[%s262 + $0x4] sm:$0xf] %vm1812, %v1749
      %1815 = vst.msk [vmem:[%s262 + $0x8] sm:$0xf] %vm1812, %v1750
      %1816 = vst.msk [vmem:[%s262 + $0xc] sm:$0xf] %vm1812, %v1751
      %1817 = vst.msk [vmem:[%s262 + $0x10] sm:$0xf] %vm1812, %v1752
      %1818 = vst.msk [vmem:[%s262 + $0x14] sm:$0xf] %vm1812, %v1753
      %1819 = vst.msk [vmem:[%s262 + $0x18] sm:$0xf] %vm1812, %v1754
      %1820 = vst.msk [vmem:[%s262 + $0x1c] sm:$0xf] %vm1812, %v1755
      %1821 = vst.msk [vmem:[%s262 + $0x20] sm:$0xf] %vm1812, %v1756
      %1822 = vst.msk [vmem:[%s262 + $0x24] sm:$0xf] %vm1812, %v1757
      %1823 = vst.msk [vmem:[%s262 + $0x28] sm:$0xf] %vm1812, %v1758
      %1824 = vst.msk [vmem:[%s262 + $0x2c] sm:$0xf] %vm1812, %v1759
      %1825 = vst.msk [vmem:[%s262 + $0x30] sm:$0xf] %vm1812, %v1760
      %1826 = vst.msk [vmem:[%s262 + $0x34] sm:$0xf] %vm1812, %v1761
      %1827 = vst.msk [vmem:[%s262 + $0x38] sm:$0xf] %vm1812, %v1762
      %1828 = vst.msk [vmem:[%s262 + $0x3c] sm:$0xf] %vm1812, %v1763
      %1829 = vst.msk [vmem:[%s262 + $0x40] sm:$0xf] %vm1812, %v1764
      %1830 = vst.msk [vmem:[%s262 + $0x44] sm:$0xf] %vm1812, %v1765
      %1831 = vst.msk [vmem:[%s262 + $0x48] sm:$0xf] %vm1812, %v1766
      %1832 = vst.msk [vmem:[%s262 + $0x4c] sm:$0xf] %vm1812, %v1767
      %1833 = vst.msk [vmem:[%s262 + $0x50] sm:$0xf] %vm1812, %v1768
      %1834 = vst.msk [vmem:[%s262 + $0x54] sm:$0xf] %vm1812, %v1769
      %1835 = vst.msk [vmem:[%s262 + $0x58] sm:$0xf] %vm1812, %v1770
      %1836 = vst.msk [vmem:[%s262 + $0x5c] sm:$0xf] %vm1812, %v1771
      %1837 = vst.msk [vmem:[%s262 + $0x60] sm:$0xf] %vm1812, %v1772
      %1838 = vst.msk [vmem:[%s262 + $0x64] sm:$0xf] %vm1812, %v1773
      %1839 = vst.msk [vmem:[%s262 + $0x68] sm:$0xf] %vm1812, %v1774
      %1840 = vst.msk [vmem:[%s262 + $0x6c] sm:$0xf] %vm1812, %v1775
      %1841 = vst.msk [vmem:[%s262 + $0x70] sm:$0xf] %vm1812, %v1776
      %1842 = vst.msk [vmem:[%s262 + $0x74] sm:$0xf] %vm1812, %v1777
      %1843 = vst.msk [vmem:[%s262 + $0x78] sm:$0xf] %vm1812, %v1778
      %1844 = vst.msk [vmem:[%s262 + $0x7c] sm:$0xf] %vm1812, %v1779
      %v1845 = vsel %vm989, %v1652, 0.0
      %v1846 = vsel %vm989, %v1653, 0.0
      %v1847 = vadd.f32 %v1845, %v1846
      %v1848 = vsel %vm989, %v1654, 0.0
      %v1849 = vadd.f32 %v1847, %v1848
      %v1850 = vsel %vm989, %v1655, 0.0
      %v1851 = vadd.f32 %v1849, %v1850
      %v1852 = vsel %vm989, %v1656, 0.0
      %v1853 = vadd.f32 %v1851, %v1852
      %v1854 = vsel %vm989, %v1657, 0.0
      %v1855 = vadd.f32 %v1853, %v1854
      %v1856 = vsel %vm989, %v1658, 0.0
      %v1857 = vadd.f32 %v1855, %v1856
      %v1858 = vsel %vm989, %v1659, 0.0
      %v1859 = vadd.f32 %v1857, %v1858
      %v1860 = vsel %vm989, %v1660, 0.0
      %v1861 = vadd.f32 %v1859, %v1860
      %v1862 = vsel %vm989, %v1661, 0.0
      %v1863 = vadd.f32 %v1861, %v1862
      %v1864 = vsel %vm989, %v1662, 0.0
      %v1865 = vadd.f32 %v1863, %v1864
      %v1866 = vsel %vm989, %v1663, 0.0
      %v1867 = vadd.f32 %v1865, %v1866
      %v1868 = vsel %vm989, %v1664, 0.0
      %v1869 = vadd.f32 %v1867, %v1868
      %v1870 = vsel %vm989, %v1665, 0.0
      %v1871 = vadd.f32 %v1869, %v1870
      %v1872 = vsel %vm989, %v1666, 0.0
      %v1873 = vadd.f32 %v1871, %v1872
      %v1874 = vsel %vm989, %v1667, 0.0
      %v1875 = vadd.f32 %v1873, %v1874
      %v1876 = vsel %vm989, %v1668, 0.0
      %v1877 = vadd.f32 %v1875, %v1876
      %v1878 = vsel %vm989, %v1669, 0.0
      %v1879 = vadd.f32 %v1877, %v1878
      %v1880 = vsel %vm989, %v1670, 0.0
      %v1881 = vadd.f32 %v1879, %v1880
      %v1882 = vsel %vm989, %v1671, 0.0
      %v1883 = vadd.f32 %v1881, %v1882
      %v1884 = vsel %vm989, %v1672, 0.0
      %v1885 = vadd.f32 %v1883, %v1884
      %v1886 = vsel %vm989, %v1673, 0.0
      %v1887 = vadd.f32 %v1885, %v1886
      %v1888 = vsel %vm989, %v1674, 0.0
      %v1889 = vadd.f32 %v1887, %v1888
      %v1890 = vsel %vm989, %v1675, 0.0
      %v1891 = vadd.f32 %v1889, %v1890
      %v1892 = vsel %vm989, %v1676, 0.0
      %v1893 = vadd.f32 %v1891, %v1892
      %v1894 = vsel %vm989, %v1677, 0.0
      %v1895 = vadd.f32 %v1893, %v1894
      %v1896 = vsel %vm989, %v1678, 0.0
      %v1897 = vadd.f32 %v1895, %v1896
      %v1898 = vsel %vm989, %v1679, 0.0
      %v1899 = vadd.f32 %v1897, %v1898
      %v1900 = vsel %vm989, %v1680, 0.0
      %v1901 = vadd.f32 %v1899, %v1900
      %v1902 = vsel %vm989, %v1681, 0.0
      %v1903 = vadd.f32 %v1901, %v1902
      %v1904 = vsel %vm989, %v1682, 0.0
      %v1905 = vadd.f32 %v1903, %v1904
      %v1906 = vsel %vm989, %v1683, 0.0
      %v1907 = vadd.f32 %v1905, %v1906
      %v1908 = vrot.slane %v1907, 4
      %v1909 = vadd.f32 %v1907, %v1908
      %v1910 = vrot.slane %v1909, 2
      %v1911 = vadd.f32 %v1909, %v1910
      %v1912 = vrot.slane %v1911, 1
      %v1913 = vadd.f32 %v1911, %v1912
      %vm1914 = vcmask 122880
      %1915 = vst.msk [vmem:[%s265] sm:$0x1] %vm1914, %v1913
      %v1916 = vmul.f32 %v1652, %v1652
      %v1917 = vmul.f32 %v1653, %v1653
      %v1918 = vmul.f32 %v1654, %v1654
      %v1919 = vmul.f32 %v1655, %v1655
      %v1920 = vmul.f32 %v1656, %v1656
      %v1921 = vmul.f32 %v1657, %v1657
      %v1922 = vmul.f32 %v1658, %v1658
      %v1923 = vmul.f32 %v1659, %v1659
      %v1924 = vmul.f32 %v1660, %v1660
      %v1925 = vmul.f32 %v1661, %v1661
      %v1926 = vmul.f32 %v1662, %v1662
      %v1927 = vmul.f32 %v1663, %v1663
      %v1928 = vmul.f32 %v1664, %v1664
      %v1929 = vmul.f32 %v1665, %v1665
      %v1930 = vmul.f32 %v1666, %v1666
      %v1931 = vmul.f32 %v1667, %v1667
      %v1932 = vmul.f32 %v1668, %v1668
      %v1933 = vmul.f32 %v1669, %v1669
      %v1934 = vmul.f32 %v1670, %v1670
      %v1935 = vmul.f32 %v1671, %v1671
      %v1936 = vmul.f32 %v1672, %v1672
      %v1937 = vmul.f32 %v1673, %v1673
      %v1938 = vmul.f32 %v1674, %v1674
      %v1939 = vmul.f32 %v1675, %v1675
      %v1940 = vmul.f32 %v1676, %v1676
      %v1941 = vmul.f32 %v1677, %v1677
      %v1942 = vmul.f32 %v1678, %v1678
      %v1943 = vmul.f32 %v1679, %v1679
      %v1944 = vmul.f32 %v1680, %v1680
      %v1945 = vmul.f32 %v1681, %v1681
      %v1946 = vmul.f32 %v1682, %v1682
      %v1947 = vmul.f32 %v1683, %v1683
      %v1948 = vsel %vm989, %v1916, 0.0
      %v1949 = vsel %vm989, %v1917, 0.0
      %v1950 = vadd.f32 %v1948, %v1949
      %v1951 = vsel %vm989, %v1918, 0.0
      %v1952 = vadd.f32 %v1950, %v1951
      %v1953 = vsel %vm989, %v1919, 0.0
      %v1954 = vadd.f32 %v1952, %v1953
      %v1955 = vsel %vm989, %v1920, 0.0
      %v1956 = vadd.f32 %v1954, %v1955
      %v1957 = vsel %vm989, %v1921, 0.0
      %v1958 = vadd.f32 %v1956, %v1957
      %v1959 = vsel %vm989, %v1922, 0.0
      %v1960 = vadd.f32 %v1958, %v1959
      %v1961 = vsel %vm989, %v1923, 0.0
      %v1962 = vadd.f32 %v1960, %v1961
      %v1963 = vsel %vm989, %v1924, 0.0
      %v1964 = vadd.f32 %v1962, %v1963
      %v1965 = vsel %vm989, %v1925, 0.0
      %v1966 = vadd.f32 %v1964, %v1965
      %v1967 = vsel %vm989, %v1926, 0.0
      %v1968 = vadd.f32 %v1966, %v1967
      %v1969 = vsel %vm989, %v1927, 0.0
      %v1970 = vadd.f32 %v1968, %v1969
      %v1971 = vsel %vm989, %v1928, 0.0
      %v1972 = vadd.f32 %v1970, %v1971
      %v1973 = vsel %vm989, %v1929, 0.0
      %v1974 = vadd.f32 %v1972, %v1973
      %v1975 = vsel %vm989, %v1930, 0.0
      %v1976 = vadd.f32 %v1974, %v1975
      %v1977 = vsel %vm989, %v1931, 0.0
      %v1978 = vadd.f32 %v1976, %v1977
      %v1979 = vsel %vm989, %v1932, 0.0
      %v1980 = vadd.f32 %v1978, %v1979
      %v1981 = vsel %vm989, %v1933, 0.0
      %v1982 = vadd.f32 %v1980, %v1981
      %v1983 = vsel %vm989, %v1934, 0.0
      %v1984 = vadd.f32 %v1982, %v1983
      %v1985 = vsel %vm989, %v1935, 0.0
      %v1986 = vadd.f32 %v1984, %v1985
      %v1987 = vsel %vm989, %v1936, 0.0
      %v1988 = vadd.f32 %v1986, %v1987
      %v1989 = vsel %vm989, %v1937, 0.0
      %v1990 = vadd.f32 %v1988, %v1989
      %v1991 = vsel %vm989, %v1938, 0.0
      %v1992 = vadd.f32 %v1990, %v1991
      %v1993 = vsel %vm989, %v1939, 0.0
      %v1994 = vadd.f32 %v1992, %v1993
      %v1995 = vsel %vm989, %v1940, 0.0
      %v1996 = vadd.f32 %v1994, %v1995
      %v1997 = vsel %vm989, %v1941, 0.0
      %v1998 = vadd.f32 %v1996, %v1997
      %v1999 = vsel %vm989, %v1942, 0.0
      %v2000 = vadd.f32 %v1998, %v1999
      %v2001 = vsel %vm989, %v1943, 0.0
      %v2002 = vadd.f32 %v2000, %v2001
      %v2003 = vsel %vm989, %v1944, 0.0
      %v2004 = vadd.f32 %v2002, %v2003
      %v2005 = vsel %vm989, %v1945, 0.0
      %v2006 = vadd.f32 %v2004, %v2005
      %v2007 = vsel %vm989, %v1946, 0.0
      %v2008 = vadd.f32 %v2006, %v2007
      %v2009 = vsel %vm989, %v1947, 0.0
      %v2010 = vadd.f32 %v2008, %v2009
      %v2011 = vrot.slane %v2010, 4
      %v2012 = vadd.f32 %v2010, %v2011
      %v2013 = vrot.slane %v2012, 2
      %v2014 = vadd.f32 %v2012, %v2013
      %v2015 = vrot.slane %v2014, 1
      %v2016 = vadd.f32 %v2014, %v2015
      %2017 = vst.msk [vmem:[%s268] sm:$0x1] %vm1914, %v2016
      %p2018 = scmp.lt.s32.totalorder %s18, 3
      %s2019 = scalar_select %p2018, %s18, 3
      %s2020 = smul.addr %s2019, 32
      %s2021 = smul.addr %s2020, 4
      %s2022 = scalar_lea.vmem %s4, %s2021
      %p2023 = scmp.lt.s32.totalorder %s18, 3
      %s2024 = scalar_select %p2023, %s18, 3
      %s2025 = scalar_lea.vmem %s5, %s2024
      %p2026 = scmp.lt.s32.totalorder %s18, 3
      %s2027 = scalar_select %p2026, %s18, 3
      %s2028 = scalar_lea.vmem %s6, %s2027
      // Predicated region
      $region37: #{resconv_forward.4} parent=35 // pred_check
        %p2029 = pneg %p125
      $region38: #{resconv_forward.4} parent=35 // pred_check_branch
        %2031 = sbr.rel (%p2029) target = $region40
      $region39: #{resconv_forward.4} parent=35 // pred_region
        _
      $region40: #{resconv_forward.4} parent=35 // pred_fallthru
        _
      // Predicated region
      $region41: #{resconv_forward.4} parent=35 // pred_check
        %p2032 = pneg %p151
      $region42: #{resconv_forward.4} parent=35 // pred_check_branch
        %2034 = sbr.rel (%p2032) target = $region44
      $region43: #{resconv_forward.4} parent=35 // pred_region
        _
      $region44: #{resconv_forward.4} parent=35 // pred_fallthru
        _
      // Predicated region
      $region45: #{resconv_forward.4} parent=35 // pred_check
        %p2035 = pneg %p177
      $region46: #{resconv_forward.4} parent=35 // pred_check_branch
        %2037 = sbr.rel (%p2035) target = $region48
      $region47: #{resconv_forward.4} parent=35 // pred_region
        _
      $region48: #{resconv_forward.4} parent=35 // pred_fallthru
        _
    $region36: #{resconv_forward.4} parent=5 // pred_fallthru
      _
    %p2038 = scmp.le.s32.totalorder 2, %s13
    // Predicated region
    $region49: #{resconv_forward.4} parent=5 // pred_check
      %p2039 = pneg %p2038
    $region50: #{resconv_forward.4} parent=5 // pred_check_branch
      %2041 = sbr.rel (%p2039) target = $region52
    $region51: #{resconv_forward.4} parent=5 // pred_region
      %s2042 = ssub.s32 %s13, 2
      // Predicated region
      $region53: #{resconv_forward.4} parent=51 // pred_check
        %p2043 = pneg %p131
      $region54: #{resconv_forward.4} parent=51 // pred_check_branch
        %2045 = sbr.rel (%p2043) target = $region56
      $region55: #{resconv_forward.4} parent=51 // pred_region
        %p2046 = scmp.lt.s32.totalorder %s19, 3
        %s2047 = scalar_select %p2046, %s19, 3
        %s2048 = smul.addr %s2047, 32
        %s2049 = smul.addr %s2048, 4
        %s2050 = scalar_lea.vmem %s4, %s2049
      $region56: #{resconv_forward.4} parent=51 // pred_fallthru
        _
      // Predicated region
      $region57: #{resconv_forward.4} parent=51 // pred_check
        %p2051 = pneg %p157
      $region58: #{resconv_forward.4} parent=51 // pred_check_branch
        %2053 = sbr.rel (%p2051) target = $region60
      $region59: #{resconv_forward.4} parent=51 // pred_region
        %p2054 = scmp.lt.s32.totalorder %s19, 3
        %s2055 = scalar_select %p2054, %s19, 3
        %s2056 = scalar_lea.vmem %s5, %s2055
      $region60: #{resconv_forward.4} parent=51 // pred_fallthru
        _
      // Predicated region
      $region61: #{resconv_forward.4} parent=51 // pred_check
        %p2057 = pneg %p183
      $region62: #{resconv_forward.4} parent=51 // pred_check_branch
        %2059 = sbr.rel (%p2057) target = $region64
      $region63: #{resconv_forward.4} parent=51 // pred_region
        %p2060 = scmp.lt.s32.totalorder %s19, 3
        %s2061 = scalar_select %p2060, %s19, 3
        %s2062 = scalar_lea.vmem %s6, %s2061
      $region64: #{resconv_forward.4} parent=51 // pred_fallthru
        _
    $region52: #{resconv_forward.4} parent=5 // pred_fallthru
      _
  $region6: #{resconv_forward.4} parent=0 // loop_footer
    %s17 = sadd.s32 1, %s13
  $region7: #{resconv_forward.4} parent=0 // loop_footer_branch
    %12 = sbr.rel target = $region3
  $region8: #{resconv_forward.4} parent=0 // loop_exit
    _

</llo_original>
